<compile_context>
chip_gen: v6e
topology: v6e:2x2x1
jax: 0.10.0
libtpu: 0.0.40
codegen_flags: <defaults>
</compile_context>

<pallas_src>
import functools

import jax
import jax.numpy as jnp
from jax.experimental import pallas as pl
from jax.experimental.pallas import tpu as pltpu

# ----------------------------- configuration -------------------------------
BATCH = 2
NUM_MODALITIES = 3            # C (one spectral channel per modality)
KEYS = (0, 1, 2)              # modality ids per channel
H = W = 16
PATCH = 8
P_PER_MOD = (H // PATCH) * (W // PATCH)       # 4 patches / modality
PATCH_DIM = PATCH * PATCH                     # pixel_values_per_patch = 64
NUM_PATCHES_ATTR = P_PER_MOD + 1              # encoder.pos_embedding has cls slot

D_ENC = 32
ENC_DEPTH = 1
ENC_HEADS = 2
ENC_DIM_HEAD = 16
ENC_MLP = 64

D_DEC = 48
DEC_DEPTH = 1
DEC_HEADS = 2
DEC_DIM_HEAD = 16
DEC_MLP = 4 * D_DEC

NUM_SPECTRAL = len(KEYS)
MASKING_RATIO = 0.75
LN_EPS = 1e-5
DTYPE = jnp.float32

_PARALLEL_B = pltpu.CompilerParams(dimension_semantics=("parallel",))


# --------------------------- in-kernel helpers ------------------------------
def _ln_f32(x, g, b):
    mean = jnp.mean(x, axis=-1, keepdims=True)
    cen = x - mean
    var = jnp.mean(cen * cen, axis=-1, keepdims=True)
    return cen * jax.lax.rsqrt(var + LN_EPS) * g + b


def _erf_f32(x):
    # Abramowitz-Stegun 7.1.26 rational approximation (|err| < 1.5e-7).
    # Built from exp/abs/where only so it always lowers inside Mosaic.
    a1, a2, a3, a4, a5 = (0.254829592, -0.284496736, 1.421413741,
                          -1.453152027, 1.061405429)
    p = 0.3275911
    ax = jnp.abs(x)
    t = 1.0 / (1.0 + p * ax)
    poly = ((((a5 * t + a4) * t + a3) * t + a2) * t + a1) * t
    y = 1.0 - poly * jnp.exp(-ax * ax)
    return jnp.where(x >= 0, y, -y)


def _gelu_f32(x):
    # exact (erf-based) GELU, matching torch.nn.GELU() default
    return 0.5 * x * (1.0 + _erf_f32(x * 0.7071067811865476))


def _attn_ff_core(x, a_lng, a_lnb, wq, wk, wv, wo, b_out,
                  f_lng, f_lnb, w1, b1, w2, b2, *, heads, scale):
    """One pre-norm transformer layer (attention + MLP) on one batch element."""
    # ---------------- attention (all heads batched, no k.T, no lane slicing) --
    xn = _ln_f32(x, a_lng, a_lnb)                                   # (n, d)
    xb = jnp.broadcast_to(xn[None], (heads,) + xn.shape)            # (h, n, d)
    q = jnp.einsum('hnd,hde->hne', xb, wq, preferred_element_type=jnp.float32)
    k = jnp.einsum('hnd,hde->hne', xb, wk, preferred_element_type=jnp.float32)
    v = jnp.einsum('hnd,hde->hne', xb, wv, preferred_element_type=jnp.float32)
    s = jnp.einsum('hne,hme->hnm', q, k, preferred_element_type=jnp.float32) * scale
    s = s - jnp.max(s, axis=-1, keepdims=True)
    p = jnp.exp(s)
    p = p / jnp.sum(p, axis=-1, keepdims=True)        # exact softmax normalization
    o = jnp.einsum('hnm,hme->hne', p, v, preferred_element_type=jnp.float32)
    proj = jnp.einsum('hne,hed->hnd', o, wo, preferred_element_type=jnp.float32)
    attn_out = b_out
    for h in range(heads):                             # static, tiny add chain
        attn_out = attn_out + proj[h]
    x = x + attn_out

    # ---------------- feed-forward ----------------
    xn2 = _ln_f32(x, f_lng, f_lnb)
    h1 = _gelu_f32(jnp.dot(xn2, w1, preferred_element_type=jnp.float32) + b1)
    return x + jnp.dot(h1, w2, preferred_element_type=jnp.float32) + b2


# ------------------------------ Pallas kernels ------------------------------
def _patch_embed_kernel(x_ref, ln1g, ln1b, w, b, ln2g, ln2b, emb, o_ref):
    # fused: LN -> Linear -> LN -> + (spectral + positional) embedding
    x = x_ref[0].astype(jnp.float32)
    t = _ln_f32(x, ln1g[...], ln1b[...])
    t = jnp.dot(t, w[...], preferred_element_type=jnp.float32) + b[...]
    t = _ln_f32(t, ln2g[...], ln2b[...])
    o_ref[0] = (t + emb[...].astype(jnp.float32)).astype(o_ref.dtype)


def _tf_layer_kernel(x_ref, a_lng, a_lnb, wq, wk, wv, wo, bo,
                     f_lng, f_lnb, w1, b1, w2, b2, o_ref, *, heads, scale):
    # plain layer (used only when depth > 1)
    x = x_ref[0].astype(jnp.float32)
    y = _attn_ff_core(x, a_lng[...], a_lnb[...], wq[...], wk[...], wv[...],
                      wo[...], bo[...], f_lng[...], f_lnb[...],
                      w1[...], b1[...], w2[...], b2[...],
                      heads=heads, scale=scale)
    o_ref[0] = y.astype(o_ref.dtype)


def _enc_last_layer_kernel(x_ref, add_ref, a_lng, a_lnb, wq, wk, wv, wo, bo,
                           f_lng, f_lnb, w1, b1, w2, b2,
                           fln_g, fln_b, e2d_w, e2d_b, o_ref, *, heads, scale):
    # last encoder layer + fused epilogue: final LN -> enc_to_dec -> + dec embeds
    x = x_ref[0].astype(jnp.float32)
    y = _attn_ff_core(x, a_lng[...], a_lnb[...], wq[...], wk[...], wv[...],
                      wo[...], bo[...], f_lng[...], f_lnb[...],
                      w1[...], b1[...], w2[...], b2[...],
                      heads=heads, scale=scale)
    y = _ln_f32(y, fln_g[...], fln_b[...])
    out = (jnp.dot(y, e2d_w[...], preferred_element_type=jnp.float32)
           + e2d_b[...] + add_ref[0].astype(jnp.float32))
    o_ref[0] = out.astype(o_ref.dtype)


def _dec_last_layer_kernel(x_ref, a_lng, a_lnb, wq, wk, wv, wo, bo,
                           f_lng, f_lnb, w1, b1, w2, b2,
                           fln_g, fln_b, o_ref, *, heads, scale):
    # last decoder layer + fused final LayerNorm epilogue
    x = x_ref[0].astype(jnp.float32)
    y = _attn_ff_core(x, a_lng[...], a_lnb[...], wq[...], wk[...], wv[...],
                      wo[...], bo[...], f_lng[...], f_lnb[...],
                      w1[...], b1[...], w2[...], b2[...],
                      heads=heads, scale=scale)
    o_ref[0] = _ln_f32(y, fln_g[...], fln_b[...]).astype(o_ref.dtype)


def _pixels_mse_kernel(x_ref, w_ref, b_ref, tgt_ref, pred_ref, sse_ref):
    # fused: to_pixels Linear + per-batch sum of squared errors (pred stays in VMEM)
    x = x_ref[0].astype(jnp.float32)
    pred = jnp.dot(x, w_ref[...], preferred_element_type=jnp.float32) + b_ref[...]
    pred_ref[0] = pred.astype(pred_ref.dtype)
    d = pred - tgt_ref[0].astype(jnp.float32)
    sse = jnp.sum(d * d, axis=1, keepdims=True)        # (nm, 1)
    sse_ref[0] = jnp.sum(sse, axis=0, keepdims=True)   # (1, 1)


# ------------------------------ spec helpers --------------------------------
def _resident_spec(a):
    """Full-array block, same block every grid step (weights stay VMEM-resident)."""
    zeros = (0,) * a.ndim
    return pl.BlockSpec(a.shape, lambda b, _z=zeros: _z)


def _batched_spec(a):
    """(B, ...) array -> per-batch (1, ...) block selected by the grid index."""
    tail = (0,) * (a.ndim - 1)
    return pl.BlockSpec((1,) + a.shape[1:], lambda b, _t=tail: (b,) + _t)


# ------------------------------ kernel wrappers ------------------------------
def _layer_weight_args(layer, dim, heads, dim_head):
    """Reshape torch-layout weights into head-leading tensors (wrapper-side)."""
    a, f = layer['attn'], layer['ff']
    inner = heads * dim_head

    def split_heads(w):   # (dim, inner) -> (heads, dim, dim_head)
        return w.reshape(dim, heads, dim_head).transpose(1, 0, 2)

    wq = split_heads(a['w_qkv'][:, 0 * inner:1 * inner])
    wk = split_heads(a['w_qkv'][:, 1 * inner:2 * inner])
    wv = split_heads(a['w_qkv'][:, 2 * inner:3 * inner])
    wo = a['w_out'].reshape(heads, dim_head, dim)
    mlp = f['w1'].shape[1]
    return (a['ln_g'].reshape(1, dim), a['ln_b'].reshape(1, dim),
            wq, wk, wv, wo, a['b_out'].reshape(1, dim),
            f['ln_g'].reshape(1, dim), f['ln_b'].reshape(1, dim),
            f['w1'], f['b1'].reshape(1, mlp), f['w2'], f['b2'].reshape(1, dim))


def _patch_embed(patches, params, combined_embed):
    B, N, PD = patches.shape
    args = (patches,
            params['pe_ln1_g'].reshape(1, PD), params['pe_ln1_b'].reshape(1, PD),
            params['pe_w'], params['pe_b'].reshape(1, D_ENC),
            params['pe_ln2_g'].reshape(1, D_ENC), params['pe_ln2_b'].reshape(1, D_ENC),
            combined_embed)
    in_specs = [_batched_spec(patches)] + [_resident_spec(a) for a in args[1:]]
    return pl.pallas_call(
        _patch_embed_kernel,
        out_shape=jax.ShapeDtypeStruct((B, N, D_ENC), patches.dtype),
        grid=(B,),
        in_specs=in_specs,
        out_specs=pl.BlockSpec((1, N, D_ENC), lambda b: (b, 0, 0)),
        compiler_params=_PARALLEL_B,
    )(*args)


def _plain_layer(x, layer, heads, dim_head, scale):
    # TODO(synk): for depth > 1, stack layer weights on a leading depth axis and
    # run a single pallas_call with the depth axis on the grid and a VMEM-resident
    # activation, instead of one launch per layer.
    B, n, D = x.shape
    wargs = _layer_weight_args(layer, D, heads, dim_head)
    args = (x,) + wargs
    in_specs = [_batched_spec(x)] + [_resident_spec(a) for a in wargs]
    return pl.pallas_call(
        functools.partial(_tf_layer_kernel, heads=heads, scale=scale),
        out_shape=jax.ShapeDtypeStruct(x.shape, x.dtype),
        grid=(B,),
        in_specs=in_specs,
        out_specs=pl.BlockSpec((1, n, D), lambda b: (b, 0, 0)),
        compiler_params=_PARALLEL_B,
    )(*args)


def _encoder_forward(tokens_u, params, add_u):
    """Encoder layers; last layer fused with final-LN + enc_to_dec + embed add."""
    tf = params['enc_tf']
    heads, dim_head = ENC_HEADS, ENC_DIM_HEAD
    scale = float(dim_head) ** -0.5
    x = tokens_u
    for layer in tf['layers'][:-1]:
        x = _plain_layer(x, layer, heads, dim_head, scale)
    B, n, D = x.shape
    wargs = _layer_weight_args(tf['layers'][-1], D, heads, dim_head)
    args = (x, add_u) + wargs + (
        tf['final_ln_g'].reshape(1, D), tf['final_ln_b'].reshape(1, D),
        params['enc_to_dec_w'], params['enc_to_dec_b'].reshape(1, D_DEC))
    in_specs = ([_batched_spec(x), _batched_spec(add_u)]
                + [_resident_spec(a) for a in args[2:]])
    return pl.pallas_call(
        functools.partial(_enc_last_layer_kernel, heads=heads, scale=scale),
        out_shape=jax.ShapeDtypeStruct((B, n, D_DEC), x.dtype),
        grid=(B,),
        in_specs=in_specs,
        out_specs=pl.BlockSpec((1, n, D_DEC), lambda b: (b, 0, 0)),
        compiler_params=_PARALLEL_B,
    )(*args)


def _decoder_forward(x, params):
    """Decoder layers; last layer fused with the final LayerNorm."""
    tf = params['dec_tf']
    heads, dim_head = DEC_HEADS, DEC_DIM_HEAD
    scale = float(dim_head) ** -0.5
    for layer in tf['layers'][:-1]:
        x = _plain_layer(x, layer, heads, dim_head, scale)
    B, n, D = x.shape
    wargs = _layer_weight_args(tf['layers'][-1], D, heads, dim_head)
    args = (x,) + wargs + (tf['final_ln_g'].reshape(1, D),
                           tf['final_ln_b'].reshape(1, D))
    in_specs = [_batched_spec(x)] + [_resident_spec(a) for a in args[1:]]
    return pl.pallas_call(
        functools.partial(_dec_last_layer_kernel, heads=heads, scale=scale),
        out_shape=jax.ShapeDtypeStruct((B, n, D), x.dtype),
        grid=(B,),
        in_specs=in_specs,
        out_specs=pl.BlockSpec((1, n, D), lambda b: (b, 0, 0)),
        compiler_params=_PARALLEL_B,
    )(*args)


def _to_pixels_with_mse(mask_tokens, w, b, masked_patches):
    B, nm, _ = mask_tokens.shape
    PD = w.shape[1]
    b2 = b.reshape(1, PD)
    args = (mask_tokens, w, b2, masked_patches)
    in_specs = [_batched_spec(mask_tokens), _resident_spec(w),
                _resident_spec(b2), _batched_spec(masked_patches)]
    pred, sse = pl.pallas_call(
        _pixels_mse_kernel,
        out_shape=(jax.ShapeDtypeStruct((B, nm, PD), mask_tokens.dtype),
                   jax.ShapeDtypeStruct((B, 1, 1), jnp.float32)),
        grid=(B,),
        in_specs=in_specs,
        out_specs=(pl.BlockSpec((1, nm, PD), lambda b: (b, 0, 0)),
                   pl.BlockSpec((1, 1, 1), lambda b: (b, 0, 0))),
        compiler_params=_PARALLEL_B,
    )(*args)
    # TODO(synk): pred's 64-lane store could be presented as a 128-lane-dense slab
    # for fully unmasked vst if this ever stops being launch-bound.
    loss = jnp.sum(sse) / float(B * nm * PD)
    return pred, loss


# --------------------------- layout plumbing (XLA) ---------------------------
def to_patches_all(img):
    """All modalities at once: 'b c (h p1)(w p2) -> b (c h w) (p1 p2)'."""
    B, C, Hh, Ww = img.shape
    x = img.reshape(B, C, Hh // PATCH, PATCH, Ww // PATCH, PATCH)
    x = x.transpose(0, 1, 2, 4, 3, 5)            # b, c, h, w, p1, p2
    return x.reshape(B, C * (Hh // PATCH) * (Ww // PATCH), PATCH * PATCH)


# ------------------------------ parameter init -------------------------------
def _normal(key, shape, scale=0.02):
    return (scale * jax.random.normal(key, shape)).astype(DTYPE)


def init_transformer(key, dim, depth, heads, dim_head, mlp_dim):
    inner = heads * dim_head
    layers = []
    for _ in range(depth):
        key, k0, k1, k2, k3 = jax.random.split(key, 5)
        attn = {'ln_g': jnp.ones((dim,), DTYPE), 'ln_b': jnp.zeros((dim,), DTYPE),
                'w_qkv': _normal(k0, (dim, 3 * inner)),      # bias=False
                'w_out': _normal(k1, (inner, dim)),
                'b_out': jnp.zeros((dim,), DTYPE)}
        ff = {'ln_g': jnp.ones((dim,), DTYPE), 'ln_b': jnp.zeros((dim,), DTYPE),
              'w1': _normal(k2, (dim, mlp_dim)), 'b1': jnp.zeros((mlp_dim,), DTYPE),
              'w2': _normal(k3, (mlp_dim, dim)), 'b2': jnp.zeros((dim,), DTYPE)}
        layers.append({'attn': attn, 'ff': ff})
    return {'layers': layers,
            'final_ln_g': jnp.ones((dim,), DTYPE),
            'final_ln_b': jnp.zeros((dim,), DTYPE)}


def init_params(key):
    ks = jax.random.split(key, 12)
    return {
        # encoder pieces
        'pos_embedding': _normal(ks[0], (1, NUM_PATCHES_ATTR, D_ENC)),
        'enc_spectral_embedding': _normal(ks[1], (1, NUM_SPECTRAL, D_ENC)),
        'pe_ln1_g': jnp.ones((PATCH_DIM,), DTYPE), 'pe_ln1_b': jnp.zeros((PATCH_DIM,), DTYPE),
        'pe_w': _normal(ks[2], (PATCH_DIM, D_ENC)), 'pe_b': jnp.zeros((D_ENC,), DTYPE),
        'pe_ln2_g': jnp.ones((D_ENC,), DTYPE), 'pe_ln2_b': jnp.zeros((D_ENC,), DTYPE),
        'enc_tf': init_transformer(ks[3], D_ENC, ENC_DEPTH, ENC_HEADS, ENC_DIM_HEAD, ENC_MLP),
        # MAE decoder pieces
        'enc_to_dec_w': _normal(ks[4], (D_ENC, D_DEC)),
        'enc_to_dec_b': jnp.zeros((D_DEC,), DTYPE),
        'mask_token': _normal(ks[5], (D_DEC,), scale=1.0),
        'dec_tf': init_transformer(ks[6], D_DEC, DEC_DEPTH, DEC_HEADS, DEC_DIM_HEAD, DEC_MLP),
        'decoder_pos_emb': _normal(ks[7], (NUM_PATCHES_ATTR, D_DEC), scale=1.0),
        'spectral_embedding': _normal(ks[8], (NUM_SPECTRAL, D_DEC), scale=1.0),
        'to_pixels_w': _normal(ks[9], (D_DEC, PATCH_DIM)),
        'to_pixels_b': jnp.zeros((PATCH_DIM,), DTYPE),
    }


# ------------------------------- forward pass --------------------------------
def multispectral_mae_forward(params, img, keys, mask_key):
    B, C, Hh, Ww = img.shape
    img_cbhw = jnp.transpose(img, (1, 0, 2, 3))        # 'b c h w -> c b h w'
    per_mod = NUM_PATCHES_ATTR - 1

    all_patches = to_patches_all(img)                  # (B, C*P, patch_dim)
    num_patches = all_patches.shape[1]

    keys_arr = jnp.asarray(keys, dtype=jnp.int32)
    spec_e = params['enc_spectral_embedding'][0, keys_arr]        # (C, D_ENC)
    pos_e = params['pos_embedding'][0, 1:per_mod + 1]             # pool == 'cls'
    combined_embed = (spec_e[:, None, :] + pos_e[None, :, :]).reshape(
        C * per_mod, D_ENC).astype(DTYPE)

    tokens = _patch_embed(all_patches, params, combined_embed)    # (B, C*P, D_ENC)

    # ------------------------------ masking ------------------------------
    # TODO(synk): masking uses jax.random (not torch RNG); multi-embedding branch
    # (single_embedding_layer=False) and dropout>0 are not exercised.
    num_masked = int(MASKING_RATIO * num_patches)
    num_unmasked = num_patches - num_masked
    rand = jax.random.uniform(mask_key, (B, num_patches))
    rand_indices = jnp.argsort(rand, axis=-1)
    masked_indices = rand_indices[:, :num_masked]
    unmasked_indices = rand_indices[:, num_masked:]
    br = jnp.arange(B)[:, None]

    tokens_u = tokens[br, unmasked_indices]                       # (B, nu, D_ENC)
    masked_patches = all_patches[br, masked_indices]              # (B, nm, patch_dim)

    pos_m = masked_indices % per_mod
    pos_u = unmasked_indices % per_mod
    spec_m_ids = keys_arr[masked_indices // per_mod]
    spec_u_ids = keys_arr[unmasked_indices // per_mod]

    # ------------------- encoder (+ fused enc_to_dec epilogue) -------------------
    add_u = (params['decoder_pos_emb'][pos_u]
             + params['spectral_embedding'][spec_u_ids]).astype(DTYPE)    # (B, nu, D_DEC)
    unmasked_dec = _encoder_forward(tokens_u, params, add_u)              # (B, nu, D_DEC)

    mask_toks = (params['mask_token'][None, None, :]
                 + params['decoder_pos_emb'][pos_m]
                 + params['spectral_embedding'][spec_m_ids]).astype(DTYPE)

    # scatter-free decoder-input assembly: single inverse-permutation gather
    combined_dec = jnp.concatenate([mask_toks, unmasked_dec], axis=1)
    inv_perm = jnp.argsort(rand_indices, axis=-1)
    dec_full = combined_dec[br, inv_perm]                         # (B, np, D_DEC)

    # ---------------------- decoder (+ fused final-LN epilogue) ----------------------
    decoded = _decoder_forward(dec_full, params)                  # (B, np, D_DEC)

    mask_out = decoded[br, masked_indices]                        # (B, nm, D_DEC)
    pred_pixel_values, recon_loss = _to_pixels_with_mse(
        mask_out, params['to_pixels_w'], params['to_pixels_b'], masked_patches)

    reconstruction_data = {'masked_indices': masked_indices,
                           'patches': all_patches,
                           'model_input': img_cbhw,
                           'predicted': pred_pixel_values}
    return recon_loss, decoded, reconstruction_data


# ----------------------------------- main ------------------------------------
if __name__ == "__main__":
    root = jax.random.PRNGKey(0)
    k_params, k_img, k_mask = jax.random.split(root, 3)

    params = init_params(k_params)
    img = jax.random.normal(k_img, (BATCH, NUM_MODALITIES, H, W), dtype=DTYPE)

    fwd = jax.jit(multispectral_mae_forward, static_argnames=('keys',))
    loss, decoded_tokens, recon = fwd(params, img, keys=KEYS, mask_key=k_mask)

    jax.block_until_ready((loss, decoded_tokens, recon['predicted']))
    num_patches_total = NUM_MODALITIES * P_PER_MOD
    num_masked = int(MASKING_RATIO * num_patches_total)
    assert decoded_tokens.shape == (BATCH, num_patches_total, D_DEC)
    assert recon['predicted'].shape == (BATCH, num_masked, PATCH_DIM)
    assert bool(jnp.isfinite(loss))
    print("KERNEL_OK")
</pallas_src>

<mosaic_0001>
module attributes {stable_mosaic.version = 11 : i64} {
  func.func @_patch_embed_kernel(%arg0: i32, %arg1: memref<1x12x64xf32, #tpu.memory_space<vmem>>, %arg2: memref<1x64xf32, #tpu.memory_space<vmem>>, %arg3: memref<1x64xf32, #tpu.memory_space<vmem>>, %arg4: memref<64x32xf32, #tpu.memory_space<vmem>>, %arg5: memref<1x32xf32, #tpu.memory_space<vmem>>, %arg6: memref<1x32xf32, #tpu.memory_space<vmem>>, %arg7: memref<1x32xf32, #tpu.memory_space<vmem>>, %arg8: memref<12x32xf32, #tpu.memory_space<vmem>>, %arg9: memref<1x12x32xf32, #tpu.memory_space<vmem>>) attributes {dimension_semantics = [#tpu.dimension_semantics<parallel>], iteration_bounds = array<i64: 2>, scalar_prefetch = 0 : i64, scratch_operands = 0 : i64, tpu.core_type = #tpu.core_type<tc>, window_params = [{transform_indices = @transform_0, window_bounds = array<i64: 1, 12, 64>}, {pipeline_mode = #tpu.pipeline_mode<synchronous>, transform_indices = @transform_1, window_bounds = array<i64: 1, 64>}, {pipeline_mode = #tpu.pipeline_mode<synchronous>, transform_indices = @transform_2, window_bounds = array<i64: 1, 64>}, {pipeline_mode = #tpu.pipeline_mode<synchronous>, transform_indices = @transform_3, window_bounds = array<i64: 64, 32>}, {pipeline_mode = #tpu.pipeline_mode<synchronous>, transform_indices = @transform_4, window_bounds = array<i64: 1, 32>}, {pipeline_mode = #tpu.pipeline_mode<synchronous>, transform_indices = @transform_5, window_bounds = array<i64: 1, 32>}, {pipeline_mode = #tpu.pipeline_mode<synchronous>, transform_indices = @transform_6, window_bounds = array<i64: 1, 32>}, {pipeline_mode = #tpu.pipeline_mode<synchronous>, transform_indices = @transform_7, window_bounds = array<i64: 12, 32>}, {transform_indices = @transform_8, window_bounds = array<i64: 1, 12, 32>}]} {
    %c0 = arith.constant 0 : index
    %c0_0 = arith.constant 0 : index
    %c0_1 = arith.constant 0 : index
    %0 = vector.load %arg1[%c0, %c0_0, %c0_1] : memref<1x12x64xf32, #tpu.memory_space<vmem>>, vector<1x12x64xf32>
    %1 = vector.shape_cast %0 : vector<1x12x64xf32> to vector<12x64xf32>
    %c0_2 = arith.constant 0 : index
    %c0_3 = arith.constant 0 : index
    %2 = vector.load %arg2[%c0_2, %c0_3] : memref<1x64xf32, #tpu.memory_space<vmem>>, vector<1x64xf32>
    %c0_4 = arith.constant 0 : index
    %c0_5 = arith.constant 0 : index
    %3 = vector.load %arg3[%c0_4, %c0_5] : memref<1x64xf32, #tpu.memory_space<vmem>>, vector<1x64xf32>
    %cst = arith.constant dense<0.000000e+00> : vector<12xf32>
    %4 = vector.multi_reduction <add>, %1, %cst [1] : vector<12x64xf32> to vector<12xf32>
    %5 = vector.shape_cast %4 : vector<12xf32> to vector<12x1xf32>
    %cst_6 = arith.constant 6.400000e+01 : f32
    %6 = vector.broadcast %cst_6 : f32 to vector<12x1xf32>
    %7 = arith.divf %5, %6 : vector<12x1xf32>
    %8 = vector.broadcast %7 : vector<12x1xf32> to vector<12x64xf32>
    %9 = arith.subf %1, %8 : vector<12x64xf32>
    %10 = arith.mulf %9, %9 : vector<12x64xf32>
    %cst_7 = arith.constant dense<0.000000e+00> : vector<12xf32>
    %11 = vector.multi_reduction <add>, %10, %cst_7 [1] : vector<12x64xf32> to vector<12xf32>
    %12 = vector.shape_cast %11 : vector<12xf32> to vector<12x1xf32>
    %cst_8 = arith.constant 6.400000e+01 : f32
    %13 = vector.broadcast %cst_8 : f32 to vector<12x1xf32>
    %14 = arith.divf %12, %13 : vector<12x1xf32>
    %cst_9 = arith.constant 9.99999974E-6 : f32
    %15 = vector.broadcast %cst_9 : f32 to vector<12x1xf32>
    %16 = arith.addf %14, %15 : vector<12x1xf32>
    %17 = math.rsqrt %16 : vector<12x1xf32>
    %18 = vector.broadcast %17 : vector<12x1xf32> to vector<12x64xf32>
    %19 = arith.mulf %9, %18 : vector<12x64xf32>
    %20 = vector.broadcast %2 : vector<1x64xf32> to vector<12x64xf32>
    %21 = arith.mulf %19, %20 : vector<12x64xf32>
    %22 = vector.broadcast %3 : vector<1x64xf32> to vector<12x64xf32>
    %23 = arith.addf %21, %22 : vector<12x64xf32>
    %c0_10 = arith.constant 0 : index
    %c0_11 = arith.constant 0 : index
    %24 = vector.load %arg4[%c0_10, %c0_11] : memref<64x32xf32, #tpu.memory_space<vmem>>, vector<64x32xf32>
    %cst_12 = arith.constant dense<0.000000e+00> : vector<12x32xf32>
    %25 = tpu.matmul %23, %24, %cst_12 {dimension_numbers = #tpu.dot_dimension_numbers<[1], [0], [0], [1], [0, 0, 1, 1], [], []>} : vector<12x64xf32>, vector<64x32xf32>, vector<12x32xf32> -> vector<12x32xf32>
    %c0_13 = arith.constant 0 : index
    %c0_14 = arith.constant 0 : index
    %26 = vector.load %arg5[%c0_13, %c0_14] : memref<1x32xf32, #tpu.memory_space<vmem>>, vector<1x32xf32>
    %27 = vector.broadcast %26 : vector<1x32xf32> to vector<12x32xf32>
    %28 = arith.addf %25, %27 : vector<12x32xf32>
    %c0_15 = arith.constant 0 : index
    %c0_16 = arith.constant 0 : index
    %29 = vector.load %arg6[%c0_15, %c0_16] : memref<1x32xf32, #tpu.memory_space<vmem>>, vector<1x32xf32>
    %c0_17 = arith.constant 0 : index
    %c0_18 = arith.constant 0 : index
    %30 = vector.load %arg7[%c0_17, %c0_18] : memref<1x32xf32, #tpu.memory_space<vmem>>, vector<1x32xf32>
    %cst_19 = arith.constant dense<0.000000e+00> : vector<12xf32>
    %31 = vector.multi_reduction <add>, %28, %cst_19 [1] : vector<12x32xf32> to vector<12xf32>
    %32 = vector.shape_cast %31 : vector<12xf32> to vector<12x1xf32>
    %cst_20 = arith.constant 3.200000e+01 : f32
    %33 = vector.broadcast %cst_20 : f32 to vector<12x1xf32>
    %34 = arith.divf %32, %33 : vector<12x1xf32>
    %35 = vector.broadcast %34 : vector<12x1xf32> to vector<12x32xf32>
    %36 = arith.subf %28, %35 : vector<12x32xf32>
    %37 = arith.mulf %36, %36 : vector<12x32xf32>
    %cst_21 = arith.constant dense<0.000000e+00> : vector<12xf32>
    %38 = vector.multi_reduction <add>, %37, %cst_21 [1] : vector<12x32xf32> to vector<12xf32>
    %39 = vector.shape_cast %38 : vector<12xf32> to vector<12x1xf32>
    %cst_22 = arith.constant 3.200000e+01 : f32
    %40 = vector.broadcast %cst_22 : f32 to vector<12x1xf32>
    %41 = arith.divf %39, %40 : vector<12x1xf32>
    %cst_23 = arith.constant 9.99999974E-6 : f32
    %42 = vector.broadcast %cst_23 : f32 to vector<12x1xf32>
    %43 = arith.addf %41, %42 : vector<12x1xf32>
    %44 = math.rsqrt %43 : vector<12x1xf32>
    %45 = vector.broadcast %44 : vector<12x1xf32> to vector<12x32xf32>
    %46 = arith.mulf %36, %45 : vector<12x32xf32>
    %47 = vector.broadcast %29 : vector<1x32xf32> to vector<12x32xf32>
    %48 = arith.mulf %46, %47 : vector<12x32xf32>
    %49 = vector.broadcast %30 : vector<1x32xf32> to vector<12x32xf32>
    %50 = arith.addf %48, %49 : vector<12x32xf32>
    %c0_24 = arith.constant 0 : index
    %c0_25 = arith.constant 0 : index
    %51 = vector.load %arg8[%c0_24, %c0_25] : memref<12x32xf32, #tpu.memory_space<vmem>>, vector<12x32xf32>
    %52 = arith.addf %50, %51 : vector<12x32xf32>
    %c0_26 = arith.constant 0 : index
    %c0_27 = arith.constant 0 : index
    %c0_28 = arith.constant 0 : index
    %53 = vector.load %arg9[%c0_26, %c0_27, %c0_28] : memref<1x12x32xf32, #tpu.memory_space<vmem>>, vector<1x12x32xf32>
    %54 = vector.shape_cast %53 : vector<1x12x32xf32> to vector<12x32xf32>
    %55 = vector.shape_cast %52 : vector<12x32xf32> to vector<1x12x32xf32>
    tpu.vector_store %arg9[%c0_26, %c0_27, %c0_28], %55 {strides = array<i32>} : memref<1x12x32xf32, #tpu.memory_space<vmem>>, vector<1x12x32xf32>,
    return
  }
  func.func @transform_0(%arg0: i32) -> (i32, i32, i32) {
    %c0_i32 = arith.constant 0 : i32
    %c0_i32_0 = arith.constant 0 : i32
    %c0_i32_1 = arith.constant 0 : i32
    return %arg0, %c0_i32, %c0_i32_0 : i32, i32, i32
  }
  func.func @transform_1(%arg0: i32) -> (i32, i32) {
    %c0_i32 = arith.constant 0 : i32
    %c0_i32_0 = arith.constant 0 : i32
    %c0_i32_1 = arith.constant 0 : i32
    return %c0_i32, %c0_i32_0 : i32, i32
  }
  func.func @transform_2(%arg0: i32) -> (i32, i32) {
    %c0_i32 = arith.constant 0 : i32
    %c0_i32_0 = arith.constant 0 : i32
    %c0_i32_1 = arith.constant 0 : i32
    return %c0_i32, %c0_i32_0 : i32, i32
  }
  func.func @transform_3(%arg0: i32) -> (i32, i32) {
    %c0_i32 = arith.constant 0 : i32
    %c0_i32_0 = arith.constant 0 : i32
    %c0_i32_1 = arith.constant 0 : i32
    return %c0_i32, %c0_i32_0 : i32, i32
  }
  func.func @transform_4(%arg0: i32) -> (i32, i32) {
    %c0_i32 = arith.constant 0 : i32
    %c0_i32_0 = arith.constant 0 : i32
    %c0_i32_1 = arith.constant 0 : i32
    return %c0_i32, %c0_i32_0 : i32, i32
  }
  func.func @transform_5(%arg0: i32) -> (i32, i32) {
    %c0_i32 = arith.constant 0 : i32
    %c0_i32_0 = arith.constant 0 : i32
    %c0_i32_1 = arith.constant 0 : i32
    return %c0_i32, %c0_i32_0 : i32, i32
  }
  func.func @transform_6(%arg0: i32) -> (i32, i32) {
    %c0_i32 = arith.constant 0 : i32
    %c0_i32_0 = arith.constant 0 : i32
    %c0_i32_1 = arith.constant 0 : i32
    return %c0_i32, %c0_i32_0 : i32, i32
  }
  func.func @transform_7(%arg0: i32) -> (i32, i32) {
    %c0_i32 = arith.constant 0 : i32
    %c0_i32_0 = arith.constant 0 : i32
    %c0_i32_1 = arith.constant 0 : i32
    return %c0_i32, %c0_i32_0 : i32, i32
  }
  func.func @transform_8(%arg0: i32) -> (i32, i32, i32) {
    %c0_i32 = arith.constant 0 : i32
    %c0_i32_0 = arith.constant 0 : i32
    %c0_i32_1 = arith.constant 0 : i32
    return %arg0, %c0_i32, %c0_i32_0 : i32, i32, i32
  }
}

module attributes {stable_mosaic.version = 11 : i64} {
  func.func @_enc_last_layer_kernel(%arg0: i32, %arg1: memref<1x3x32xf32, #tpu.memory_space<vmem>>, %arg2: memref<1x3x48xf32, #tpu.memory_space<vmem>>, %arg3: memref<1x32xf32, #tpu.memory_space<vmem>>, %arg4: memref<1x32xf32, #tpu.memory_space<vmem>>, %arg5: memref<2x32x16xf32, #tpu.memory_space<vmem>>, %arg6: memref<2x32x16xf32, #tpu.memory_space<vmem>>, %arg7: memref<2x32x16xf32, #tpu.memory_space<vmem>>, %arg8: memref<2x16x32xf32, #tpu.memory_space<vmem>>, %arg9: memref<1x32xf32, #tpu.memory_space<vmem>>, %arg10: memref<1x32xf32, #tpu.memory_space<vmem>>, %arg11: memref<1x32xf32, #tpu.memory_space<vmem>>, %arg12: memref<32x64xf32, #tpu.memory_space<vmem>>, %arg13: memref<1x64xf32, #tpu.memory_space<vmem>>, %arg14: memref<64x32xf32, #tpu.memory_space<vmem>>, %arg15: memref<1x32xf32, #tpu.memory_space<vmem>>, %arg16: memref<1x32xf32, #tpu.memory_space<vmem>>, %arg17: memref<1x32xf32, #tpu.memory_space<vmem>>, %arg18: memref<32x48xf32, #tpu.memory_space<vmem>>, %arg19: memref<1x48xf32, #tpu.memory_space<vmem>>, %arg20: memref<1x3x48xf32, #tpu.memory_space<vmem>>) attributes {dimension_semantics = [#tpu.dimension_semantics<parallel>], iteration_bounds = array<i64: 2>, scalar_prefetch = 0 : i64, scratch_operands = 0 : i64, tpu.core_type = #tpu.core_type<tc>, window_params = [{transform_indices = @transform_0, window_bounds = array<i64: 1, 3, 32>}, {transform_indices = @transform_1, window_bounds = array<i64: 1, 3, 48>}, {pipeline_mode = #tpu.pipeline_mode<synchronous>, transform_indices = @transform_2, window_bounds = array<i64: 1, 32>}, {pipeline_mode = #tpu.pipeline_mode<synchronous>, transform_indices = @transform_3, window_bounds = array<i64: 1, 32>}, {pipeline_mode = #tpu.pipeline_mode<synchronous>, transform_indices = @transform_4, window_bounds = array<i64: 2, 32, 16>}, {pipeline_mode = #tpu.pipeline_mode<synchronous>, transform_indices = @transform_5, window_bounds = array<i64: 2, 32, 16>}, {pipeline_mode = #tpu.pipeline_mode<synchronous>, transform_indices = @transform_6, window_bounds = array<i64: 2, 32, 16>}, {pipeline_mode = #tpu.pipeline_mode<synchronous>, transform_indices = @transform_7, window_bounds = array<i64: 2, 16, 32>}, {pipeline_mode = #tpu.pipeline_mode<synchronous>, transform_indices = @transform_8, window_bounds = array<i64: 1, 32>}, {pipeline_mode = #tpu.pipeline_mode<synchronous>, transform_indices = @transform_9, window_bounds = array<i64: 1, 32>}, {pipeline_mode = #tpu.pipeline_mode<synchronous>, transform_indices = @transform_10, window_bounds = array<i64: 1, 32>}, {pipeline_mode = #tpu.pipeline_mode<synchronous>, transform_indices = @transform_11, window_bounds = array<i64: 32, 64>}, {pipeline_mode = #tpu.pipeline_mode<synchronous>, transform_indices = @transform_12, window_bounds = array<i64: 1, 64>}, {pipeline_mode = #tpu.pipeline_mode<synchronous>, transform_indices = @transform_13, window_bounds = array<i64: 64, 32>}, {pipeline_mode = #tpu.pipeline_mode<synchronous>, transform_indices = @transform_14, window_bounds = array<i64: 1, 32>}, {pipeline_mode = #tpu.pipeline_mode<synchronous>, transform_indices = @transform_15, window_bounds = array<i64: 1, 32>}, {pipeline_mode = #tpu.pipeline_mode<synchronous>, transform_indices = @transform_16, window_bounds = array<i64: 1, 32>}, {pipeline_mode = #tpu.pipeline_mode<synchronous>, transform_indices = @transform_17, window_bounds = array<i64: 32, 48>}, {pipeline_mode = #tpu.pipeline_mode<synchronous>, transform_indices = @transform_18, window_bounds = array<i64: 1, 48>}, {transform_indices = @transform_19, window_bounds = array<i64: 1, 3, 48>}]} {
    %c0 = arith.constant 0 : index
    %c0_0 = arith.constant 0 : index
    %c0_1 = arith.constant 0 : index
    %0 = vector.load %arg1[%c0, %c0_0, %c0_1] : memref<1x3x32xf32, #tpu.memory_space<vmem>>, vector<1x3x32xf32>
    %1 = vector.shape_cast %0 : vector<1x3x32xf32> to vector<3x32xf32>
    %c0_2 = arith.constant 0 : index
    %c0_3 = arith.constant 0 : index
    %2 = vector.load %arg3[%c0_2, %c0_3] : memref<1x32xf32, #tpu.memory_space<vmem>>, vector<1x32xf32>
    %c0_4 = arith.constant 0 : index
    %c0_5 = arith.constant 0 : index
    %3 = vector.load %arg4[%c0_4, %c0_5] : memref<1x32xf32, #tpu.memory_space<vmem>>, vector<1x32xf32>
    %c0_6 = arith.constant 0 : index
    %c0_7 = arith.constant 0 : index
    %c0_8 = arith.constant 0 : index
    %4 = vector.load %arg5[%c0_6, %c0_7, %c0_8] : memref<2x32x16xf32, #tpu.memory_space<vmem>>, vector<2x32x16xf32>
    %c0_9 = arith.constant 0 : index
    %c0_10 = arith.constant 0 : index
    %c0_11 = arith.constant 0 : index
    %5 = vector.load %arg6[%c0_9, %c0_10, %c0_11] : memref<2x32x16xf32, #tpu.memory_space<vmem>>, vector<2x32x16xf32>
    %c0_12 = arith.constant 0 : index
    %c0_13 = arith.constant 0 : index
    %c0_14 = arith.constant 0 : index
    %6 = vector.load %arg7[%c0_12, %c0_13, %c0_14] : memref<2x32x16xf32, #tpu.memory_space<vmem>>, vector<2x32x16xf32>
    %c0_15 = arith.constant 0 : index
    %c0_16 = arith.constant 0 : index
    %c0_17 = arith.constant 0 : index
    %7 = vector.load %arg8[%c0_15, %c0_16, %c0_17] : memref<2x16x32xf32, #tpu.memory_space<vmem>>, vector<2x16x32xf32>
    %c0_18 = arith.constant 0 : index
    %c0_19 = arith.constant 0 : index
    %8 = vector.load %arg9[%c0_18, %c0_19] : memref<1x32xf32, #tpu.memory_space<vmem>>, vector<1x32xf32>
    %c0_20 = arith.constant 0 : index
    %c0_21 = arith.constant 0 : index
    %9 = vector.load %arg10[%c0_20, %c0_21] : memref<1x32xf32, #tpu.memory_space<vmem>>, vector<1x32xf32>
    %c0_22 = arith.constant 0 : index
    %c0_23 = arith.constant 0 : index
    %10 = vector.load %arg11[%c0_22, %c0_23] : memref<1x32xf32, #tpu.memory_space<vmem>>, vector<1x32xf32>
    %c0_24 = arith.constant 0 : index
    %c0_25 = arith.constant 0 : index
    %11 = vector.load %arg12[%c0_24, %c0_25] : memref<32x64xf32, #tpu.memory_space<vmem>>, vector<32x64xf32>
    %c0_26 = arith.constant 0 : index
    %c0_27 = arith.constant 0 : index
    %12 = vector.load %arg13[%c0_26, %c0_27] : memref<1x64xf32, #tpu.memory_space<vmem>>, vector<1x64xf32>
    %c0_28 = arith.constant 0 : index
    %c0_29 = arith.constant 0 : index
    %13 = vector.load %arg14[%c0_28, %c0_29] : memref<64x32xf32, #tpu.memory_space<vmem>>, vector<64x32xf32>
    %c0_30 = arith.constant 0 : index
    %c0_31 = arith.constant 0 : index
    %14 = vector.load %arg15[%c0_30, %c0_31] : memref<1x32xf32, #tpu.memory_space<vmem>>, vector<1x32xf32>
    %cst = arith.constant dense<0.000000e+00> : vector<3xf32>
    %15 = vector.multi_reduction <add>, %1, %cst [1] : vector<3x32xf32> to vector<3xf32>
    %16 = vector.shape_cast %15 : vector<3xf32> to vector<3x1xf32>
    %cst_32 = arith.constant 3.200000e+01 : f32
    %17 = vector.broadcast %cst_32 : f32 to vector<3x1xf32>
    %18 = arith.divf %16, %17 : vector<3x1xf32>
    %19 = vector.broadcast %18 : vector<3x1xf32> to vector<3x32xf32>
    %20 = arith.subf %1, %19 : vector<3x32xf32>
    %21 = arith.mulf %20, %20 : vector<3x32xf32>
    %cst_33 = arith.constant dense<0.000000e+00> : vector<3xf32>
    %22 = vector.multi_reduction <add>, %21, %cst_33 [1] : vector<3x32xf32> to vector<3xf32>
    %23 = vector.shape_cast %22 : vector<3xf32> to vector<3x1xf32>
    %cst_34 = arith.constant 3.200000e+01 : f32
    %24 = vector.broadcast %cst_34 : f32 to vector<3x1xf32>
    %25 = arith.divf %23, %24 : vector<3x1xf32>
    %cst_35 = arith.constant 9.99999974E-6 : f32
    %26 = vector.broadcast %cst_35 : f32 to vector<3x1xf32>
    %27 = arith.addf %25, %26 : vector<3x1xf32>
    %28 = math.rsqrt %27 : vector<3x1xf32>
    %29 = vector.broadcast %28 : vector<3x1xf32> to vector<3x32xf32>
    %30 = arith.mulf %20, %29 : vector<3x32xf32>
    %31 = vector.broadcast %2 : vector<1x32xf32> to vector<3x32xf32>
    %32 = arith.mulf %30, %31 : vector<3x32xf32>
    %33 = vector.broadcast %3 : vector<1x32xf32> to vector<3x32xf32>
    %34 = arith.addf %32, %33 : vector<3x32xf32>
    %35 = vector.shape_cast %34 : vector<3x32xf32> to vector<1x3x32xf32>
    %36 = vector.shape_cast %35 : vector<1x3x32xf32> to vector<1x3x32xf32>
    %37 = vector.broadcast %36 : vector<1x3x32xf32> to vector<2x3x32xf32>
    "tpu.trace_start"() <{level = 10 : i32, message = "hnd,hde->hne"}> : () -> ()
    %cst_36 = arith.constant dense<0.000000e+00> : vector<2x3x16xf32>
    %38 = tpu.matmul %37, %4, %cst_36 {dimension_numbers = #tpu.dot_dimension_numbers<[2], [1], [1], [2], [0, 0, 0, 1, 1, 2], [0], [0]>} : vector<2x3x32xf32>, vector<2x32x16xf32>, vector<2x3x16xf32> -> vector<2x3x16xf32>
    %cst_37 = arith.constant dense<0.000000e+00> : vector<2x3x16xf32>
    %39 = tpu.matmul %37, %5, %cst_37 {dimension_numbers = #tpu.dot_dimension_numbers<[2], [1], [1], [2], [0, 0, 0, 1, 1, 2], [0], [0]>} : vector<2x3x32xf32>, vector<2x32x16xf32>, vector<2x3x16xf32> -> vector<2x3x16xf32>
    %cst_38 = arith.constant dense<0.000000e+00> : vector<2x3x16xf32>
    %40 = tpu.matmul %37, %6, %cst_38 {dimension_numbers = #tpu.dot_dimension_numbers<[2], [1], [1], [2], [0, 0, 0, 1, 1, 2], [0], [0]>} : vector<2x3x32xf32>, vector<2x32x16xf32>, vector<2x3x16xf32> -> vector<2x3x16xf32>
    "tpu.trace_stop"() : () -> ()
    "tpu.trace_start"() <{level = 10 : i32, message = "hne,hme->hnm"}> : () -> ()
    %cst_39 = arith.constant dense<0.000000e+00> : vector<2x3x3xf32>
    %41 = tpu.matmul %38, %39, %cst_39 {dimension_numbers = #tpu.dot_dimension_numbers<[2], [2], [1], [1], [0, 0, 0, 1, 1, 1], [0], [0]>} : vector<2x3x16xf32>, vector<2x3x16xf32>, vector<2x3x3xf32> -> vector<2x3x3xf32>
    "tpu.trace_stop"() : () -> ()
    %cst_40 = arith.constant 2.500000e-01 : f32
    %42 = vector.broadcast %cst_40 : f32 to vector<2x3x3xf32>
    %43 = arith.mulf %41, %42 : vector<2x3x3xf32>
    %cst_41 = arith.constant dense<0xFF800000> : vector<2x3xf32>
    %44 = vector.multi_reduction <maximumf>, %43, %cst_41 [2] : vector<2x3x3xf32> to vector<2x3xf32>
    %45 = vector.shape_cast %44 : vector<2x3xf32> to vector<2x3x1xf32>
    %46 = vector.broadcast %45 : vector<2x3x1xf32> to vector<2x3x3xf32>
    %47 = arith.subf %43, %46 : vector<2x3x3xf32>
    %48 = math.exp %47 : vector<2x3x3xf32>
    %cst_42 = arith.constant dense<0.000000e+00> : vector<2x3xf32>
    %49 = vector.multi_reduction <add>, %48, %cst_42 [2] : vector<2x3x3xf32> to vector<2x3xf32>
    %50 = vector.shape_cast %49 : vector<2x3xf32> to vector<2x3x1xf32>
    %51 = vector.broadcast %50 : vector<2x3x1xf32> to vector<2x3x3xf32>
    %52 = arith.divf %48, %51 : vector<2x3x3xf32>
    "tpu.trace_start"() <{level = 10 : i32, message = "hnm,hme->hne"}> : () -> ()
    %cst_43 = arith.constant dense<0.000000e+00> : vector<2x3x16xf32>
    %53 = tpu.matmul %52, %40, %cst_43 {dimension_numbers = #tpu.dot_dimension_numbers<[2], [1], [1], [2], [0, 0, 0, 1, 1, 2], [0], [0]>} : vector<2x3x3xf32>, vector<2x3x16xf32>, vector<2x3x16xf32> -> vector<2x3x16xf32>
    "tpu.trace_stop"() : () -> ()
    "tpu.trace_start"() <{level = 10 : i32, message = "hne,hed->hnd"}> : () -> ()
    %cst_44 = arith.constant dense<0.000000e+00> : vector<2x3x32xf32>
    %54 = tpu.matmul %53, %7, %cst_44 {dimension_numbers = #tpu.dot_dimension_numbers<[2], [1], [1], [2], [0, 0, 0, 1, 1, 2], [0], [0]>} : vector<2x3x16xf32>, vector<2x16x32xf32>, vector<2x3x32xf32> -> vector<2x3x32xf32>
    "tpu.trace_stop"() : () -> ()
    %55 = vector.extract_strided_slice %54 {offsets = [0, 0, 0], sizes = [1, 3, 32], strides = [1, 1, 1]} : vector<2x3x32xf32> to vector<1x3x32xf32>
    %56 = vector.shape_cast %55 : vector<1x3x32xf32> to vector<3x32xf32>
    %57 = vector.broadcast %8 : vector<1x32xf32> to vector<3x32xf32>
    %58 = arith.addf %57, %56 : vector<3x32xf32>
    %59 = vector.extract_strided_slice %54 {offsets = [1, 0, 0], sizes = [1, 3, 32], strides = [1, 1, 1]} : vector<2x3x32xf32> to vector<1x3x32xf32>
    %60 = vector.shape_cast %59 : vector<1x3x32xf32> to vector<3x32xf32>
    %61 = arith.addf %58, %60 : vector<3x32xf32>
    %62 = arith.addf %1, %61 : vector<3x32xf32>
    %cst_45 = arith.constant dense<0.000000e+00> : vector<3xf32>
    %63 = vector.multi_reduction <add>, %62, %cst_45 [1] : vector<3x32xf32> to vector<3xf32>
    %64 = vector.shape_cast %63 : vector<3xf32> to vector<3x1xf32>
    %cst_46 = arith.constant 3.200000e+01 : f32
    %65 = vector.broadcast %cst_46 : f32 to vector<3x1xf32>
    %66 = arith.divf %64, %65 : vector<3x1xf32>
    %67 = vector.broadcast %66 : vector<3x1xf32> to vector<3x32xf32>
    %68 = arith.subf %62, %67 : vector<3x32xf32>
    %69 = arith.mulf %68, %68 : vector<3x32xf32>
    %cst_47 = arith.constant dense<0.000000e+00> : vector<3xf32>
    %70 = vector.multi_reduction <add>, %69, %cst_47 [1] : vector<3x32xf32> to vector<3xf32>
    %71 = vector.shape_cast %70 : vector<3xf32> to vector<3x1xf32>
    %cst_48 = arith.constant 3.200000e+01 : f32
    %72 = vector.broadcast %cst_48 : f32 to vector<3x1xf32>
    %73 = arith.divf %71, %72 : vector<3x1xf32>
    %cst_49 = arith.constant 9.99999974E-6 : f32
    %74 = vector.broadcast %cst_49 : f32 to vector<3x1xf32>
    %75 = arith.addf %73, %74 : vector<3x1xf32>
    %76 = math.rsqrt %75 : vector<3x1xf32>
    %77 = vector.broadcast %76 : vector<3x1xf32> to vector<3x32xf32>
    %78 = arith.mulf %68, %77 : vector<3x32xf32>
    %79 = vector.broadcast %9 : vector<1x32xf32> to vector<3x32xf32>
    %80 = arith.mulf %78, %79 : vector<3x32xf32>
    %81 = vector.broadcast %10 : vector<1x32xf32> to vector<3x32xf32>
    %82 = arith.addf %80, %81 : vector<3x32xf32>
    %cst_50 = arith.constant dense<0.000000e+00> : vector<3x64xf32>
    %83 = tpu.matmul %82, %11, %cst_50 {dimension_numbers = #tpu.dot_dimension_numbers<[1], [0], [0], [1], [0, 0, 1, 1], [], []>} : vector<3x32xf32>, vector<32x64xf32>, vector<3x64xf32> -> vector<3x64xf32>
    %84 = vector.broadcast %12 : vector<1x64xf32> to vector<3x64xf32>
    %85 = arith.addf %83, %84 : vector<3x64xf32>
    %cst_51 = arith.constant 5.000000e-01 : f32
    %86 = vector.broadcast %cst_51 : f32 to vector<3x64xf32>
    %87 = arith.mulf %86, %85 : vector<3x64xf32>
    %cst_52 = arith.constant 0.707106769 : f32
    %88 = vector.broadcast %cst_52 : f32 to vector<3x64xf32>
    %89 = arith.mulf %85, %88 : vector<3x64xf32>
    %90 = math.absf %89 : vector<3x64xf32>
    %cst_53 = arith.constant 0.327591091 : f32
    %91 = vector.broadcast %cst_53 : f32 to vector<3x64xf32>
    %92 = arith.mulf %91, %90 : vector<3x64xf32>
    %cst_54 = arith.constant 1.000000e+00 : f32
    %93 = vector.broadcast %cst_54 : f32 to vector<3x64xf32>
    %94 = arith.addf %93, %92 : vector<3x64xf32>
    %cst_55 = arith.constant 1.000000e+00 : f32
    %95 = vector.broadcast %cst_55 : f32 to vector<3x64xf32>
    %96 = arith.divf %95, %94 : vector<3x64xf32>
    %cst_56 = arith.constant 1.06140542 : f32
    %97 = vector.broadcast %cst_56 : f32 to vector<3x64xf32>
    %98 = arith.mulf %97, %96 : vector<3x64xf32>
    %cst_57 = arith.constant -1.45315206 : f32
    %99 = vector.broadcast %cst_57 : f32 to vector<3x64xf32>
    %100 = arith.addf %98, %99 : vector<3x64xf32>
    %101 = arith.mulf %100, %96 : vector<3x64xf32>
    %cst_58 = arith.constant 1.42141378 : f32
    %102 = vector.broadcast %cst_58 : f32 to vector<3x64xf32>
    %103 = arith.addf %101, %102 : vector<3x64xf32>
    %104 = arith.mulf %103, %96 : vector<3x64xf32>
    %cst_59 = arith.constant -0.284496725 : f32
    %105 = vector.broadcast %cst_59 : f32 to vector<3x64xf32>
    %106 = arith.addf %104, %105 : vector<3x64xf32>
    %107 = arith.mulf %106, %96 : vector<3x64xf32>
    %cst_60 = arith.constant 0.254829586 : f32
    %108 = vector.broadcast %cst_60 : f32 to vector<3x64xf32>
    %109 = arith.addf %107, %108 : vector<3x64xf32>
    %110 = arith.mulf %109, %96 : vector<3x64xf32>
    %cst_61 = arith.constant 0.000000e+00 : f32
    %111 = vector.broadcast %cst_61 : f32 to vector<3x64xf32>
    %112 = arith.subf %111, %90 : vector<3x64xf32>
    %113 = arith.mulf %112, %90 : vector<3x64xf32>
    %114 = math.exp %113 : vector<3x64xf32>
    %115 = arith.mulf %110, %114 : vector<3x64xf32>
    %cst_62 = arith.constant 1.000000e+00 : f32
    %116 = vector.broadcast %cst_62 : f32 to vector<3x64xf32>
    %117 = arith.subf %116, %115 : vector<3x64xf32>
    %cst_63 = arith.constant 0.000000e+00 : f32
    %118 = vector.broadcast %cst_63 : f32 to vector<3x64xf32>
    %119 = arith.cmpf oge, %89, %118 : vector<3x64xf32>
    %cst_64 = arith.constant 0.000000e+00 : f32
    %120 = vector.broadcast %cst_64 : f32 to vector<3x64xf32>
    %121 = arith.subf %120, %117 : vector<3x64xf32>
    %122 = arith.select %119, %117, %121 : vector<3x64xi1>, vector<3x64xf32>
    %cst_65 = arith.constant 1.000000e+00 : f32
    %123 = vector.broadcast %cst_65 : f32 to vector<3x64xf32>
    %124 = arith.addf %123, %122 : vector<3x64xf32>
    %125 = arith.mulf %87, %124 : vector<3x64xf32>
    %cst_66 = arith.constant dense<0.000000e+00> : vector<3x32xf32>
    %126 = tpu.matmul %125, %13, %cst_66 {dimension_numbers = #tpu.dot_dimension_numbers<[1], [0], [0], [1], [0, 0, 1, 1], [], []>} : vector<3x64xf32>, vector<64x32xf32>, vector<3x32xf32> -> vector<3x32xf32>
    %127 = arith.addf %62, %126 : vector<3x32xf32>
    %128 = vector.broadcast %14 : vector<1x32xf32> to vector<3x32xf32>
    %129 = arith.addf %127, %128 : vector<3x32xf32>
    %c0_67 = arith.constant 0 : index
    %c0_68 = arith.constant 0 : index
    %130 = vector.load %arg16[%c0_67, %c0_68] : memref<1x32xf32, #tpu.memory_space<vmem>>, vector<1x32xf32>
    %c0_69 = arith.constant 0 : index
    %c0_70 = arith.constant 0 : index
    %131 = vector.load %arg17[%c0_69, %c0_70] : memref<1x32xf32, #tpu.memory_space<vmem>>, vector<1x32xf32>
    %cst_71 = arith.constant dense<0.000000e+00> : vector<3xf32>
    %132 = vector.multi_reduction <add>, %129, %cst_71 [1] : vector<3x32xf32> to vector<3xf32>
    %133 = vector.shape_cast %132 : vector<3xf32> to vector<3x1xf32>
    %cst_72 = arith.constant 3.200000e+01 : f32
    %134 = vector.broadcast %cst_72 : f32 to vector<3x1xf32>
    %135 = arith.divf %133, %134 : vector<3x1xf32>
    %136 = vector.broadcast %135 : vector<3x1xf32> to vector<3x32xf32>
    %137 = arith.subf %129, %136 : vector<3x32xf32>
    %138 = arith.mulf %137, %137 : vector<3x32xf32>
    %cst_73 = arith.constant dense<0.000000e+00> : vector<3xf32>
    %139 = vector.multi_reduction <add>, %138, %cst_73 [1] : vector<3x32xf32> to vector<3xf32>
    %140 = vector.shape_cast %139 : vector<3xf32> to vector<3x1xf32>
    %cst_74 = arith.constant 3.200000e+01 : f32
    %141 = vector.broadcast %cst_74 : f32 to vector<3x1xf32>
    %142 = arith.divf %140, %141 : vector<3x1xf32>
    %cst_75 = arith.constant 9.99999974E-6 : f32
    %143 = vector.broadcast %cst_75 : f32 to vector<3x1xf32>
    %144 = arith.addf %142, %143 : vector<3x1xf32>
    %145 = math.rsqrt %144 : vector<3x1xf32>
    %146 = vector.broadcast %145 : vector<3x1xf32> to vector<3x32xf32>
    %147 = arith.mulf %137, %146 : vector<3x32xf32>
    %148 = vector.broadcast %130 : vector<1x32xf32> to vector<3x32xf32>
    %149 = arith.mulf %147, %148 : vector<3x32xf32>
    %150 = vector.broadcast %131 : vector<1x32xf32> to vector<3x32xf32>
    %151 = arith.addf %149, %150 : vector<3x32xf32>
    %c0_76 = arith.constant 0 : index
    %c0_77 = arith.constant 0 : index
    %152 = vector.load %arg18[%c0_76, %c0_77] : memref<32x48xf32, #tpu.memory_space<vmem>>, vector<32x48xf32>
    %cst_78 = arith.constant dense<0.000000e+00> : vector<3x48xf32>
    %153 = tpu.matmul %151, %152, %cst_78 {dimension_numbers = #tpu.dot_dimension_numbers<[1], [0], [0], [1], [0, 0, 1, 1], [], []>} : vector<3x32xf32>, vector<32x48xf32>, vector<3x48xf32> -> vector<3x48xf32>
    %c0_79 = arith.constant 0 : index
    %c0_80 = arith.constant 0 : index
    %154 = vector.load %arg19[%c0_79, %c0_80] : memref<1x48xf32, #tpu.memory_space<vmem>>, vector<1x48xf32>
    %155 = vector.broadcast %154 : vector<1x48xf32> to vector<3x48xf32>
    %156 = arith.addf %153, %155 : vector<3x48xf32>
    %c0_81 = arith.constant 0 : index
    %c0_82 = arith.constant 0 : index
    %c0_83 = arith.constant 0 : index
    %157 = vector.load %arg2[%c0_81, %c0_82, %c0_83] : memref<1x3x48xf32, #tpu.memory_space<vmem>>, vector<1x3x48xf32>
    %158 = vector.shape_cast %157 : vector<1x3x48xf32> to vector<3x48xf32>
    %159 = arith.addf %156, %158 : vector<3x48xf32>
    %c0_84 = arith.constant 0 : index
    %c0_85 = arith.constant 0 : index
    %c0_86 = arith.constant 0 : index
    %160 = vector.load %arg20[%c0_84, %c0_85, %c0_86] : memref<1x3x48xf32, #tpu.memory_space<vmem>>, vector<1x3x48xf32>
    %161 = vector.shape_cast %160 : vector<1x3x48xf32> to vector<3x48xf32>
    %162 = vector.shape_cast %159 : vector<3x48xf32> to vector<1x3x48xf32>
    tpu.vector_store %arg20[%c0_84, %c0_85, %c0_86], %162 {strides = array<i32>} : memref<1x3x48xf32, #tpu.memory_space<vmem>>, vector<1x3x48xf32>,
    return
  }
  func.func @transform_0(%arg0: i32) -> (i32, i32, i32) {
    %c0_i32 = arith.constant 0 : i32
    %c0_i32_0 = arith.constant 0 : i32
    %c0_i32_1 = arith.constant 0 : i32
    return %arg0, %c0_i32, %c0_i32_0 : i32, i32, i32
  }
  func.func @transform_1(%arg0: i32) -> (i32, i32, i32) {
    %c0_i32 = arith.constant 0 : i32
    %c0_i32_0 = arith.constant 0 : i32
    %c0_i32_1 = arith.constant 0 : i32
    return %arg0, %c0_i32, %c0_i32_0 : i32, i32, i32
  }
  func.func @transform_2(%arg0: i32) -> (i32, i32) {
    %c0_i32 = arith.constant 0 : i32
    %c0_i32_0 = arith.constant 0 : i32
    %c0_i32_1 = arith.constant 0 : i32
    return %c0_i32, %c0_i32_0 : i32, i32
  }
  func.func @transform_3(%arg0: i32) -> (i32, i32) {
    %c0_i32 = arith.constant 0 : i32
    %c0_i32_0 = arith.constant 0 : i32
    %c0_i32_1 = arith.constant 0 : i32
    return %c0_i32, %c0_i32_0 : i32, i32
  }
  func.func @transform_4(%arg0: i32) -> (i32, i32, i32) {
    %c0_i32 = arith.constant 0 : i32
    %c0_i32_0 = arith.constant 0 : i32
    %c0_i32_1 = arith.constant 0 : i32
    %c0_i32_2 = arith.constant 0 : i32
    return %c0_i32, %c0_i32_0, %c0_i32_1 : i32, i32, i32
  }
  func.func @transform_5(%arg0: i32) -> (i32, i32, i32) {
    %c0_i32 = arith.constant 0 : i32
    %c0_i32_0 = arith.constant 0 : i32
    %c0_i32_1 = arith.constant 0 : i32
    %c0_i32_2 = arith.constant 0 : i32
    return %c0_i32, %c0_i32_0, %c0_i32_1 : i32, i32, i32
  }
  func.func @transform_6(%arg0: i32) -> (i32, i32, i32) {
    %c0_i32 = arith.constant 0 : i32
    %c0_i32_0 = arith.constant 0 : i32
    %c0_i32_1 = arith.constant 0 : i32
    %c0_i32_2 = arith.constant 0 : i32
    return %c0_i32, %c0_i32_0, %c0_i32_1 : i32, i32, i32
  }
  func.func @transform_7(%arg0: i32) -> (i32, i32, i32) {
    %c0_i32 = arith.constant 0 : i32
    %c0_i32_0 = arith.constant 0 : i32
    %c0_i32_1 = arith.constant 0 : i32
    %c0_i32_2 = arith.constant 0 : i32
    return %c0_i32, %c0_i32_0, %c0_i32_1 : i32, i32, i32
  }
  func.func @transform_8(%arg0: i32) -> (i32, i32) {
    %c0_i32 = arith.constant 0 : i32
    %c0_i32_0 = arith.constant 0 : i32
    %c0_i32_1 = arith.constant 0 : i32
    return %c0_i32, %c0_i32_0 : i32, i32
  }
  func.func @transform_9(%arg0: i32) -> (i32, i32) {
    %c0_i32 = arith.constant 0 : i32
    %c0_i32_0 = arith.constant 0 : i32
    %c0_i32_1 = arith.constant 0 : i32
    return %c0_i32, %c0_i32_0 : i32, i32
  }
  func.func @transform_10(%arg0: i32) -> (i32, i32) {
    %c0_i32 = arith.constant 0 : i32
    %c0_i32_0 = arith.constant 0 : i32
    %c0_i32_1 = arith.constant 0 : i32
    return %c0_i32, %c0_i32_0 : i32, i32
  }
  func.func @transform_11(%arg0: i32) -> (i32, i32) {
    %c0_i32 = arith.constant 0 : i32
    %c0_i32_0 = arith.constant 0 : i32
    %c0_i32_1 = arith.constant 0 : i32
    return %c0_i32, %c0_i32_0 : i32, i32
  }
  func.func @transform_12(%arg0: i32) -> (i32, i32) {
    %c0_i32 = arith.constant 0 : i32
    %c0_i32_0 = arith.constant 0 : i32
    %c0_i32_1 = arith.constant 0 : i32
    return %c0_i32, %c0_i32_0 : i32, i32
  }
  func.func @transform_13(%arg0: i32) -> (i32, i32) {
    %c0_i32 = arith.constant 0 : i32
    %c0_i32_0 = arith.constant 0 : i32
    %c0_i32_1 = arith.constant 0 : i32
    return %c0_i32, %c0_i32_0 : i32, i32
  }
  func.func @transform_14(%arg0: i32) -> (i32, i32) {
    %c0_i32 = arith.constant 0 : i32
    %c0_i32_0 = arith.constant 0 : i32
    %c0_i32_1 = arith.constant 0 : i32
    return %c0_i32, %c0_i32_0 : i32, i32
  }
  func.func @transform_15(%arg0: i32) -> (i32, i32) {
    %c0_i32 = arith.constant 0 : i32
    %c0_i32_0 = arith.constant 0 : i32
    %c0_i32_1 = arith.constant 0 : i32
    return %c0_i32, %c0_i32_0 : i32, i32
  }
  func.func @transform_16(%arg0: i32) -> (i32, i32) {
    %c0_i32 = arith.constant 0 : i32
    %c0_i32_0 = arith.constant 0 : i32
    %c0_i32_1 = arith.constant 0 : i32
    return %c0_i32, %c0_i32_0 : i32, i32
  }
  func.func @transform_17(%arg0: i32) -> (i32, i32) {
    %c0_i32 = arith.constant 0 : i32
    %c0_i32_0 = arith.constant 0 : i32
    %c0_i32_1 = arith.constant 0 : i32
    return %c0_i32, %c0_i32_0 : i32, i32
  }
  func.func @transform_18(%arg0: i32) -> (i32, i32) {
    %c0_i32 = arith.constant 0 : i32
    %c0_i32_0 = arith.constant 0 : i32
    %c0_i32_1 = arith.constant 0 : i32
    return %c0_i32, %c0_i32_0 : i32, i32
  }
  func.func @transform_19(%arg0: i32) -> (i32, i32, i32) {
    %c0_i32 = arith.constant 0 : i32
    %c0_i32_0 = arith.constant 0 : i32
    %c0_i32_1 = arith.constant 0 : i32
    return %arg0, %c0_i32, %c0_i32_0 : i32, i32, i32
  }
}

module attributes {stable_mosaic.version = 11 : i64} {
  func.func @_dec_last_layer_kernel(%arg0: i32, %arg1: memref<1x12x48xf32, #tpu.memory_space<vmem>>, %arg2: memref<1x48xf32, #tpu.memory_space<vmem>>, %arg3: memref<1x48xf32, #tpu.memory_space<vmem>>, %arg4: memref<2x48x16xf32, #tpu.memory_space<vmem>>, %arg5: memref<2x48x16xf32, #tpu.memory_space<vmem>>, %arg6: memref<2x48x16xf32, #tpu.memory_space<vmem>>, %arg7: memref<2x16x48xf32, #tpu.memory_space<vmem>>, %arg8: memref<1x48xf32, #tpu.memory_space<vmem>>, %arg9: memref<1x48xf32, #tpu.memory_space<vmem>>, %arg10: memref<1x48xf32, #tpu.memory_space<vmem>>, %arg11: memref<48x192xf32, #tpu.memory_space<vmem>>, %arg12: memref<1x192xf32, #tpu.memory_space<vmem>>, %arg13: memref<192x48xf32, #tpu.memory_space<vmem>>, %arg14: memref<1x48xf32, #tpu.memory_space<vmem>>, %arg15: memref<1x48xf32, #tpu.memory_space<vmem>>, %arg16: memref<1x48xf32, #tpu.memory_space<vmem>>, %arg17: memref<1x12x48xf32, #tpu.memory_space<vmem>>) attributes {dimension_semantics = [#tpu.dimension_semantics<parallel>], iteration_bounds = array<i64: 2>, scalar_prefetch = 0 : i64, scratch_operands = 0 : i64, tpu.core_type = #tpu.core_type<tc>, window_params = [{transform_indices = @transform_0, window_bounds = array<i64: 1, 12, 48>}, {pipeline_mode = #tpu.pipeline_mode<synchronous>, transform_indices = @transform_1, window_bounds = array<i64: 1, 48>}, {pipeline_mode = #tpu.pipeline_mode<synchronous>, transform_indices = @transform_2, window_bounds = array<i64: 1, 48>}, {pipeline_mode = #tpu.pipeline_mode<synchronous>, transform_indices = @transform_3, window_bounds = array<i64: 2, 48, 16>}, {pipeline_mode = #tpu.pipeline_mode<synchronous>, transform_indices = @transform_4, window_bounds = array<i64: 2, 48, 16>}, {pipeline_mode = #tpu.pipeline_mode<synchronous>, transform_indices = @transform_5, window_bounds = array<i64: 2, 48, 16>}, {pipeline_mode = #tpu.pipeline_mode<synchronous>, transform_indices = @transform_6, window_bounds = array<i64: 2, 16, 48>}, {pipeline_mode = #tpu.pipeline_mode<synchronous>, transform_indices = @transform_7, window_bounds = array<i64: 1, 48>}, {pipeline_mode = #tpu.pipeline_mode<synchronous>, transform_indices = @transform_8, window_bounds = array<i64: 1, 48>}, {pipeline_mode = #tpu.pipeline_mode<synchronous>, transform_indices = @transform_9, window_bounds = array<i64: 1, 48>}, {pipeline_mode = #tpu.pipeline_mode<synchronous>, transform_indices = @transform_10, window_bounds = array<i64: 48, 192>}, {pipeline_mode = #tpu.pipeline_mode<synchronous>, transform_indices = @transform_11, window_bounds = array<i64: 1, 192>}, {pipeline_mode = #tpu.pipeline_mode<synchronous>, transform_indices = @transform_12, window_bounds = array<i64: 192, 48>}, {pipeline_mode = #tpu.pipeline_mode<synchronous>, transform_indices = @transform_13, window_bounds = array<i64: 1, 48>}, {pipeline_mode = #tpu.pipeline_mode<synchronous>, transform_indices = @transform_14, window_bounds = array<i64: 1, 48>}, {pipeline_mode = #tpu.pipeline_mode<synchronous>, transform_indices = @transform_15, window_bounds = array<i64: 1, 48>}, {transform_indices = @transform_16, window_bounds = array<i64: 1, 12, 48>}]} {
    %c0 = arith.constant 0 : index
    %c0_0 = arith.constant 0 : index
    %c0_1 = arith.constant 0 : index
    %0 = vector.load %arg1[%c0, %c0_0, %c0_1] : memref<1x12x48xf32, #tpu.memory_space<vmem>>, vector<1x12x48xf32>
    %1 = vector.shape_cast %0 : vector<1x12x48xf32> to vector<12x48xf32>
    %c0_2 = arith.constant 0 : index
    %c0_3 = arith.constant 0 : index
    %2 = vector.load %arg2[%c0_2, %c0_3] : memref<1x48xf32, #tpu.memory_space<vmem>>, vector<1x48xf32>
    %c0_4 = arith.constant 0 : index
    %c0_5 = arith.constant 0 : index
    %3 = vector.load %arg3[%c0_4, %c0_5] : memref<1x48xf32, #tpu.memory_space<vmem>>, vector<1x48xf32>
    %c0_6 = arith.constant 0 : index
    %c0_7 = arith.constant 0 : index
    %c0_8 = arith.constant 0 : index
    %4 = vector.load %arg4[%c0_6, %c0_7, %c0_8] : memref<2x48x16xf32, #tpu.memory_space<vmem>>, vector<2x48x16xf32>
    %c0_9 = arith.constant 0 : index
    %c0_10 = arith.constant 0 : index
    %c0_11 = arith.constant 0 : index
    %5 = vector.load %arg5[%c0_9, %c0_10, %c0_11] : memref<2x48x16xf32, #tpu.memory_space<vmem>>, vector<2x48x16xf32>
    %c0_12 = arith.constant 0 : index
    %c0_13 = arith.constant 0 : index
    %c0_14 = arith.constant 0 : index
    %6 = vector.load %arg6[%c0_12, %c0_13, %c0_14] : memref<2x48x16xf32, #tpu.memory_space<vmem>>, vector<2x48x16xf32>
    %c0_15 = arith.constant 0 : index
    %c0_16 = arith.constant 0 : index
    %c0_17 = arith.constant 0 : index
    %7 = vector.load %arg7[%c0_15, %c0_16, %c0_17] : memref<2x16x48xf32, #tpu.memory_space<vmem>>, vector<2x16x48xf32>
    %c0_18 = arith.constant 0 : index
    %c0_19 = arith.constant 0 : index
    %8 = vector.load %arg8[%c0_18, %c0_19] : memref<1x48xf32, #tpu.memory_space<vmem>>, vector<1x48xf32>
    %c0_20 = arith.constant 0 : index
    %c0_21 = arith.constant 0 : index
    %9 = vector.load %arg9[%c0_20, %c0_21] : memref<1x48xf32, #tpu.memory_space<vmem>>, vector<1x48xf32>
    %c0_22 = arith.constant 0 : index
    %c0_23 = arith.constant 0 : index
    %10 = vector.load %arg10[%c0_22, %c0_23] : memref<1x48xf32, #tpu.memory_space<vmem>>, vector<1x48xf32>
    %c0_24 = arith.constant 0 : index
    %c0_25 = arith.constant 0 : index
    %11 = vector.load %arg11[%c0_24, %c0_25] : memref<48x192xf32, #tpu.memory_space<vmem>>, vector<48x192xf32>
    %c0_26 = arith.constant 0 : index
    %c0_27 = arith.constant 0 : index
    %12 = vector.load %arg12[%c0_26, %c0_27] : memref<1x192xf32, #tpu.memory_space<vmem>>, vector<1x192xf32>
    %c0_28 = arith.constant 0 : index
    %c0_29 = arith.constant 0 : index
    %13 = vector.load %arg13[%c0_28, %c0_29] : memref<192x48xf32, #tpu.memory_space<vmem>>, vector<192x48xf32>
    %c0_30 = arith.constant 0 : index
    %c0_31 = arith.constant 0 : index
    %14 = vector.load %arg14[%c0_30, %c0_31] : memref<1x48xf32, #tpu.memory_space<vmem>>, vector<1x48xf32>
    %cst = arith.constant dense<0.000000e+00> : vector<12xf32>
    %15 = vector.multi_reduction <add>, %1, %cst [1] : vector<12x48xf32> to vector<12xf32>
    %16 = vector.shape_cast %15 : vector<12xf32> to vector<12x1xf32>
    %cst_32 = arith.constant 4.800000e+01 : f32
    %17 = vector.broadcast %cst_32 : f32 to vector<12x1xf32>
    %18 = arith.divf %16, %17 : vector<12x1xf32>
    %19 = vector.broadcast %18 : vector<12x1xf32> to vector<12x48xf32>
    %20 = arith.subf %1, %19 : vector<12x48xf32>
    %21 = arith.mulf %20, %20 : vector<12x48xf32>
    %cst_33 = arith.constant dense<0.000000e+00> : vector<12xf32>
    %22 = vector.multi_reduction <add>, %21, %cst_33 [1] : vector<12x48xf32> to vector<12xf32>
    %23 = vector.shape_cast %22 : vector<12xf32> to vector<12x1xf32>
    %cst_34 = arith.constant 4.800000e+01 : f32
    %24 = vector.broadcast %cst_34 : f32 to vector<12x1xf32>
    %25 = arith.divf %23, %24 : vector<12x1xf32>
    %cst_35 = arith.constant 9.99999974E-6 : f32
    %26 = vector.broadcast %cst_35 : f32 to vector<12x1xf32>
    %27 = arith.addf %25, %26 : vector<12x1xf32>
    %28 = math.rsqrt %27 : vector<12x1xf32>
    %29 = vector.broadcast %28 : vector<12x1xf32> to vector<12x48xf32>
    %30 = arith.mulf %20, %29 : vector<12x48xf32>
    %31 = vector.broadcast %2 : vector<1x48xf32> to vector<12x48xf32>
    %32 = arith.mulf %30, %31 : vector<12x48xf32>
    %33 = vector.broadcast %3 : vector<1x48xf32> to vector<12x48xf32>
    %34 = arith.addf %32, %33 : vector<12x48xf32>
    %35 = vector.shape_cast %34 : vector<12x48xf32> to vector<1x12x48xf32>
    %36 = vector.shape_cast %35 : vector<1x12x48xf32> to vector<1x12x48xf32>
    %37 = vector.broadcast %36 : vector<1x12x48xf32> to vector<2x12x48xf32>
    "tpu.trace_start"() <{level = 10 : i32, message = "hnd,hde->hne"}> : () -> ()
    %cst_36 = arith.constant dense<0.000000e+00> : vector<2x12x16xf32>
    %38 = tpu.matmul %37, %4, %cst_36 {dimension_numbers = #tpu.dot_dimension_numbers<[2], [1], [1], [2], [0, 0, 0, 1, 1, 2], [0], [0]>} : vector<2x12x48xf32>, vector<2x48x16xf32>, vector<2x12x16xf32> -> vector<2x12x16xf32>
    %cst_37 = arith.constant dense<0.000000e+00> : vector<2x12x16xf32>
    %39 = tpu.matmul %37, %5, %cst_37 {dimension_numbers = #tpu.dot_dimension_numbers<[2], [1], [1], [2], [0, 0, 0, 1, 1, 2], [0], [0]>} : vector<2x12x48xf32>, vector<2x48x16xf32>, vector<2x12x16xf32> -> vector<2x12x16xf32>
    %cst_38 = arith.constant dense<0.000000e+00> : vector<2x12x16xf32>
    %40 = tpu.matmul %37, %6, %cst_38 {dimension_numbers = #tpu.dot_dimension_numbers<[2], [1], [1], [2], [0, 0, 0, 1, 1, 2], [0], [0]>} : vector<2x12x48xf32>, vector<2x48x16xf32>, vector<2x12x16xf32> -> vector<2x12x16xf32>
    "tpu.trace_stop"() : () -> ()
    "tpu.trace_start"() <{level = 10 : i32, message = "hne,hme->hnm"}> : () -> ()
    %cst_39 = arith.constant dense<0.000000e+00> : vector<2x12x12xf32>
    %41 = tpu.matmul %38, %39, %cst_39 {dimension_numbers = #tpu.dot_dimension_numbers<[2], [2], [1], [1], [0, 0, 0, 1, 1, 1], [0], [0]>} : vector<2x12x16xf32>, vector<2x12x16xf32>, vector<2x12x12xf32> -> vector<2x12x12xf32>
    "tpu.trace_stop"() : () -> ()
    %cst_40 = arith.constant 2.500000e-01 : f32
    %42 = vector.broadcast %cst_40 : f32 to vector<2x12x12xf32>
    %43 = arith.mulf %41, %42 : vector<2x12x12xf32>
    %cst_41 = arith.constant dense<0xFF800000> : vector<2x12xf32>
    %44 = vector.multi_reduction <maximumf>, %43, %cst_41 [2] : vector<2x12x12xf32> to vector<2x12xf32>
    %45 = vector.shape_cast %44 : vector<2x12xf32> to vector<2x12x1xf32>
    %46 = vector.broadcast %45 : vector<2x12x1xf32> to vector<2x12x12xf32>
    %47 = arith.subf %43, %46 : vector<2x12x12xf32>
    %48 = math.exp %47 : vector<2x12x12xf32>
    %cst_42 = arith.constant dense<0.000000e+00> : vector<2x12xf32>
    %49 = vector.multi_reduction <add>, %48, %cst_42 [2] : vector<2x12x12xf32> to vector<2x12xf32>
    %50 = vector.shape_cast %49 : vector<2x12xf32> to vector<2x12x1xf32>
    %51 = vector.broadcast %50 : vector<2x12x1xf32> to vector<2x12x12xf32>
    %52 = arith.divf %48, %51 : vector<2x12x12xf32>
    "tpu.trace_start"() <{level = 10 : i32, message = "hnm,hme->hne"}> : () -> ()
    %cst_43 = arith.constant dense<0.000000e+00> : vector<2x12x16xf32>
    %53 = tpu.matmul %52, %40, %cst_43 {dimension_numbers = #tpu.dot_dimension_numbers<[2], [1], [1], [2], [0, 0, 0, 1, 1, 2], [0], [0]>} : vector<2x12x12xf32>, vector<2x12x16xf32>, vector<2x12x16xf32> -> vector<2x12x16xf32>
    "tpu.trace_stop"() : () -> ()
    "tpu.trace_start"() <{level = 10 : i32, message = "hne,hed->hnd"}> : () -> ()
    %cst_44 = arith.constant dense<0.000000e+00> : vector<2x12x48xf32>
    %54 = tpu.matmul %53, %7, %cst_44 {dimension_numbers = #tpu.dot_dimension_numbers<[2], [1], [1], [2], [0, 0, 0, 1, 1, 2], [0], [0]>} : vector<2x12x16xf32>, vector<2x16x48xf32>, vector<2x12x48xf32> -> vector<2x12x48xf32>
    "tpu.trace_stop"() : () -> ()
    %55 = vector.extract_strided_slice %54 {offsets = [0, 0, 0], sizes = [1, 12, 48], strides = [1, 1, 1]} : vector<2x12x48xf32> to vector<1x12x48xf32>
    %56 = vector.shape_cast %55 : vector<1x12x48xf32> to vector<12x48xf32>
    %57 = vector.broadcast %8 : vector<1x48xf32> to vector<12x48xf32>
    %58 = arith.addf %57, %56 : vector<12x48xf32>
    %59 = vector.extract_strided_slice %54 {offsets = [1, 0, 0], sizes = [1, 12, 48], strides = [1, 1, 1]} : vector<2x12x48xf32> to vector<1x12x48xf32>
    %60 = vector.shape_cast %59 : vector<1x12x48xf32> to vector<12x48xf32>
    %61 = arith.addf %58, %60 : vector<12x48xf32>
    %62 = arith.addf %1, %61 : vector<12x48xf32>
    %cst_45 = arith.constant dense<0.000000e+00> : vector<12xf32>
    %63 = vector.multi_reduction <add>, %62, %cst_45 [1] : vector<12x48xf32> to vector<12xf32>
    %64 = vector.shape_cast %63 : vector<12xf32> to vector<12x1xf32>
    %cst_46 = arith.constant 4.800000e+01 : f32
    %65 = vector.broadcast %cst_46 : f32 to vector<12x1xf32>
    %66 = arith.divf %64, %65 : vector<12x1xf32>
    %67 = vector.broadcast %66 : vector<12x1xf32> to vector<12x48xf32>
    %68 = arith.subf %62, %67 : vector<12x48xf32>
    %69 = arith.mulf %68, %68 : vector<12x48xf32>
    %cst_47 = arith.constant dense<0.000000e+00> : vector<12xf32>
    %70 = vector.multi_reduction <add>, %69, %cst_47 [1] : vector<12x48xf32> to vector<12xf32>
    %71 = vector.shape_cast %70 : vector<12xf32> to vector<12x1xf32>
    %cst_48 = arith.constant 4.800000e+01 : f32
    %72 = vector.broadcast %cst_48 : f32 to vector<12x1xf32>
    %73 = arith.divf %71, %72 : vector<12x1xf32>
    %cst_49 = arith.constant 9.99999974E-6 : f32
    %74 = vector.broadcast %cst_49 : f32 to vector<12x1xf32>
    %75 = arith.addf %73, %74 : vector<12x1xf32>
    %76 = math.rsqrt %75 : vector<12x1xf32>
    %77 = vector.broadcast %76 : vector<12x1xf32> to vector<12x48xf32>
    %78 = arith.mulf %68, %77 : vector<12x48xf32>
    %79 = vector.broadcast %9 : vector<1x48xf32> to vector<12x48xf32>
    %80 = arith.mulf %78, %79 : vector<12x48xf32>
    %81 = vector.broadcast %10 : vector<1x48xf32> to vector<12x48xf32>
    %82 = arith.addf %80, %81 : vector<12x48xf32>
    %cst_50 = arith.constant dense<0.000000e+00> : vector<12x192xf32>
    %83 = tpu.matmul %82, %11, %cst_50 {dimension_numbers = #tpu.dot_dimension_numbers<[1], [0], [0], [1], [0, 0, 1, 1], [], []>} : vector<12x48xf32>, vector<48x192xf32>, vector<12x192xf32> -> vector<12x192xf32>
    %84 = vector.broadcast %12 : vector<1x192xf32> to vector<12x192xf32>
    %85 = arith.addf %83, %84 : vector<12x192xf32>
    %cst_51 = arith.constant 5.000000e-01 : f32
    %86 = vector.broadcast %cst_51 : f32 to vector<12x192xf32>
    %87 = arith.mulf %86, %85 : vector<12x192xf32>
    %cst_52 = arith.constant 0.707106769 : f32
    %88 = vector.broadcast %cst_52 : f32 to vector<12x192xf32>
    %89 = arith.mulf %85, %88 : vector<12x192xf32>
    %90 = math.absf %89 : vector<12x192xf32>
    %cst_53 = arith.constant 0.327591091 : f32
    %91 = vector.broadcast %cst_53 : f32 to vector<12x192xf32>
    %92 = arith.mulf %91, %90 : vector<12x192xf32>
    %cst_54 = arith.constant 1.000000e+00 : f32
    %93 = vector.broadcast %cst_54 : f32 to vector<12x192xf32>
    %94 = arith.addf %93, %92 : vector<12x192xf32>
    %cst_55 = arith.constant 1.000000e+00 : f32
    %95 = vector.broadcast %cst_55 : f32 to vector<12x192xf32>
    %96 = arith.divf %95, %94 : vector<12x192xf32>
    %cst_56 = arith.constant 1.06140542 : f32
    %97 = vector.broadcast %cst_56 : f32 to vector<12x192xf32>
    %98 = arith.mulf %97, %96 : vector<12x192xf32>
    %cst_57 = arith.constant -1.45315206 : f32
    %99 = vector.broadcast %cst_57 : f32 to vector<12x192xf32>
    %100 = arith.addf %98, %99 : vector<12x192xf32>
    %101 = arith.mulf %100, %96 : vector<12x192xf32>
    %cst_58 = arith.constant 1.42141378 : f32
    %102 = vector.broadcast %cst_58 : f32 to vector<12x192xf32>
    %103 = arith.addf %101, %102 : vector<12x192xf32>
    %104 = arith.mulf %103, %96 : vector<12x192xf32>
    %cst_59 = arith.constant -0.284496725 : f32
    %105 = vector.broadcast %cst_59 : f32 to vector<12x192xf32>
    %106 = arith.addf %104, %105 : vector<12x192xf32>
    %107 = arith.mulf %106, %96 : vector<12x192xf32>
    %cst_60 = arith.constant 0.254829586 : f32
    %108 = vector.broadcast %cst_60 : f32 to vector<12x192xf32>
    %109 = arith.addf %107, %108 : vector<12x192xf32>
    %110 = arith.mulf %109, %96 : vector<12x192xf32>
    %cst_61 = arith.constant 0.000000e+00 : f32
    %111 = vector.broadcast %cst_61 : f32 to vector<12x192xf32>
    %112 = arith.subf %111, %90 : vector<12x192xf32>
    %113 = arith.mulf %112, %90 : vector<12x192xf32>
    %114 = math.exp %113 : vector<12x192xf32>
    %115 = arith.mulf %110, %114 : vector<12x192xf32>
    %cst_62 = arith.constant 1.000000e+00 : f32
    %116 = vector.broadcast %cst_62 : f32 to vector<12x192xf32>
    %117 = arith.subf %116, %115 : vector<12x192xf32>
    %cst_63 = arith.constant 0.000000e+00 : f32
    %118 = vector.broadcast %cst_63 : f32 to vector<12x192xf32>
    %119 = arith.cmpf oge, %89, %118 : vector<12x192xf32>
    %cst_64 = arith.constant 0.000000e+00 : f32
    %120 = vector.broadcast %cst_64 : f32 to vector<12x192xf32>
    %121 = arith.subf %120, %117 : vector<12x192xf32>
    %122 = arith.select %119, %117, %121 : vector<12x192xi1>, vector<12x192xf32>
    %cst_65 = arith.constant 1.000000e+00 : f32
    %123 = vector.broadcast %cst_65 : f32 to vector<12x192xf32>
    %124 = arith.addf %123, %122 : vector<12x192xf32>
    %125 = arith.mulf %87, %124 : vector<12x192xf32>
    %cst_66 = arith.constant dense<0.000000e+00> : vector<12x48xf32>
    %126 = tpu.matmul %125, %13, %cst_66 {dimension_numbers = #tpu.dot_dimension_numbers<[1], [0], [0], [1], [0, 0, 1, 1], [], []>} : vector<12x192xf32>, vector<192x48xf32>, vector<12x48xf32> -> vector<12x48xf32>
    %127 = arith.addf %62, %126 : vector<12x48xf32>
    %128 = vector.broadcast %14 : vector<1x48xf32> to vector<12x48xf32>
    %129 = arith.addf %127, %128 : vector<12x48xf32>
    %c0_67 = arith.constant 0 : index
    %c0_68 = arith.constant 0 : index
    %130 = vector.load %arg15[%c0_67, %c0_68] : memref<1x48xf32, #tpu.memory_space<vmem>>, vector<1x48xf32>
    %c0_69 = arith.constant 0 : index
    %c0_70 = arith.constant 0 : index
    %131 = vector.load %arg16[%c0_69, %c0_70] : memref<1x48xf32, #tpu.memory_space<vmem>>, vector<1x48xf32>
    %cst_71 = arith.constant dense<0.000000e+00> : vector<12xf32>
    %132 = vector.multi_reduction <add>, %129, %cst_71 [1] : vector<12x48xf32> to vector<12xf32>
    %133 = vector.shape_cast %132 : vector<12xf32> to vector<12x1xf32>
    %cst_72 = arith.constant 4.800000e+01 : f32
    %134 = vector.broadcast %cst_72 : f32 to vector<12x1xf32>
    %135 = arith.divf %133, %134 : vector<12x1xf32>
    %136 = vector.broadcast %135 : vector<12x1xf32> to vector<12x48xf32>
    %137 = arith.subf %129, %136 : vector<12x48xf32>
    %138 = arith.mulf %137, %137 : vector<12x48xf32>
    %cst_73 = arith.constant dense<0.000000e+00> : vector<12xf32>
    %139 = vector.multi_reduction <add>, %138, %cst_73 [1] : vector<12x48xf32> to vector<12xf32>
    %140 = vector.shape_cast %139 : vector<12xf32> to vector<12x1xf32>
    %cst_74 = arith.constant 4.800000e+01 : f32
    %141 = vector.broadcast %cst_74 : f32 to vector<12x1xf32>
    %142 = arith.divf %140, %141 : vector<12x1xf32>
    %cst_75 = arith.constant 9.99999974E-6 : f32
    %143 = vector.broadcast %cst_75 : f32 to vector<12x1xf32>
    %144 = arith.addf %142, %143 : vector<12x1xf32>
    %145 = math.rsqrt %144 : vector<12x1xf32>
    %146 = vector.broadcast %145 : vector<12x1xf32> to vector<12x48xf32>
    %147 = arith.mulf %137, %146 : vector<12x48xf32>
    %148 = vector.broadcast %130 : vector<1x48xf32> to vector<12x48xf32>
    %149 = arith.mulf %147, %148 : vector<12x48xf32>
    %150 = vector.broadcast %131 : vector<1x48xf32> to vector<12x48xf32>
    %151 = arith.addf %149, %150 : vector<12x48xf32>
    %c0_76 = arith.constant 0 : index
    %c0_77 = arith.constant 0 : index
    %c0_78 = arith.constant 0 : index
    %152 = vector.load %arg17[%c0_76, %c0_77, %c0_78] : memref<1x12x48xf32, #tpu.memory_space<vmem>>, vector<1x12x48xf32>
    %153 = vector.shape_cast %152 : vector<1x12x48xf32> to vector<12x48xf32>
    %154 = vector.shape_cast %151 : vector<12x48xf32> to vector<1x12x48xf32>
    tpu.vector_store %arg17[%c0_76, %c0_77, %c0_78], %154 {strides = array<i32>} : memref<1x12x48xf32, #tpu.memory_space<vmem>>, vector<1x12x48xf32>,
    return
  }
  func.func @transform_0(%arg0: i32) -> (i32, i32, i32) {
    %c0_i32 = arith.constant 0 : i32
    %c0_i32_0 = arith.constant 0 : i32
    %c0_i32_1 = arith.constant 0 : i32
    return %arg0, %c0_i32, %c0_i32_0 : i32, i32, i32
  }
  func.func @transform_1(%arg0: i32) -> (i32, i32) {
    %c0_i32 = arith.constant 0 : i32
    %c0_i32_0 = arith.constant 0 : i32
    %c0_i32_1 = arith.constant 0 : i32
    return %c0_i32, %c0_i32_0 : i32, i32
  }
  func.func @transform_2(%arg0: i32) -> (i32, i32) {
    %c0_i32 = arith.constant 0 : i32
    %c0_i32_0 = arith.constant 0 : i32
    %c0_i32_1 = arith.constant 0 : i32
    return %c0_i32, %c0_i32_0 : i32, i32
  }
  func.func @transform_3(%arg0: i32) -> (i32, i32, i32) {
    %c0_i32 = arith.constant 0 : i32
    %c0_i32_0 = arith.constant 0 : i32
    %c0_i32_1 = arith.constant 0 : i32
    %c0_i32_2 = arith.constant 0 : i32
    return %c0_i32, %c0_i32_0, %c0_i32_1 : i32, i32, i32
  }
  func.func @transform_4(%arg0: i32) -> (i32, i32, i32) {
    %c0_i32 = arith.constant 0 : i32
    %c0_i32_0 = arith.constant 0 : i32
    %c0_i32_1 = arith.constant 0 : i32
    %c0_i32_2 = arith.constant 0 : i32
    return %c0_i32, %c0_i32_0, %c0_i32_1 : i32, i32, i32
  }
  func.func @transform_5(%arg0: i32) -> (i32, i32, i32) {
    %c0_i32 = arith.constant 0 : i32
    %c0_i32_0 = arith.constant 0 : i32
    %c0_i32_1 = arith.constant 0 : i32
    %c0_i32_2 = arith.constant 0 : i32
    return %c0_i32, %c0_i32_0, %c0_i32_1 : i32, i32, i32
  }
  func.func @transform_6(%arg0: i32) -> (i32, i32, i32) {
    %c0_i32 = arith.constant 0 : i32
    %c0_i32_0 = arith.constant 0 : i32
    %c0_i32_1 = arith.constant 0 : i32
    %c0_i32_2 = arith.constant 0 : i32
    return %c0_i32, %c0_i32_0, %c0_i32_1 : i32, i32, i32
  }
  func.func @transform_7(%arg0: i32) -> (i32, i32) {
    %c0_i32 = arith.constant 0 : i32
    %c0_i32_0 = arith.constant 0 : i32
    %c0_i32_1 = arith.constant 0 : i32
    return %c0_i32, %c0_i32_0 : i32, i32
  }
  func.func @transform_8(%arg0: i32) -> (i32, i32) {
    %c0_i32 = arith.constant 0 : i32
    %c0_i32_0 = arith.constant 0 : i32
    %c0_i32_1 = arith.constant 0 : i32
    return %c0_i32, %c0_i32_0 : i32, i32
  }
  func.func @transform_9(%arg0: i32) -> (i32, i32) {
    %c0_i32 = arith.constant 0 : i32
    %c0_i32_0 = arith.constant 0 : i32
    %c0_i32_1 = arith.constant 0 : i32
    return %c0_i32, %c0_i32_0 : i32, i32
  }
  func.func @transform_10(%arg0: i32) -> (i32, i32) {
    %c0_i32 = arith.constant 0 : i32
    %c0_i32_0 = arith.constant 0 : i32
    %c0_i32_1 = arith.constant 0 : i32
    return %c0_i32, %c0_i32_0 : i32, i32
  }
  func.func @transform_11(%arg0: i32) -> (i32, i32) {
    %c0_i32 = arith.constant 0 : i32
    %c0_i32_0 = arith.constant 0 : i32
    %c0_i32_1 = arith.constant 0 : i32
    return %c0_i32, %c0_i32_0 : i32, i32
  }
  func.func @transform_12(%arg0: i32) -> (i32, i32) {
    %c0_i32 = arith.constant 0 : i32
    %c0_i32_0 = arith.constant 0 : i32
    %c0_i32_1 = arith.constant 0 : i32
    return %c0_i32, %c0_i32_0 : i32, i32
  }
  func.func @transform_13(%arg0: i32) -> (i32, i32) {
    %c0_i32 = arith.constant 0 : i32
    %c0_i32_0 = arith.constant 0 : i32
    %c0_i32_1 = arith.constant 0 : i32
    return %c0_i32, %c0_i32_0 : i32, i32
  }
  func.func @transform_14(%arg0: i32) -> (i32, i32) {
    %c0_i32 = arith.constant 0 : i32
    %c0_i32_0 = arith.constant 0 : i32
    %c0_i32_1 = arith.constant 0 : i32
    return %c0_i32, %c0_i32_0 : i32, i32
  }
  func.func @transform_15(%arg0: i32) -> (i32, i32) {
    %c0_i32 = arith.constant 0 : i32
    %c0_i32_0 = arith.constant 0 : i32
    %c0_i32_1 = arith.constant 0 : i32
    return %c0_i32, %c0_i32_0 : i32, i32
  }
  func.func @transform_16(%arg0: i32) -> (i32, i32, i32) {
    %c0_i32 = arith.constant 0 : i32
    %c0_i32_0 = arith.constant 0 : i32
    %c0_i32_1 = arith.constant 0 : i32
    return %arg0, %c0_i32, %c0_i32_0 : i32, i32, i32
  }
}

module attributes {stable_mosaic.version = 11 : i64} {
  func.func @_pixels_mse_kernel(%arg0: i32, %arg1: memref<1x9x48xf32, #tpu.memory_space<vmem>>, %arg2: memref<48x64xf32, #tpu.memory_space<vmem>>, %arg3: memref<1x64xf32, #tpu.memory_space<vmem>>, %arg4: memref<1x9x64xf32, #tpu.memory_space<vmem>>, %arg5: memref<1x9x64xf32, #tpu.memory_space<vmem>>, %arg6: memref<1x1x1xf32, #tpu.memory_space<vmem>>) attributes {dimension_semantics = [#tpu.dimension_semantics<parallel>], iteration_bounds = array<i64: 2>, scalar_prefetch = 0 : i64, scratch_operands = 0 : i64, tpu.core_type = #tpu.core_type<tc>, window_params = [{transform_indices = @transform_0, window_bounds = array<i64: 1, 9, 48>}, {pipeline_mode = #tpu.pipeline_mode<synchronous>, transform_indices = @transform_1, window_bounds = array<i64: 48, 64>}, {pipeline_mode = #tpu.pipeline_mode<synchronous>, transform_indices = @transform_2, window_bounds = array<i64: 1, 64>}, {transform_indices = @transform_3, window_bounds = array<i64: 1, 9, 64>}, {transform_indices = @transform_4, window_bounds = array<i64: 1, 9, 64>}, {transform_indices = @transform_5, window_bounds = array<i64: 1, 1, 1>}]} {
    %c0 = arith.constant 0 : index
    %c0_0 = arith.constant 0 : index
    %c0_1 = arith.constant 0 : index
    %0 = vector.load %arg1[%c0, %c0_0, %c0_1] : memref<1x9x48xf32, #tpu.memory_space<vmem>>, vector<1x9x48xf32>
    %1 = vector.shape_cast %0 : vector<1x9x48xf32> to vector<9x48xf32>
    %c0_2 = arith.constant 0 : index
    %c0_3 = arith.constant 0 : index
    %2 = vector.load %arg2[%c0_2, %c0_3] : memref<48x64xf32, #tpu.memory_space<vmem>>, vector<48x64xf32>
    %cst = arith.constant dense<0.000000e+00> : vector<9x64xf32>
    %3 = tpu.matmul %1, %2, %cst {dimension_numbers = #tpu.dot_dimension_numbers<[1], [0], [0], [1], [0, 0, 1, 1], [], []>} : vector<9x48xf32>, vector<48x64xf32>, vector<9x64xf32> -> vector<9x64xf32>
    %c0_4 = arith.constant 0 : index
    %c0_5 = arith.constant 0 : index
    %4 = vector.load %arg3[%c0_4, %c0_5] : memref<1x64xf32, #tpu.memory_space<vmem>>, vector<1x64xf32>
    %5 = vector.broadcast %4 : vector<1x64xf32> to vector<9x64xf32>
    %6 = arith.addf %3, %5 : vector<9x64xf32>
    %c0_6 = arith.constant 0 : index
    %c0_7 = arith.constant 0 : index
    %c0_8 = arith.constant 0 : index
    %7 = vector.load %arg5[%c0_6, %c0_7, %c0_8] : memref<1x9x64xf32, #tpu.memory_space<vmem>>, vector<1x9x64xf32>
    %8 = vector.shape_cast %7 : vector<1x9x64xf32> to vector<9x64xf32>
    %9 = vector.shape_cast %6 : vector<9x64xf32> to vector<1x9x64xf32>
    tpu.vector_store %arg5[%c0_6, %c0_7, %c0_8], %9 {strides = array<i32>} : memref<1x9x64xf32, #tpu.memory_space<vmem>>, vector<1x9x64xf32>,
    %c0_9 = arith.constant 0 : index
    %c0_10 = arith.constant 0 : index
    %c0_11 = arith.constant 0 : index
    %10 = vector.load %arg4[%c0_9, %c0_10, %c0_11] : memref<1x9x64xf32, #tpu.memory_space<vmem>>, vector<1x9x64xf32>
    %11 = vector.shape_cast %10 : vector<1x9x64xf32> to vector<9x64xf32>
    %12 = arith.subf %6, %11 : vector<9x64xf32>
    %13 = arith.mulf %12, %12 : vector<9x64xf32>
    %cst_12 = arith.constant dense<0.000000e+00> : vector<9xf32>
    %14 = vector.multi_reduction <add>, %13, %cst_12 [1] : vector<9x64xf32> to vector<9xf32>
    %15 = vector.shape_cast %14 : vector<9xf32> to vector<9x1xf32>
    %cst_13 = arith.constant dense<0.000000e+00> : vector<1xf32>
    %16 = vector.multi_reduction <add>, %15, %cst_13 [0] : vector<9x1xf32> to vector<1xf32>
    %17 = vector.shape_cast %16 : vector<1xf32> to vector<1x1xf32>
    %c0_14 = arith.constant 0 : index
    %c0_15 = arith.constant 0 : index
    %c0_16 = arith.constant 0 : index
    %18 = vector.load %arg6[%c0_14, %c0_15, %c0_16] : memref<1x1x1xf32, #tpu.memory_space<vmem>>, vector<1x1x1xf32>
    %19 = vector.shape_cast %18 : vector<1x1x1xf32> to vector<1x1xf32>
    %20 = vector.shape_cast %17 : vector<1x1xf32> to vector<1x1x1xf32>
    tpu.vector_store %arg6[%c0_14, %c0_15, %c0_16], %20 {strides = array<i32>} : memref<1x1x1xf32, #tpu.memory_space<vmem>>, vector<1x1x1xf32>,
    return
  }
  func.func @transform_0(%arg0: i32) -> (i32, i32, i32) {
    %c0_i32 = arith.constant 0 : i32
    %c0_i32_0 = arith.constant 0 : i32
    %c0_i32_1 = arith.constant 0 : i32
    return %arg0, %c0_i32, %c0_i32_0 : i32, i32, i32
  }
  func.func @transform_1(%arg0: i32) -> (i32, i32) {
    %c0_i32 = arith.constant 0 : i32
    %c0_i32_0 = arith.constant 0 : i32
    %c0_i32_1 = arith.constant 0 : i32
    return %c0_i32, %c0_i32_0 : i32, i32
  }
  func.func @transform_2(%arg0: i32) -> (i32, i32) {
    %c0_i32 = arith.constant 0 : i32
    %c0_i32_0 = arith.constant 0 : i32
    %c0_i32_1 = arith.constant 0 : i32
    return %c0_i32, %c0_i32_0 : i32, i32
  }
  func.func @transform_3(%arg0: i32) -> (i32, i32, i32) {
    %c0_i32 = arith.constant 0 : i32
    %c0_i32_0 = arith.constant 0 : i32
    %c0_i32_1 = arith.constant 0 : i32
    return %arg0, %c0_i32, %c0_i32_0 : i32, i32, i32
  }
  func.func @transform_4(%arg0: i32) -> (i32, i32, i32) {
    %c0_i32 = arith.constant 0 : i32
    %c0_i32_0 = arith.constant 0 : i32
    %c0_i32_1 = arith.constant 0 : i32
    return %arg0, %c0_i32, %c0_i32_0 : i32, i32, i32
  }
  func.func @transform_5(%arg0: i32) -> (i32, i32, i32) {
    %c0_i32 = arith.constant 0 : i32
    %c0_i32_0 = arith.constant 0 : i32
    %c0_i32_1 = arith.constant 0 : i32
    return %arg0, %c0_i32, %c0_i32_0 : i32, i32, i32
  }
}

</mosaic_0001>

<llo_original>
// kernel: multispectral_mae_forward.4
$region0: #{multispectral_mae_forward.4}
  #allocation0 [shape = 'u32[]', space=smem, size = 0x4, offset = 0x4, fixed_abs, tag = 'smem constant byte address 0x4 - core index']
  #allocation1 [shape = 'u32[144,128]{1,0:T(1,128)}', space=vmem, size = 0x12000, scoped, tag = 'internal scratch']
  %s0 = inlined_call_operand.vmem [shape: f32[2,12,64], index: 0, kind: input, shape index: {}]
  %s1 = inlined_call_operand.vmem [shape: f32[1,64], index: 1, kind: input, shape index: {}]
  %s2 = inlined_call_operand.vmem [shape: f32[1,64], index: 2, kind: input, shape index: {}]
  %s3 = inlined_call_operand.vmem [shape: f32[64,32], index: 3, kind: input, shape index: {}]
  %s4 = inlined_call_operand.vmem [shape: f32[1,32], index: 4, kind: input, shape index: {}]
  %s5 = inlined_call_operand.vmem [shape: f32[1,32], index: 5, kind: input, shape index: {}]
  %s6 = inlined_call_operand.vmem [shape: f32[1,32], index: 6, kind: input, shape index: {}]
  %s7 = inlined_call_operand.vmem [shape: f32[12,32], index: 7, kind: input, shape index: {}]
  %s8 = inlined_call_operand.vmem [shape: f32[2,12,32], index: 8, kind: output, shape index: {}]
  %s9 = sld [smem:[#allocation0]]
  $region65: #{multispectral_mae_forward.4} parent=0
    _
  %s11 = ssub.s32 1, %s9
  %s12 = scalar_select 0, %s11, %s9
  loop: start=0, step=1, limit=4
  $region2: #{multispectral_mae_forward.4} parent=0 // loop_pre_header
    _
  $region3: #{multispectral_mae_forward.4} parent=0 // loop_header
    %s14 = sphi 0, %s18
    %p15 = scmp.ge.s32.totalorder %s14, 4
    %s24 = sphi 0, %s26
    %s27 = sphi 0, %s24
    %s28 = sphi 0, %s27
    %s44 = sphi 0, %s28
    %s48 = sphi 0, %s48
    %s50 = sphi 0, %s48
    %s51 = sphi 0, %s50
    %s65 = sphi 0, %s51
    %s69 = sphi 0, %s69
    %s71 = sphi 0, %s69
    %s72 = sphi 0, %s71
    %s86 = sphi 0, %s72
    %s90 = sphi 0, %s90
    %s92 = sphi 0, %s90
    %s93 = sphi 0, %s92
    %s107 = sphi 0, %s93
    %s111 = sphi 0, %s111
    %s113 = sphi 0, %s111
    %s114 = sphi 0, %s113
    %s128 = sphi 0, %s114
    %s132 = sphi 0, %s132
    %s134 = sphi 0, %s132
    %s135 = sphi 0, %s134
    %s149 = sphi 0, %s135
    %s153 = sphi 0, %s153
    %s155 = sphi 0, %s153
    %s156 = sphi 0, %s155
    %s170 = sphi 0, %s156
    %s174 = sphi 0, %s174
    %s176 = sphi 0, %s174
    %s177 = sphi 0, %s176
    %s191 = sphi 0, %s177
    %s197 = sphi 0, %s199
    %s200 = sphi 0, %s197
    %s201 = sphi 0, %s200
    %s217 = sphi 0, %s201
  $region4: #{multispectral_mae_forward.4} parent=0 // loop_header_branch
    %17 = sbr.rel (%p15) target = $region8
  $region5: #{multispectral_mae_forward.4} parent=0 // loop_body
    %s19 = ssub.s32 %s14, 1
    %s20 = ssub.s32 %s14, 2
    %s21 = sadd.s32 %s14, 1
    %s22 = ssub.s32 %s14, %s21
    %p23 = scmp.eq.s32.totalorder %s22, 0
    %s25 = sadd.s32 %s24, 1
    %s26 = scalar_select %p23, %s24, %s25
    %p29 = pneg %p23
    %p30 = scmp.eq.s32.totalorder %s14, 1
    %p31 = por %p29, %p30
    %p32 = scmp.ne.s32.totalorder %s24, %s27
    %p33 = scmp.eq.s32.totalorder %s14, 0
    %p34 = por %p32, %p33
    %p35 = scmp.ne.s32.totalorder %s24, %s27
    %p36 = scmp.eq.s32.totalorder %s19, 1
    %p37 = por %p35, %p36
    %p38 = scmp.ne.s32.totalorder %s27, %s28
    %p39 = scmp.eq.s32.totalorder %s19, 0
    %p40 = por %p38, %p39
    %p41 = scmp.ne.s32.totalorder %s27, %s28
    %p42 = scmp.eq.s32.totalorder %s20, 1
    %p43 = por %p41, %p42
    %p45 = scmp.ne.s32.totalorder %s28, %s44
    %p46 = scmp.eq.s32.totalorder %s20, 0
    %p47 = por %p45, %p46
    %s49 = sadd.s32 %s48, 1
    %p52 = scmp.eq.s32.totalorder %s14, 1
    %p53 = scmp.ne.s32.totalorder %s48, %s50
    %p54 = scmp.eq.s32.totalorder %s14, 0
    %p55 = por %p53, %p54
    %p56 = scmp.ne.s32.totalorder %s48, %s50
    %p57 = scmp.eq.s32.totalorder %s19, 1
    %p58 = por %p56, %p57
    %p59 = scmp.ne.s32.totalorder %s50, %s51
    %p60 = scmp.eq.s32.totalorder %s19, 0
    %p61 = por %p59, %p60
    %p62 = scmp.ne.s32.totalorder %s50, %s51
    %p63 = scmp.eq.s32.totalorder %s20, 1
    %p64 = por %p62, %p63
    %p66 = scmp.ne.s32.totalorder %s51, %s65
    %p67 = scmp.eq.s32.totalorder %s20, 0
    %p68 = por %p66, %p67
    %s70 = sadd.s32 %s69, 1
    %p73 = scmp.eq.s32.totalorder %s14, 1
    %p74 = scmp.ne.s32.totalorder %s69, %s71
    %p75 = scmp.eq.s32.totalorder %s14, 0
    %p76 = por %p74, %p75
    %p77 = scmp.ne.s32.totalorder %s69, %s71
    %p78 = scmp.eq.s32.totalorder %s19, 1
    %p79 = por %p77, %p78
    %p80 = scmp.ne.s32.totalorder %s71, %s72
    %p81 = scmp.eq.s32.totalorder %s19, 0
    %p82 = por %p80, %p81
    %p83 = scmp.ne.s32.totalorder %s71, %s72
    %p84 = scmp.eq.s32.totalorder %s20, 1
    %p85 = por %p83, %p84
    %p87 = scmp.ne.s32.totalorder %s72, %s86
    %p88 = scmp.eq.s32.totalorder %s20, 0
    %p89 = por %p87, %p88
    %s91 = sadd.s32 %s90, 1
    %p94 = scmp.eq.s32.totalorder %s14, 1
    %p95 = scmp.ne.s32.totalorder %s90, %s92
    %p96 = scmp.eq.s32.totalorder %s14, 0
    %p97 = por %p95, %p96
    %p98 = scmp.ne.s32.totalorder %s90, %s92
    %p99 = scmp.eq.s32.totalorder %s19, 1
    %p100 = por %p98, %p99
    %p101 = scmp.ne.s32.totalorder %s92, %s93
    %p102 = scmp.eq.s32.totalorder %s19, 0
    %p103 = por %p101, %p102
    %p104 = scmp.ne.s32.totalorder %s92, %s93
    %p105 = scmp.eq.s32.totalorder %s20, 1
    %p106 = por %p104, %p105
    %p108 = scmp.ne.s32.totalorder %s93, %s107
    %p109 = scmp.eq.s32.totalorder %s20, 0
    %p110 = por %p108, %p109
    %s112 = sadd.s32 %s111, 1
    %p115 = scmp.eq.s32.totalorder %s14, 1
    %p116 = scmp.ne.s32.totalorder %s111, %s113
    %p117 = scmp.eq.s32.totalorder %s14, 0
    %p118 = por %p116, %p117
    %p119 = scmp.ne.s32.totalorder %s111, %s113
    %p120 = scmp.eq.s32.totalorder %s19, 1
    %p121 = por %p119, %p120
    %p122 = scmp.ne.s32.totalorder %s113, %s114
    %p123 = scmp.eq.s32.totalorder %s19, 0
    %p124 = por %p122, %p123
    %p125 = scmp.ne.s32.totalorder %s113, %s114
    %p126 = scmp.eq.s32.totalorder %s20, 1
    %p127 = por %p125, %p126
    %p129 = scmp.ne.s32.totalorder %s114, %s128
    %p130 = scmp.eq.s32.totalorder %s20, 0
    %p131 = por %p129, %p130
    %s133 = sadd.s32 %s132, 1
    %p136 = scmp.eq.s32.totalorder %s14, 1
    %p137 = scmp.ne.s32.totalorder %s132, %s134
    %p138 = scmp.eq.s32.totalorder %s14, 0
    %p139 = por %p137, %p138
    %p140 = scmp.ne.s32.totalorder %s132, %s134
    %p141 = scmp.eq.s32.totalorder %s19, 1
    %p142 = por %p140, %p141
    %p143 = scmp.ne.s32.totalorder %s134, %s135
    %p144 = scmp.eq.s32.totalorder %s19, 0
    %p145 = por %p143, %p144
    %p146 = scmp.ne.s32.totalorder %s134, %s135
    %p147 = scmp.eq.s32.totalorder %s20, 1
    %p148 = por %p146, %p147
    %p150 = scmp.ne.s32.totalorder %s135, %s149
    %p151 = scmp.eq.s32.totalorder %s20, 0
    %p152 = por %p150, %p151
    %s154 = sadd.s32 %s153, 1
    %p157 = scmp.eq.s32.totalorder %s14, 1
    %p158 = scmp.ne.s32.totalorder %s153, %s155
    %p159 = scmp.eq.s32.totalorder %s14, 0
    %p160 = por %p158, %p159
    %p161 = scmp.ne.s32.totalorder %s153, %s155
    %p162 = scmp.eq.s32.totalorder %s19, 1
    %p163 = por %p161, %p162
    %p164 = scmp.ne.s32.totalorder %s155, %s156
    %p165 = scmp.eq.s32.totalorder %s19, 0
    %p166 = por %p164, %p165
    %p167 = scmp.ne.s32.totalorder %s155, %s156
    %p168 = scmp.eq.s32.totalorder %s20, 1
    %p169 = por %p167, %p168
    %p171 = scmp.ne.s32.totalorder %s156, %s170
    %p172 = scmp.eq.s32.totalorder %s20, 0
    %p173 = por %p171, %p172
    %s175 = sadd.s32 %s174, 1
    %p178 = scmp.eq.s32.totalorder %s14, 1
    %p179 = scmp.ne.s32.totalorder %s174, %s176
    %p180 = scmp.eq.s32.totalorder %s14, 0
    %p181 = por %p179, %p180
    %p182 = scmp.ne.s32.totalorder %s174, %s176
    %p183 = scmp.eq.s32.totalorder %s19, 1
    %p184 = por %p182, %p183
    %p185 = scmp.ne.s32.totalorder %s176, %s177
    %p186 = scmp.eq.s32.totalorder %s19, 0
    %p187 = por %p185, %p186
    %p188 = scmp.ne.s32.totalorder %s176, %s177
    %p189 = scmp.eq.s32.totalorder %s20, 1
    %p190 = por %p188, %p189
    %p192 = scmp.ne.s32.totalorder %s177, %s191
    %p193 = scmp.eq.s32.totalorder %s20, 0
    %p194 = por %p192, %p193
    %s195 = ssub.s32 %s14, %s21
    %p196 = scmp.eq.s32.totalorder %s195, 0
    %s198 = sadd.s32 %s197, 1
    %s199 = scalar_select %p196, %s197, %s198
    %p202 = pneg %p196
    %p203 = scmp.eq.s32.totalorder %s14, 1
    %p204 = por %p202, %p203
    %p205 = scmp.ne.s32.totalorder %s197, %s200
    %p206 = scmp.eq.s32.totalorder %s14, 0
    %p207 = por %p205, %p206
    %p208 = scmp.ne.s32.totalorder %s197, %s200
    %p209 = scmp.eq.s32.totalorder %s19, 1
    %p210 = por %p208, %p209
    %p211 = scmp.ne.s32.totalorder %s200, %s201
    %p212 = scmp.eq.s32.totalorder %s19, 0
    %p213 = por %p211, %p212
    %p214 = scmp.ne.s32.totalorder %s200, %s201
    %p215 = scmp.eq.s32.totalorder %s20, 1
    %p216 = por %p214, %p215
    %p218 = scmp.ne.s32.totalorder %s201, %s217
    %p219 = scmp.eq.s32.totalorder %s20, 0
    %p220 = por %p218, %p219
    %p221 = scmp.le.s32.totalorder 1, %s14
    %p222 = scmp.lt.s32.totalorder %s14, 3
    %p223 = pnand %p221, %p222
    %p224 = pneg %p223
    // Predicated region
    $region9: #{multispectral_mae_forward.4} parent=5 // pred_check
      _
    $region10: #{multispectral_mae_forward.4} parent=5 // pred_check_branch
      %226 = sbr.rel (%p223) target = $region12
    $region11: #{multispectral_mae_forward.4} parent=5 // pred_region
      %s227 = ssub.s32 %s14, 1
      // Predicated region
      $region13: #{multispectral_mae_forward.4} parent=11 // pred_check
        %p228 = pneg %p61
      $region14: #{multispectral_mae_forward.4} parent=11 // pred_check_branch
        %230 = sbr.rel (%p228) target = $region16
      $region15: #{multispectral_mae_forward.4} parent=11 // pred_region
        _
      $region16: #{multispectral_mae_forward.4} parent=11 // pred_fallthru
        _
      // Predicated region
      $region17: #{multispectral_mae_forward.4} parent=11 // pred_check
        %p231 = pneg %p82
      $region18: #{multispectral_mae_forward.4} parent=11 // pred_check_branch
        %233 = sbr.rel (%p231) target = $region20
      $region19: #{multispectral_mae_forward.4} parent=11 // pred_region
        _
      $region20: #{multispectral_mae_forward.4} parent=11 // pred_fallthru
        _
      // Predicated region
      $region21: #{multispectral_mae_forward.4} parent=11 // pred_check
        %p234 = pneg %p103
      $region22: #{multispectral_mae_forward.4} parent=11 // pred_check_branch
        %236 = sbr.rel (%p234) target = $region24
      $region23: #{multispectral_mae_forward.4} parent=11 // pred_region
        _
      $region24: #{multispectral_mae_forward.4} parent=11 // pred_fallthru
        _
      // Predicated region
      $region25: #{multispectral_mae_forward.4} parent=11 // pred_check
        %p237 = pneg %p124
      $region26: #{multispectral_mae_forward.4} parent=11 // pred_check_branch
        %239 = sbr.rel (%p237) target = $region28
      $region27: #{multispectral_mae_forward.4} parent=11 // pred_region
        _
      $region28: #{multispectral_mae_forward.4} parent=11 // pred_fallthru
        _
      // Predicated region
      $region29: #{multispectral_mae_forward.4} parent=11 // pred_check
        %p240 = pneg %p145
      $region30: #{multispectral_mae_forward.4} parent=11 // pred_check_branch
        %242 = sbr.rel (%p240) target = $region32
      $region31: #{multispectral_mae_forward.4} parent=11 // pred_region
        _
      $region32: #{multispectral_mae_forward.4} parent=11 // pred_fallthru
        _
      // Predicated region
      $region33: #{multispectral_mae_forward.4} parent=11 // pred_check
        %p243 = pneg %p166
      $region34: #{multispectral_mae_forward.4} parent=11 // pred_check_branch
        %245 = sbr.rel (%p243) target = $region36
      $region35: #{multispectral_mae_forward.4} parent=11 // pred_region
        _
      $region36: #{multispectral_mae_forward.4} parent=11 // pred_fallthru
        _
      // Predicated region
      $region37: #{multispectral_mae_forward.4} parent=11 // pred_check
        %p246 = pneg %p187
      $region38: #{multispectral_mae_forward.4} parent=11 // pred_check_branch
        %248 = sbr.rel (%p246) target = $region40
      $region39: #{multispectral_mae_forward.4} parent=11 // pred_region
        _
      $region40: #{multispectral_mae_forward.4} parent=11 // pred_fallthru
        _
    $region12: #{multispectral_mae_forward.4} parent=5 // pred_fallthru
      _
    %p249 = scmp.lt.s32.totalorder %s14, 2
    // Predicated region
    $region41: #{multispectral_mae_forward.4} parent=5 // pred_check
      %p250 = pneg %p249
    $region42: #{multispectral_mae_forward.4} parent=5 // pred_check_branch
      %252 = sbr.rel (%p250) target = $region44
    $region43: #{multispectral_mae_forward.4} parent=5 // pred_region
      // Predicated region
      $region45: #{multispectral_mae_forward.4} parent=43 // pred_check
        %p253 = pneg %p34
      $region46: #{multispectral_mae_forward.4} parent=43 // pred_check_branch
        %255 = sbr.rel (%p253) target = $region48
      $region47: #{multispectral_mae_forward.4} parent=43 // pred_region
        %p256 = scmp.lt.s32.totalorder %s14, 1
        %s257 = scalar_select %p256, %s14, 1
        %s258 = smul.addr %s257, 2
        %s259 = smul.addr %s258, 8
        %s260 = scalar_lea.vmem %s0, %s259
      $region48: #{multispectral_mae_forward.4} parent=43 // pred_fallthru
        _
    $region44: #{multispectral_mae_forward.4} parent=5 // pred_fallthru
      _
    %p261 = scmp.le.s32.totalorder 1, %s14
    %p262 = scmp.lt.s32.totalorder %s14, 3
    %p263 = pnand %p261, %p262
    %p264 = pneg %p263
    // Predicated region
    $region49: #{multispectral_mae_forward.4} parent=5 // pred_check
      _
    $region50: #{multispectral_mae_forward.4} parent=5 // pred_check_branch
      %266 = sbr.rel (%p263) target = $region52
    $region51: #{multispectral_mae_forward.4} parent=5 // pred_region
      %s267 = ssub.s32 %s14, 1
      %p268 = scmp.lt.s32.totalorder %s19, 1
      %s269 = scalar_select %p268, %s19, 1
      %s270 = smul.addr %s269, 2
      %s271 = smul.addr %s270, 8
      %s272 = scalar_lea.vmem %s0, %s271
      %p273 = pneg %p40
      %p274 = pneg %p37
      %p275 = pneg %p61
      %p276 = pneg %p58
      %p277 = pneg %p82
      %p278 = pneg %p79
      %p279 = pneg %p103
      %p280 = pneg %p100
      %p281 = pneg %p124
      %p282 = pneg %p121
      %p283 = pneg %p145
      %p284 = pneg %p142
      %p285 = pneg %p166
      %p286 = pneg %p163
      %p287 = pneg %p187
      %p288 = pneg %p184
      %p289 = pneg %p213
      %p290 = pneg %p210
      %p291 = scmp.lt.s32.totalorder %s19, 1
      %s292 = scalar_select %p291, %s19, 1
      %s293 = smul.addr %s292, 2
      %s294 = smul.addr %s293, 8
      %s295 = scalar_lea.vmem %s8, %s294
      %p296 = scmp.lt.s32.totalorder %s19, 1
      %s297 = scalar_select %p296, %s19, 1
      %s298 = smul.addr %s297, 2
      %s299 = smul.addr %s298, 8
      %s300 = scalar_lea.vmem %s0, %s299
      %p301 = scmp.lt.s32.totalorder %s19, 1
      %s302 = scalar_select %p301, %s19, 1
      %s303 = smul.addr %s302, 2
      %s304 = smul.addr %s303, 8
      %s305 = scalar_lea.vmem %s8, %s304
      %v306 = vld [vmem:[%s300] sm:$0xff]
      %v307 = vld [vmem:[%s300 + $0x8] sm:$0xf]
      %v308 = vld [vmem:[%s1] sm:$0x1]
      %v309 = vld [vmem:[%s2] sm:$0x1]
      %vm310 = vcmask 523264
      %v311 = vsel %vm310, %v306, 0.0
      %312 = vadd.xlane.f32.xlu0 %v311
      %v313 = vpop.xlane.xlu0 %312
      %vm314 = vcmask 519168
      %v315 = vsel %vm314, %v307, 0.0
      %316 = vadd.xlane.f32.xlu0 %v315
      %v317 = vpop.xlane.xlu0 %316
      %v318 = vrcp.pop 64.0
      %v319 = vmul.f32 %v313, %v318
      %v320 = vmul.f32 %v317, %v318
      %v321 = vsub.f32 %v306, %v319
      %v322 = vsub.f32 %v307, %v320
      %v323 = vmul.f32 %v321, %v321
      %v324 = vmul.f32 %v322, %v322
      %v325 = vsel %vm310, %v323, 0.0
      %326 = vadd.xlane.f32.xlu0 %v325
      %v327 = vpop.xlane.xlu0 %326
      %v328 = vsel %vm314, %v324, 0.0
      %329 = vadd.xlane.f32.xlu0 %v328
      %v330 = vpop.xlane.xlu0 %329
      %v331 = vmul.f32 %v327, %v318
      %v332 = vmul.f32 %v330, %v318
      %v333 = vadd.f32 %v331, 1e-05
      %v334 = vadd.f32 %v332, 1e-05
      %v335 = vrsqrt.pop %v333
      %v336 = vrsqrt.pop %v334
      %v337 = vmul.f32 %v321, %v335
      %v338 = vmul.f32 %v322, %v336
      %v340 = vlaneseq
      %v341 = vshrl.u32 %v340, 7
      %v342 = vsub.s32 0, %v341
      %v343 = vrot.slane %v308, %v342
      %v345 = vmul.f32 %v337, %v343
      %v346 = vmul.f32 %v338, %v343
      %v348 = vlaneseq
      %v349 = vshrl.u32 %v348, 7
      %v350 = vsub.s32 0, %v349
      %v351 = vrot.slane %v309, %v350
      %v353 = vadd.f32 %v345, %v351
      %v354 = vadd.f32 %v346, %v351
      %v355 = vld [vmem:[%s3] sm:$0xff]
      %v356 = vld [vmem:[%s3 + $0x8] sm:$0xff]
      %v357 = vld [vmem:[%s3 + $0x10] sm:$0xff]
      %v358 = vld [vmem:[%s3 + $0x18] sm:$0xff]
      %v359 = vld [vmem:[%s3 + $0x20] sm:$0xff]
      %v360 = vld [vmem:[%s3 + $0x28] sm:$0xff]
      %v361 = vld [vmem:[%s3 + $0x30] sm:$0xff]
      %v362 = vld [vmem:[%s3 + $0x38] sm:$0xff]
      %v363 = vld [vmem:[%s4] sm:$0x1]
      %v365 = vlaneseq
      %v366 = vshrl.u32 %v365, 7
      %v367 = vsub.s32 0, %v366
      %v368 = vrot.slane %v363, %v367
      %v371 = vsel %vm310, %v353, 0
      %v374 = vsel %vm310, %v354, 0
      %376 = vmatprep.subr.mxu0 0.0
      %377 = vmatpush1.msra.mxu0 0.0
      %378 = vmatprep.subr.mxu0 0.0
      %379 = vmatpush1.msra.mxu0 0.0
      %380 = vmatprep.subr.mxu0 0.0
      %381 = vmatpush1.msra.mxu0 0.0
      %382 = vmatprep.subr.mxu0 0.0
      %383 = vmatpush1.msra.mxu0 0.0
      %384 = vmatprep.subr.mxu0 0.0
      %385 = vmatpush1.msra.mxu0 0.0
      %386 = vmatprep.subr.mxu0 0.0
      %387 = vmatpush1.msra.mxu0 0.0
      %388 = vmatprep.subr.mxu0 0.0
      %389 = vmatpush1.msra.mxu0 0.0
      %390 = vmatprep.subr.mxu0 0.0
      %391 = vmatpush1.msra.mxu0 0.0
      %392 = vmatprep.subr.mxu0 0.0
      %393 = vmatpush1.msra.mxu0 %v362
      %394 = vmatprep.subr.mxu0 0.0
      %395 = vmatpush1.msra.mxu0 %v361
      %396 = vmatprep.subr.mxu0 0.0
      %397 = vmatpush1.msra.mxu0 %v360
      %398 = vmatprep.subr.mxu0 0.0
      %399 = vmatpush1.msra.mxu0 %v359
      %400 = vmatprep.subr.mxu0 0.0
      %401 = vmatpush1.msra.mxu0 %v358
      %402 = vmatprep.subr.mxu0 0.0
      %403 = vmatpush1.msra.mxu0 %v357
      %404 = vmatprep.subr.mxu0 0.0
      %405 = vmatpush1.msra.mxu0 %v356
      %406 = vmatprep.subr.mxu0 0.0
      %407 = vmatpush1.msra.mxu0 %v355
      %408 = vmatprep.subr.mxu0 0.0
      %409 = vmatpush2.msra.mxu0 0.0
      %410 = vmatprep.subr.mxu0 0.0
      %411 = vmatpush2.msra.mxu0 0.0
      %412 = vmatprep.subr.mxu0 0.0
      %413 = vmatpush2.msra.mxu0 0.0
      %414 = vmatprep.subr.mxu0 0.0
      %415 = vmatpush2.msra.mxu0 0.0
      %416 = vmatprep.subr.mxu0 0.0
      %417 = vmatpush2.msra.mxu0 0.0
      %418 = vmatprep.subr.mxu0 0.0
      %419 = vmatpush2.msra.mxu0 0.0
      %420 = vmatprep.subr.mxu0 0.0
      %421 = vmatpush2.msra.mxu0 0.0
      %422 = vmatprep.subr.mxu0 0.0
      %423 = vmatpush2.msra.mxu0 0.0
      %424 = vmatprep.subr.mxu0 0.0
      %425 = vmatpush2.msra.mxu0 0.0
      %426 = vmatprep.subr.mxu0 0.0
      %427 = vmatpush2.msra.mxu0 0.0
      %428 = vmatprep.subr.mxu0 0.0
      %429 = vmatpush2.msra.mxu0 0.0
      %430 = vmatprep.subr.mxu0 0.0
      %431 = vmatpush2.msra.mxu0 0.0
      %432 = vmatprep.subr.mxu0 0.0
      %433 = vmatpush2.msra.mxu0 0.0
      %434 = vmatprep.subr.mxu0 0.0
      %435 = vmatpush2.msra.mxu0 0.0
      %436 = vmatprep.subr.mxu0 0.0
      %437 = vmatpush2.msra.mxu0 0.0
      %438 = vmatprep.subr.mxu0 0.0
      %439 = vmatpush2.msra.mxu0 0.0
      %440 = vmatprep.mubr.f32.mxu0 0.0
      %441 = vmatmul.mubr.f32.gmra.mxu0 %v371
      %v442 = vpop.f32.mrf.mxu0
      %v443 = vadd.f32 %v368, %v442
      %v444 = vpop.f32.mrf.mxu0
      %445 = vmatprep.mubr.f32.mxu0 0.0
      %446 = vmatmul.mubr.f32.gmra.mxu0 %v374
      %v447 = vpop.f32.mrf.mxu0
      %v448 = vadd.f32 %v368, %v447
      %v449 = vpop.f32.mrf.mxu0
      %450 = vdwg.mxu0
      %v451 = vld [vmem:[%s5] sm:$0x1]
      %v452 = vld [vmem:[%s6] sm:$0x1]
      %vm453 = vcmask 261120
      %v454 = vsel %vm453, %v443, 0.0
      %455 = vadd.xlane.f32.xlu0 %v454
      %v456 = vpop.xlane.xlu0 %455
      %vm457 = vcmask 257024
      %v458 = vsel %vm457, %v448, 0.0
      %459 = vadd.xlane.f32.xlu0 %v458
      %v460 = vpop.xlane.xlu0 %459
      %v461 = vrcp.pop 32.0
      %v462 = vmul.f32 %v456, %v461
      %v463 = vmul.f32 %v460, %v461
      %v464 = vsub.f32 %v443, %v462
      %v465 = vsub.f32 %v448, %v463
      %v466 = vmul.f32 %v464, %v464
      %v467 = vmul.f32 %v465, %v465
      %v468 = vsel %vm453, %v466, 0.0
      %469 = vadd.xlane.f32.xlu0 %v468
      %v470 = vpop.xlane.xlu0 %469
      %v471 = vsel %vm457, %v467, 0.0
      %472 = vadd.xlane.f32.xlu0 %v471
      %v473 = vpop.xlane.xlu0 %472
      %v474 = vmul.f32 %v470, %v461
      %v475 = vmul.f32 %v473, %v461
      %v476 = vadd.f32 %v474, 1e-05
      %v477 = vadd.f32 %v475, 1e-05
      %v478 = vrsqrt.pop %v476
      %v479 = vrsqrt.pop %v477
      %v480 = vmul.f32 %v464, %v478
      %v481 = vmul.f32 %v465, %v479
      %v483 = vlaneseq
      %v484 = vshrl.u32 %v483, 7
      %v485 = vsub.s32 0, %v484
      %v486 = vrot.slane %v451, %v485
      %v488 = vmul.f32 %v480, %v486
      %v489 = vmul.f32 %v481, %v486
      %v491 = vlaneseq
      %v492 = vshrl.u32 %v491, 7
      %v493 = vsub.s32 0, %v492
      %v494 = vrot.slane %v452, %v493
      %v496 = vadd.f32 %v488, %v494
      %v497 = vadd.f32 %v489, %v494
      %v498 = vld [vmem:[%s7] sm:$0xff]
      %v499 = vld [vmem:[%s7 + $0x8] sm:$0xf]
      %v500 = vadd.f32 %v496, %v498
      %v501 = vadd.f32 %v497, %v499
      %502 = vst.msk [vmem:[%s305] sm:$0xff] %vm453, %v500
      %503 = vst.msk [vmem:[%s305 + $0x8] sm:$0xf] %vm457, %v501
      %p504 = scmp.lt.s32.totalorder %s19, 1
      %s505 = scalar_select %p504, %s19, 1
      %s506 = smul.addr %s505, 2
      %s507 = smul.addr %s506, 8
      %s508 = scalar_lea.vmem %s8, %s507
      // Predicated region
      $region53: #{multispectral_mae_forward.4} parent=51 // pred_check
        %p509 = pneg %p210
      $region54: #{multispectral_mae_forward.4} parent=51 // pred_check_branch
        %511 = sbr.rel (%p509) target = $region56
      $region55: #{multispectral_mae_forward.4} parent=51 // pred_region
        _
      $region56: #{multispectral_mae_forward.4} parent=51 // pred_fallthru
        _
    $region52: #{multispectral_mae_forward.4} parent=5 // pred_fallthru
      _
    %p512 = scmp.le.s32.totalorder 2, %s14
    // Predicated region
    $region57: #{multispectral_mae_forward.4} parent=5 // pred_check
      %p513 = pneg %p512
    $region58: #{multispectral_mae_forward.4} parent=5 // pred_check_branch
      %515 = sbr.rel (%p513) target = $region60
    $region59: #{multispectral_mae_forward.4} parent=5 // pred_region
      %s516 = ssub.s32 %s14, 2
      // Predicated region
      $region61: #{multispectral_mae_forward.4} parent=59 // pred_check
        %p517 = pneg %p216
      $region62: #{multispectral_mae_forward.4} parent=59 // pred_check_branch
        %519 = sbr.rel (%p517) target = $region64
      $region63: #{multispectral_mae_forward.4} parent=59 // pred_region
        %p520 = scmp.lt.s32.totalorder %s20, 1
        %s521 = scalar_select %p520, %s20, 1
        %s522 = smul.addr %s521, 2
        %s523 = smul.addr %s522, 8
        %s524 = scalar_lea.vmem %s8, %s523
      $region64: #{multispectral_mae_forward.4} parent=59 // pred_fallthru
        _
    $region60: #{multispectral_mae_forward.4} parent=5 // pred_fallthru
      _
  $region6: #{multispectral_mae_forward.4} parent=0 // loop_footer
    %s18 = sadd.s32 1, %s14
  $region7: #{multispectral_mae_forward.4} parent=0 // loop_footer_branch
    %13 = sbr.rel target = $region3
  $region8: #{multispectral_mae_forward.4} parent=0 // loop_exit
    _

// kernel: multispectral_mae_forward.5
$region0: #{multispectral_mae_forward.5}
  #allocation0 [shape = 'u32[]', space=smem, size = 0x4, offset = 0x4, fixed_abs, tag = 'smem constant byte address 0x4 - core index']
  #allocation1 [shape = 'u32[144,128]{1,0:T(1,128)}', space=vmem, size = 0x12000, scoped, tag = 'internal scratch']
  %s0 = inlined_call_operand.vmem [shape: f32[2,3,32], index: 0, kind: input, shape index: {}]
  %s1 = inlined_call_operand.vmem [shape: f32[2,3,48], index: 1, kind: input, shape index: {}]
  %s2 = inlined_call_operand.vmem [shape: f32[1,32], index: 2, kind: input, shape index: {}]
  %s3 = inlined_call_operand.vmem [shape: f32[1,32], index: 3, kind: input, shape index: {}]
  %s4 = inlined_call_operand.vmem [shape: f32[2,32,16], index: 4, kind: input, shape index: {}]
  %s5 = inlined_call_operand.vmem [shape: f32[2,32,16], index: 5, kind: input, shape index: {}]
  %s6 = inlined_call_operand.vmem [shape: f32[2,32,16], index: 6, kind: input, shape index: {}]
  %s7 = inlined_call_operand.vmem [shape: f32[2,16,32], index: 7, kind: input, shape index: {}]
  %s8 = inlined_call_operand.vmem [shape: f32[1,32], index: 8, kind: input, shape index: {}]
  %s9 = inlined_call_operand.vmem [shape: f32[1,32], index: 9, kind: input, shape index: {}]
  %s10 = inlined_call_operand.vmem [shape: f32[1,32], index: 10, kind: input, shape index: {}]
  %s11 = inlined_call_operand.vmem [shape: f32[32,64], index: 11, kind: input, shape index: {}]
  %s12 = inlined_call_operand.vmem [shape: f32[1,64], index: 12, kind: input, shape index: {}]
  %s13 = inlined_call_operand.vmem [shape: f32[64,32], index: 13, kind: input, shape index: {}]
  %s14 = inlined_call_operand.vmem [shape: f32[1,32], index: 14, kind: input, shape index: {}]
  %s15 = inlined_call_operand.vmem [shape: f32[1,32], index: 15, kind: input, shape index: {}]
  %s16 = inlined_call_operand.vmem [shape: f32[1,32], index: 16, kind: input, shape index: {}]
  %s17 = inlined_call_operand.vmem [shape: f32[32,48], index: 17, kind: input, shape index: {}]
  %s18 = inlined_call_operand.vmem [shape: f32[1,48], index: 18, kind: input, shape index: {}]
  %s19 = inlined_call_operand.vmem [shape: f32[2,3,48], index: 19, kind: output, shape index: {}]
  %s20 = sld [smem:[#allocation0]]
  $region109: #{multispectral_mae_forward.5} parent=0
    _
  %s22 = ssub.s32 1, %s20
  %s23 = scalar_select 0, %s22, %s20
  loop: start=0, step=1, limit=4
  $region2: #{multispectral_mae_forward.5} parent=0 // loop_pre_header
    _
  $region3: #{multispectral_mae_forward.5} parent=0 // loop_header
    %s25 = sphi 0, %s29
    %p26 = scmp.ge.s32.totalorder %s25, 4
    %s35 = sphi 0, %s37
    %s38 = sphi 0, %s35
    %s39 = sphi 0, %s38
    %s55 = sphi 0, %s39
    %s61 = sphi 0, %s63
    %s64 = sphi 0, %s61
    %s65 = sphi 0, %s64
    %s81 = sphi 0, %s65
    %s85 = sphi 0, %s85
    %s87 = sphi 0, %s85
    %s88 = sphi 0, %s87
    %s102 = sphi 0, %s88
    %s106 = sphi 0, %s106
    %s108 = sphi 0, %s106
    %s109 = sphi 0, %s108
    %s123 = sphi 0, %s109
    %s127 = sphi 0, %s127
    %s129 = sphi 0, %s127
    %s130 = sphi 0, %s129
    %s144 = sphi 0, %s130
    %s148 = sphi 0, %s148
    %s150 = sphi 0, %s148
    %s151 = sphi 0, %s150
    %s165 = sphi 0, %s151
    %s169 = sphi 0, %s169
    %s171 = sphi 0, %s169
    %s172 = sphi 0, %s171
    %s186 = sphi 0, %s172
    %s190 = sphi 0, %s190
    %s192 = sphi 0, %s190
    %s193 = sphi 0, %s192
    %s207 = sphi 0, %s193
    %s211 = sphi 0, %s211
    %s213 = sphi 0, %s211
    %s214 = sphi 0, %s213
    %s228 = sphi 0, %s214
    %s232 = sphi 0, %s232
    %s234 = sphi 0, %s232
    %s235 = sphi 0, %s234
    %s249 = sphi 0, %s235
    %s253 = sphi 0, %s253
    %s255 = sphi 0, %s253
    %s256 = sphi 0, %s255
    %s270 = sphi 0, %s256
    %s274 = sphi 0, %s274
    %s276 = sphi 0, %s274
    %s277 = sphi 0, %s276
    %s291 = sphi 0, %s277
    %s295 = sphi 0, %s295
    %s297 = sphi 0, %s295
    %s298 = sphi 0, %s297
    %s312 = sphi 0, %s298
    %s316 = sphi 0, %s316
    %s318 = sphi 0, %s316
    %s319 = sphi 0, %s318
    %s333 = sphi 0, %s319
    %s337 = sphi 0, %s337
    %s339 = sphi 0, %s337
    %s340 = sphi 0, %s339
    %s354 = sphi 0, %s340
    %s358 = sphi 0, %s358
    %s360 = sphi 0, %s358
    %s361 = sphi 0, %s360
    %s375 = sphi 0, %s361
    %s379 = sphi 0, %s379
    %s381 = sphi 0, %s379
    %s382 = sphi 0, %s381
    %s396 = sphi 0, %s382
    %s400 = sphi 0, %s400
    %s402 = sphi 0, %s400
    %s403 = sphi 0, %s402
    %s417 = sphi 0, %s403
    %s421 = sphi 0, %s421
    %s423 = sphi 0, %s421
    %s424 = sphi 0, %s423
    %s438 = sphi 0, %s424
    %s444 = sphi 0, %s446
    %s447 = sphi 0, %s444
    %s448 = sphi 0, %s447
    %s464 = sphi 0, %s448
  $region4: #{multispectral_mae_forward.5} parent=0 // loop_header_branch
    %28 = sbr.rel (%p26) target = $region8
  $region5: #{multispectral_mae_forward.5} parent=0 // loop_body
    %s30 = ssub.s32 %s25, 1
    %s31 = ssub.s32 %s25, 2
    %s32 = sadd.s32 %s25, 1
    %s33 = ssub.s32 %s25, %s32
    %p34 = scmp.eq.s32.totalorder %s33, 0
    %s36 = sadd.s32 %s35, 1
    %s37 = scalar_select %p34, %s35, %s36
    %p40 = pneg %p34
    %p41 = scmp.eq.s32.totalorder %s25, 1
    %p42 = por %p40, %p41
    %p43 = scmp.ne.s32.totalorder %s35, %s38
    %p44 = scmp.eq.s32.totalorder %s25, 0
    %p45 = por %p43, %p44
    %p46 = scmp.ne.s32.totalorder %s35, %s38
    %p47 = scmp.eq.s32.totalorder %s30, 1
    %p48 = por %p46, %p47
    %p49 = scmp.ne.s32.totalorder %s38, %s39
    %p50 = scmp.eq.s32.totalorder %s30, 0
    %p51 = por %p49, %p50
    %p52 = scmp.ne.s32.totalorder %s38, %s39
    %p53 = scmp.eq.s32.totalorder %s31, 1
    %p54 = por %p52, %p53
    %p56 = scmp.ne.s32.totalorder %s39, %s55
    %p57 = scmp.eq.s32.totalorder %s31, 0
    %p58 = por %p56, %p57
    %s59 = ssub.s32 %s25, %s32
    %p60 = scmp.eq.s32.totalorder %s59, 0
    %s62 = sadd.s32 %s61, 1
    %s63 = scalar_select %p60, %s61, %s62
    %p66 = pneg %p60
    %p67 = scmp.eq.s32.totalorder %s25, 1
    %p68 = por %p66, %p67
    %p69 = scmp.ne.s32.totalorder %s61, %s64
    %p70 = scmp.eq.s32.totalorder %s25, 0
    %p71 = por %p69, %p70
    %p72 = scmp.ne.s32.totalorder %s61, %s64
    %p73 = scmp.eq.s32.totalorder %s30, 1
    %p74 = por %p72, %p73
    %p75 = scmp.ne.s32.totalorder %s64, %s65
    %p76 = scmp.eq.s32.totalorder %s30, 0
    %p77 = por %p75, %p76
    %p78 = scmp.ne.s32.totalorder %s64, %s65
    %p79 = scmp.eq.s32.totalorder %s31, 1
    %p80 = por %p78, %p79
    %p82 = scmp.ne.s32.totalorder %s65, %s81
    %p83 = scmp.eq.s32.totalorder %s31, 0
    %p84 = por %p82, %p83
    %s86 = sadd.s32 %s85, 1
    %p89 = scmp.eq.s32.totalorder %s25, 1
    %p90 = scmp.ne.s32.totalorder %s85, %s87
    %p91 = scmp.eq.s32.totalorder %s25, 0
    %p92 = por %p90, %p91
    %p93 = scmp.ne.s32.totalorder %s85, %s87
    %p94 = scmp.eq.s32.totalorder %s30, 1
    %p95 = por %p93, %p94
    %p96 = scmp.ne.s32.totalorder %s87, %s88
    %p97 = scmp.eq.s32.totalorder %s30, 0
    %p98 = por %p96, %p97
    %p99 = scmp.ne.s32.totalorder %s87, %s88
    %p100 = scmp.eq.s32.totalorder %s31, 1
    %p101 = por %p99, %p100
    %p103 = scmp.ne.s32.totalorder %s88, %s102
    %p104 = scmp.eq.s32.totalorder %s31, 0
    %p105 = por %p103, %p104
    %s107 = sadd.s32 %s106, 1
    %p110 = scmp.eq.s32.totalorder %s25, 1
    %p111 = scmp.ne.s32.totalorder %s106, %s108
    %p112 = scmp.eq.s32.totalorder %s25, 0
    %p113 = por %p111, %p112
    %p114 = scmp.ne.s32.totalorder %s106, %s108
    %p115 = scmp.eq.s32.totalorder %s30, 1
    %p116 = por %p114, %p115
    %p117 = scmp.ne.s32.totalorder %s108, %s109
    %p118 = scmp.eq.s32.totalorder %s30, 0
    %p119 = por %p117, %p118
    %p120 = scmp.ne.s32.totalorder %s108, %s109
    %p121 = scmp.eq.s32.totalorder %s31, 1
    %p122 = por %p120, %p121
    %p124 = scmp.ne.s32.totalorder %s109, %s123
    %p125 = scmp.eq.s32.totalorder %s31, 0
    %p126 = por %p124, %p125
    %s128 = sadd.s32 %s127, 1
    %p131 = scmp.eq.s32.totalorder %s25, 1
    %p132 = scmp.ne.s32.totalorder %s127, %s129
    %p133 = scmp.eq.s32.totalorder %s25, 0
    %p134 = por %p132, %p133
    %p135 = scmp.ne.s32.totalorder %s127, %s129
    %p136 = scmp.eq.s32.totalorder %s30, 1
    %p137 = por %p135, %p136
    %p138 = scmp.ne.s32.totalorder %s129, %s130
    %p139 = scmp.eq.s32.totalorder %s30, 0
    %p140 = por %p138, %p139
    %p141 = scmp.ne.s32.totalorder %s129, %s130
    %p142 = scmp.eq.s32.totalorder %s31, 1
    %p143 = por %p141, %p142
    %p145 = scmp.ne.s32.totalorder %s130, %s144
    %p146 = scmp.eq.s32.totalorder %s31, 0
    %p147 = por %p145, %p146
    %s149 = sadd.s32 %s148, 1
    %p152 = scmp.eq.s32.totalorder %s25, 1
    %p153 = scmp.ne.s32.totalorder %s148, %s150
    %p154 = scmp.eq.s32.totalorder %s25, 0
    %p155 = por %p153, %p154
    %p156 = scmp.ne.s32.totalorder %s148, %s150
    %p157 = scmp.eq.s32.totalorder %s30, 1
    %p158 = por %p156, %p157
    %p159 = scmp.ne.s32.totalorder %s150, %s151
    %p160 = scmp.eq.s32.totalorder %s30, 0
    %p161 = por %p159, %p160
    %p162 = scmp.ne.s32.totalorder %s150, %s151
    %p163 = scmp.eq.s32.totalorder %s31, 1
    %p164 = por %p162, %p163
    %p166 = scmp.ne.s32.totalorder %s151, %s165
    %p167 = scmp.eq.s32.totalorder %s31, 0
    %p168 = por %p166, %p167
    %s170 = sadd.s32 %s169, 1
    %p173 = scmp.eq.s32.totalorder %s25, 1
    %p174 = scmp.ne.s32.totalorder %s169, %s171
    %p175 = scmp.eq.s32.totalorder %s25, 0
    %p176 = por %p174, %p175
    %p177 = scmp.ne.s32.totalorder %s169, %s171
    %p178 = scmp.eq.s32.totalorder %s30, 1
    %p179 = por %p177, %p178
    %p180 = scmp.ne.s32.totalorder %s171, %s172
    %p181 = scmp.eq.s32.totalorder %s30, 0
    %p182 = por %p180, %p181
    %p183 = scmp.ne.s32.totalorder %s171, %s172
    %p184 = scmp.eq.s32.totalorder %s31, 1
    %p185 = por %p183, %p184
    %p187 = scmp.ne.s32.totalorder %s172, %s186
    %p188 = scmp.eq.s32.totalorder %s31, 0
    %p189 = por %p187, %p188
    %s191 = sadd.s32 %s190, 1
    %p194 = scmp.eq.s32.totalorder %s25, 1
    %p195 = scmp.ne.s32.totalorder %s190, %s192
    %p196 = scmp.eq.s32.totalorder %s25, 0
    %p197 = por %p195, %p196
    %p198 = scmp.ne.s32.totalorder %s190, %s192
    %p199 = scmp.eq.s32.totalorder %s30, 1
    %p200 = por %p198, %p199
    %p201 = scmp.ne.s32.totalorder %s192, %s193
    %p202 = scmp.eq.s32.totalorder %s30, 0
    %p203 = por %p201, %p202
    %p204 = scmp.ne.s32.totalorder %s192, %s193
    %p205 = scmp.eq.s32.totalorder %s31, 1
    %p206 = por %p204, %p205
    %p208 = scmp.ne.s32.totalorder %s193, %s207
    %p209 = scmp.eq.s32.totalorder %s31, 0
    %p210 = por %p208, %p209
    %s212 = sadd.s32 %s211, 1
    %p215 = scmp.eq.s32.totalorder %s25, 1
    %p216 = scmp.ne.s32.totalorder %s211, %s213
    %p217 = scmp.eq.s32.totalorder %s25, 0
    %p218 = por %p216, %p217
    %p219 = scmp.ne.s32.totalorder %s211, %s213
    %p220 = scmp.eq.s32.totalorder %s30, 1
    %p221 = por %p219, %p220
    %p222 = scmp.ne.s32.totalorder %s213, %s214
    %p223 = scmp.eq.s32.totalorder %s30, 0
    %p224 = por %p222, %p223
    %p225 = scmp.ne.s32.totalorder %s213, %s214
    %p226 = scmp.eq.s32.totalorder %s31, 1
    %p227 = por %p225, %p226
    %p229 = scmp.ne.s32.totalorder %s214, %s228
    %p230 = scmp.eq.s32.totalorder %s31, 0
    %p231 = por %p229, %p230
    %s233 = sadd.s32 %s232, 1
    %p236 = scmp.eq.s32.totalorder %s25, 1
    %p237 = scmp.ne.s32.totalorder %s232, %s234
    %p238 = scmp.eq.s32.totalorder %s25, 0
    %p239 = por %p237, %p238
    %p240 = scmp.ne.s32.totalorder %s232, %s234
    %p241 = scmp.eq.s32.totalorder %s30, 1
    %p242 = por %p240, %p241
    %p243 = scmp.ne.s32.totalorder %s234, %s235
    %p244 = scmp.eq.s32.totalorder %s30, 0
    %p245 = por %p243, %p244
    %p246 = scmp.ne.s32.totalorder %s234, %s235
    %p247 = scmp.eq.s32.totalorder %s31, 1
    %p248 = por %p246, %p247
    %p250 = scmp.ne.s32.totalorder %s235, %s249
    %p251 = scmp.eq.s32.totalorder %s31, 0
    %p252 = por %p250, %p251
    %s254 = sadd.s32 %s253, 1
    %p257 = scmp.eq.s32.totalorder %s25, 1
    %p258 = scmp.ne.s32.totalorder %s253, %s255
    %p259 = scmp.eq.s32.totalorder %s25, 0
    %p260 = por %p258, %p259
    %p261 = scmp.ne.s32.totalorder %s253, %s255
    %p262 = scmp.eq.s32.totalorder %s30, 1
    %p263 = por %p261, %p262
    %p264 = scmp.ne.s32.totalorder %s255, %s256
    %p265 = scmp.eq.s32.totalorder %s30, 0
    %p266 = por %p264, %p265
    %p267 = scmp.ne.s32.totalorder %s255, %s256
    %p268 = scmp.eq.s32.totalorder %s31, 1
    %p269 = por %p267, %p268
    %p271 = scmp.ne.s32.totalorder %s256, %s270
    %p272 = scmp.eq.s32.totalorder %s31, 0
    %p273 = por %p271, %p272
    %s275 = sadd.s32 %s274, 1
    %p278 = scmp.eq.s32.totalorder %s25, 1
    %p279 = scmp.ne.s32.totalorder %s274, %s276
    %p280 = scmp.eq.s32.totalorder %s25, 0
    %p281 = por %p279, %p280
    %p282 = scmp.ne.s32.totalorder %s274, %s276
    %p283 = scmp.eq.s32.totalorder %s30, 1
    %p284 = por %p282, %p283
    %p285 = scmp.ne.s32.totalorder %s276, %s277
    %p286 = scmp.eq.s32.totalorder %s30, 0
    %p287 = por %p285, %p286
    %p288 = scmp.ne.s32.totalorder %s276, %s277
    %p289 = scmp.eq.s32.totalorder %s31, 1
    %p290 = por %p288, %p289
    %p292 = scmp.ne.s32.totalorder %s277, %s291
    %p293 = scmp.eq.s32.totalorder %s31, 0
    %p294 = por %p292, %p293
    %s296 = sadd.s32 %s295, 1
    %p299 = scmp.eq.s32.totalorder %s25, 1
    %p300 = scmp.ne.s32.totalorder %s295, %s297
    %p301 = scmp.eq.s32.totalorder %s25, 0
    %p302 = por %p300, %p301
    %p303 = scmp.ne.s32.totalorder %s295, %s297
    %p304 = scmp.eq.s32.totalorder %s30, 1
    %p305 = por %p303, %p304
    %p306 = scmp.ne.s32.totalorder %s297, %s298
    %p307 = scmp.eq.s32.totalorder %s30, 0
    %p308 = por %p306, %p307
    %p309 = scmp.ne.s32.totalorder %s297, %s298
    %p310 = scmp.eq.s32.totalorder %s31, 1
    %p311 = por %p309, %p310
    %p313 = scmp.ne.s32.totalorder %s298, %s312
    %p314 = scmp.eq.s32.totalorder %s31, 0
    %p315 = por %p313, %p314
    %s317 = sadd.s32 %s316, 1
    %p320 = scmp.eq.s32.totalorder %s25, 1
    %p321 = scmp.ne.s32.totalorder %s316, %s318
    %p322 = scmp.eq.s32.totalorder %s25, 0
    %p323 = por %p321, %p322
    %p324 = scmp.ne.s32.totalorder %s316, %s318
    %p325 = scmp.eq.s32.totalorder %s30, 1
    %p326 = por %p324, %p325
    %p327 = scmp.ne.s32.totalorder %s318, %s319
    %p328 = scmp.eq.s32.totalorder %s30, 0
    %p329 = por %p327, %p328
    %p330 = scmp.ne.s32.totalorder %s318, %s319
    %p331 = scmp.eq.s32.totalorder %s31, 1
    %p332 = por %p330, %p331
    %p334 = scmp.ne.s32.totalorder %s319, %s333
    %p335 = scmp.eq.s32.totalorder %s31, 0
    %p336 = por %p334, %p335
    %s338 = sadd.s32 %s337, 1
    %p341 = scmp.eq.s32.totalorder %s25, 1
    %p342 = scmp.ne.s32.totalorder %s337, %s339
    %p343 = scmp.eq.s32.totalorder %s25, 0
    %p344 = por %p342, %p343
    %p345 = scmp.ne.s32.totalorder %s337, %s339
    %p346 = scmp.eq.s32.totalorder %s30, 1
    %p347 = por %p345, %p346
    %p348 = scmp.ne.s32.totalorder %s339, %s340
    %p349 = scmp.eq.s32.totalorder %s30, 0
    %p350 = por %p348, %p349
    %p351 = scmp.ne.s32.totalorder %s339, %s340
    %p352 = scmp.eq.s32.totalorder %s31, 1
    %p353 = por %p351, %p352
    %p355 = scmp.ne.s32.totalorder %s340, %s354
    %p356 = scmp.eq.s32.totalorder %s31, 0
    %p357 = por %p355, %p356
    %s359 = sadd.s32 %s358, 1
    %p362 = scmp.eq.s32.totalorder %s25, 1
    %p363 = scmp.ne.s32.totalorder %s358, %s360
    %p364 = scmp.eq.s32.totalorder %s25, 0
    %p365 = por %p363, %p364
    %p366 = scmp.ne.s32.totalorder %s358, %s360
    %p367 = scmp.eq.s32.totalorder %s30, 1
    %p368 = por %p366, %p367
    %p369 = scmp.ne.s32.totalorder %s360, %s361
    %p370 = scmp.eq.s32.totalorder %s30, 0
    %p371 = por %p369, %p370
    %p372 = scmp.ne.s32.totalorder %s360, %s361
    %p373 = scmp.eq.s32.totalorder %s31, 1
    %p374 = por %p372, %p373
    %p376 = scmp.ne.s32.totalorder %s361, %s375
    %p377 = scmp.eq.s32.totalorder %s31, 0
    %p378 = por %p376, %p377
    %s380 = sadd.s32 %s379, 1
    %p383 = scmp.eq.s32.totalorder %s25, 1
    %p384 = scmp.ne.s32.totalorder %s379, %s381
    %p385 = scmp.eq.s32.totalorder %s25, 0
    %p386 = por %p384, %p385
    %p387 = scmp.ne.s32.totalorder %s379, %s381
    %p388 = scmp.eq.s32.totalorder %s30, 1
    %p389 = por %p387, %p388
    %p390 = scmp.ne.s32.totalorder %s381, %s382
    %p391 = scmp.eq.s32.totalorder %s30, 0
    %p392 = por %p390, %p391
    %p393 = scmp.ne.s32.totalorder %s381, %s382
    %p394 = scmp.eq.s32.totalorder %s31, 1
    %p395 = por %p393, %p394
    %p397 = scmp.ne.s32.totalorder %s382, %s396
    %p398 = scmp.eq.s32.totalorder %s31, 0
    %p399 = por %p397, %p398
    %s401 = sadd.s32 %s400, 1
    %p404 = scmp.eq.s32.totalorder %s25, 1
    %p405 = scmp.ne.s32.totalorder %s400, %s402
    %p406 = scmp.eq.s32.totalorder %s25, 0
    %p407 = por %p405, %p406
    %p408 = scmp.ne.s32.totalorder %s400, %s402
    %p409 = scmp.eq.s32.totalorder %s30, 1
    %p410 = por %p408, %p409
    %p411 = scmp.ne.s32.totalorder %s402, %s403
    %p412 = scmp.eq.s32.totalorder %s30, 0
    %p413 = por %p411, %p412
    %p414 = scmp.ne.s32.totalorder %s402, %s403
    %p415 = scmp.eq.s32.totalorder %s31, 1
    %p416 = por %p414, %p415
    %p418 = scmp.ne.s32.totalorder %s403, %s417
    %p419 = scmp.eq.s32.totalorder %s31, 0
    %p420 = por %p418, %p419
    %s422 = sadd.s32 %s421, 1
    %p425 = scmp.eq.s32.totalorder %s25, 1
    %p426 = scmp.ne.s32.totalorder %s421, %s423
    %p427 = scmp.eq.s32.totalorder %s25, 0
    %p428 = por %p426, %p427
    %p429 = scmp.ne.s32.totalorder %s421, %s423
    %p430 = scmp.eq.s32.totalorder %s30, 1
    %p431 = por %p429, %p430
    %p432 = scmp.ne.s32.totalorder %s423, %s424
    %p433 = scmp.eq.s32.totalorder %s30, 0
    %p434 = por %p432, %p433
    %p435 = scmp.ne.s32.totalorder %s423, %s424
    %p436 = scmp.eq.s32.totalorder %s31, 1
    %p437 = por %p435, %p436
    %p439 = scmp.ne.s32.totalorder %s424, %s438
    %p440 = scmp.eq.s32.totalorder %s31, 0
    %p441 = por %p439, %p440
    %s442 = ssub.s32 %s25, %s32
    %p443 = scmp.eq.s32.totalorder %s442, 0
    %s445 = sadd.s32 %s444, 1
    %s446 = scalar_select %p443, %s444, %s445
    %p449 = pneg %p443
    %p450 = scmp.eq.s32.totalorder %s25, 1
    %p451 = por %p449, %p450
    %p452 = scmp.ne.s32.totalorder %s444, %s447
    %p453 = scmp.eq.s32.totalorder %s25, 0
    %p454 = por %p452, %p453
    %p455 = scmp.ne.s32.totalorder %s444, %s447
    %p456 = scmp.eq.s32.totalorder %s30, 1
    %p457 = por %p455, %p456
    %p458 = scmp.ne.s32.totalorder %s447, %s448
    %p459 = scmp.eq.s32.totalorder %s30, 0
    %p460 = por %p458, %p459
    %p461 = scmp.ne.s32.totalorder %s447, %s448
    %p462 = scmp.eq.s32.totalorder %s31, 1
    %p463 = por %p461, %p462
    %p465 = scmp.ne.s32.totalorder %s448, %s464
    %p466 = scmp.eq.s32.totalorder %s31, 0
    %p467 = por %p465, %p466
    %p468 = scmp.le.s32.totalorder 1, %s25
    %p469 = scmp.lt.s32.totalorder %s25, 3
    %p470 = pnand %p468, %p469
    %p471 = pneg %p470
    // Predicated region
    $region9: #{multispectral_mae_forward.5} parent=5 // pred_check
      _
    $region10: #{multispectral_mae_forward.5} parent=5 // pred_check_branch
      %473 = sbr.rel (%p470) target = $region12
    $region11: #{multispectral_mae_forward.5} parent=5 // pred_region
      %s474 = ssub.s32 %s25, 1
      // Predicated region
      $region13: #{multispectral_mae_forward.5} parent=11 // pred_check
        %p475 = pneg %p98
      $region14: #{multispectral_mae_forward.5} parent=11 // pred_check_branch
        %477 = sbr.rel (%p475) target = $region16
      $region15: #{multispectral_mae_forward.5} parent=11 // pred_region
        _
      $region16: #{multispectral_mae_forward.5} parent=11 // pred_fallthru
        _
      // Predicated region
      $region17: #{multispectral_mae_forward.5} parent=11 // pred_check
        %p478 = pneg %p119
      $region18: #{multispectral_mae_forward.5} parent=11 // pred_check_branch
        %480 = sbr.rel (%p478) target = $region20
      $region19: #{multispectral_mae_forward.5} parent=11 // pred_region
        _
      $region20: #{multispectral_mae_forward.5} parent=11 // pred_fallthru
        _
      // Predicated region
      $region21: #{multispectral_mae_forward.5} parent=11 // pred_check
        %p481 = pneg %p140
      $region22: #{multispectral_mae_forward.5} parent=11 // pred_check_branch
        %483 = sbr.rel (%p481) target = $region24
      $region23: #{multispectral_mae_forward.5} parent=11 // pred_region
        _
      $region24: #{multispectral_mae_forward.5} parent=11 // pred_fallthru
        _
      // Predicated region
      $region25: #{multispectral_mae_forward.5} parent=11 // pred_check
        %p484 = pneg %p161
      $region26: #{multispectral_mae_forward.5} parent=11 // pred_check_branch
        %486 = sbr.rel (%p484) target = $region28
      $region27: #{multispectral_mae_forward.5} parent=11 // pred_region
        _
      $region28: #{multispectral_mae_forward.5} parent=11 // pred_fallthru
        _
      // Predicated region
      $region29: #{multispectral_mae_forward.5} parent=11 // pred_check
        %p487 = pneg %p182
      $region30: #{multispectral_mae_forward.5} parent=11 // pred_check_branch
        %489 = sbr.rel (%p487) target = $region32
      $region31: #{multispectral_mae_forward.5} parent=11 // pred_region
        _
      $region32: #{multispectral_mae_forward.5} parent=11 // pred_fallthru
        _
      // Predicated region
      $region33: #{multispectral_mae_forward.5} parent=11 // pred_check
        %p490 = pneg %p203
      $region34: #{multispectral_mae_forward.5} parent=11 // pred_check_branch
        %492 = sbr.rel (%p490) target = $region36
      $region35: #{multispectral_mae_forward.5} parent=11 // pred_region
        _
      $region36: #{multispectral_mae_forward.5} parent=11 // pred_fallthru
        _
      // Predicated region
      $region37: #{multispectral_mae_forward.5} parent=11 // pred_check
        %p493 = pneg %p224
      $region38: #{multispectral_mae_forward.5} parent=11 // pred_check_branch
        %495 = sbr.rel (%p493) target = $region40
      $region39: #{multispectral_mae_forward.5} parent=11 // pred_region
        _
      $region40: #{multispectral_mae_forward.5} parent=11 // pred_fallthru
        _
      // Predicated region
      $region41: #{multispectral_mae_forward.5} parent=11 // pred_check
        %p496 = pneg %p245
      $region42: #{multispectral_mae_forward.5} parent=11 // pred_check_branch
        %498 = sbr.rel (%p496) target = $region44
      $region43: #{multispectral_mae_forward.5} parent=11 // pred_region
        _
      $region44: #{multispectral_mae_forward.5} parent=11 // pred_fallthru
        _
      // Predicated region
      $region45: #{multispectral_mae_forward.5} parent=11 // pred_check
        %p499 = pneg %p266
      $region46: #{multispectral_mae_forward.5} parent=11 // pred_check_branch
        %501 = sbr.rel (%p499) target = $region48
      $region47: #{multispectral_mae_forward.5} parent=11 // pred_region
        _
      $region48: #{multispectral_mae_forward.5} parent=11 // pred_fallthru
        _
      // Predicated region
      $region49: #{multispectral_mae_forward.5} parent=11 // pred_check
        %p502 = pneg %p287
      $region50: #{multispectral_mae_forward.5} parent=11 // pred_check_branch
        %504 = sbr.rel (%p502) target = $region52
      $region51: #{multispectral_mae_forward.5} parent=11 // pred_region
        _
      $region52: #{multispectral_mae_forward.5} parent=11 // pred_fallthru
        _
      // Predicated region
      $region53: #{multispectral_mae_forward.5} parent=11 // pred_check
        %p505 = pneg %p308
      $region54: #{multispectral_mae_forward.5} parent=11 // pred_check_branch
        %507 = sbr.rel (%p505) target = $region56
      $region55: #{multispectral_mae_forward.5} parent=11 // pred_region
        _
      $region56: #{multispectral_mae_forward.5} parent=11 // pred_fallthru
        _
      // Predicated region
      $region57: #{multispectral_mae_forward.5} parent=11 // pred_check
        %p508 = pneg %p329
      $region58: #{multispectral_mae_forward.5} parent=11 // pred_check_branch
        %510 = sbr.rel (%p508) target = $region60
      $region59: #{multispectral_mae_forward.5} parent=11 // pred_region
        _
      $region60: #{multispectral_mae_forward.5} parent=11 // pred_fallthru
        _
      // Predicated region
      $region61: #{multispectral_mae_forward.5} parent=11 // pred_check
        %p511 = pneg %p350
      $region62: #{multispectral_mae_forward.5} parent=11 // pred_check_branch
        %513 = sbr.rel (%p511) target = $region64
      $region63: #{multispectral_mae_forward.5} parent=11 // pred_region
        _
      $region64: #{multispectral_mae_forward.5} parent=11 // pred_fallthru
        _
      // Predicated region
      $region65: #{multispectral_mae_forward.5} parent=11 // pred_check
        %p514 = pneg %p371
      $region66: #{multispectral_mae_forward.5} parent=11 // pred_check_branch
        %516 = sbr.rel (%p514) target = $region68
      $region67: #{multispectral_mae_forward.5} parent=11 // pred_region
        _
      $region68: #{multispectral_mae_forward.5} parent=11 // pred_fallthru
        _
      // Predicated region
      $region69: #{multispectral_mae_forward.5} parent=11 // pred_check
        %p517 = pneg %p392
      $region70: #{multispectral_mae_forward.5} parent=11 // pred_check_branch
        %519 = sbr.rel (%p517) target = $region72
      $region71: #{multispectral_mae_forward.5} parent=11 // pred_region
        _
      $region72: #{multispectral_mae_forward.5} parent=11 // pred_fallthru
        _
      // Predicated region
      $region73: #{multispectral_mae_forward.5} parent=11 // pred_check
        %p520 = pneg %p413
      $region74: #{multispectral_mae_forward.5} parent=11 // pred_check_branch
        %522 = sbr.rel (%p520) target = $region76
      $region75: #{multispectral_mae_forward.5} parent=11 // pred_region
        _
      $region76: #{multispectral_mae_forward.5} parent=11 // pred_fallthru
        _
      // Predicated region
      $region77: #{multispectral_mae_forward.5} parent=11 // pred_check
        %p523 = pneg %p434
      $region78: #{multispectral_mae_forward.5} parent=11 // pred_check_branch
        %525 = sbr.rel (%p523) target = $region80
      $region79: #{multispectral_mae_forward.5} parent=11 // pred_region
        _
      $region80: #{multispectral_mae_forward.5} parent=11 // pred_fallthru
        _
    $region12: #{multispectral_mae_forward.5} parent=5 // pred_fallthru
      _
    %p526 = scmp.lt.s32.totalorder %s25, 2
    // Predicated region
    $region81: #{multispectral_mae_forward.5} parent=5 // pred_check
      %p527 = pneg %p526
    $region82: #{multispectral_mae_forward.5} parent=5 // pred_check_branch
      %529 = sbr.rel (%p527) target = $region84
    $region83: #{multispectral_mae_forward.5} parent=5 // pred_region
      // Predicated region
      $region85: #{multispectral_mae_forward.5} parent=83 // pred_check
        %p530 = pneg %p45
      $region86: #{multispectral_mae_forward.5} parent=83 // pred_check_branch
        %532 = sbr.rel (%p530) target = $region88
      $region87: #{multispectral_mae_forward.5} parent=83 // pred_region
        %p533 = scmp.lt.s32.totalorder %s25, 1
        %s534 = scalar_select %p533, %s25, 1
        %s535 = smul.addr %s534, 4
        %s536 = scalar_lea.vmem %s0, %s535
      $region88: #{multispectral_mae_forward.5} parent=83 // pred_fallthru
        _
      // Predicated region
      $region89: #{multispectral_mae_forward.5} parent=83 // pred_check
        %p537 = pneg %p71
      $region90: #{multispectral_mae_forward.5} parent=83 // pred_check_branch
        %539 = sbr.rel (%p537) target = $region92
      $region91: #{multispectral_mae_forward.5} parent=83 // pred_region
        %p540 = scmp.lt.s32.totalorder %s25, 1
        %s541 = scalar_select %p540, %s25, 1
        %s542 = smul.addr %s541, 4
        %s543 = scalar_lea.vmem %s1, %s542
      $region92: #{multispectral_mae_forward.5} parent=83 // pred_fallthru
        _
    $region84: #{multispectral_mae_forward.5} parent=5 // pred_fallthru
      _
    %p544 = scmp.le.s32.totalorder 1, %s25
    %p545 = scmp.lt.s32.totalorder %s25, 3
    %p546 = pnand %p544, %p545
    %p547 = pneg %p546
    // Predicated region
    $region93: #{multispectral_mae_forward.5} parent=5 // pred_check
      _
    $region94: #{multispectral_mae_forward.5} parent=5 // pred_check_branch
      %549 = sbr.rel (%p546) target = $region96
    $region95: #{multispectral_mae_forward.5} parent=5 // pred_region
      %s550 = ssub.s32 %s25, 1
      %p551 = scmp.lt.s32.totalorder %s30, 1
      %s552 = scalar_select %p551, %s30, 1
      %s553 = smul.addr %s552, 4
      %s554 = scalar_lea.vmem %s0, %s553
      %p555 = pneg %p51
      %p556 = pneg %p48
      %p557 = scmp.lt.s32.totalorder %s30, 1
      %s558 = scalar_select %p557, %s30, 1
      %s559 = smul.addr %s558, 4
      %s560 = scalar_lea.vmem %s1, %s559
      %p561 = pneg %p77
      %p562 = pneg %p74
      %p563 = pneg %p98
      %p564 = pneg %p95
      %p565 = pneg %p119
      %p566 = pneg %p116
      %p567 = pneg %p140
      %p568 = pneg %p137
      %p569 = pneg %p161
      %p570 = pneg %p158
      %p571 = pneg %p182
      %p572 = pneg %p179
      %p573 = pneg %p203
      %p574 = pneg %p200
      %p575 = pneg %p224
      %p576 = pneg %p221
      %p577 = pneg %p245
      %p578 = pneg %p242
      %p579 = pneg %p266
      %p580 = pneg %p263
      %p581 = pneg %p287
      %p582 = pneg %p284
      %p583 = pneg %p308
      %p584 = pneg %p305
      %p585 = pneg %p329
      %p586 = pneg %p326
      %p587 = pneg %p350
      %p588 = pneg %p347
      %p589 = pneg %p371
      %p590 = pneg %p368
      %p591 = pneg %p392
      %p592 = pneg %p389
      %p593 = pneg %p413
      %p594 = pneg %p410
      %p595 = pneg %p434
      %p596 = pneg %p431
      %p597 = pneg %p460
      %p598 = pneg %p457
      %p599 = scmp.lt.s32.totalorder %s30, 1
      %s600 = scalar_select %p599, %s30, 1
      %s601 = smul.addr %s600, 4
      %s602 = scalar_lea.vmem %s19, %s601
      %p603 = scmp.lt.s32.totalorder %s30, 1
      %s604 = scalar_select %p603, %s30, 1
      %s605 = smul.addr %s604, 4
      %s606 = scalar_lea.vmem %s0, %s605
      %p607 = scmp.lt.s32.totalorder %s30, 1
      %s608 = scalar_select %p607, %s30, 1
      %s609 = smul.addr %s608, 4
      %s610 = scalar_lea.vmem %s1, %s609
      %p611 = scmp.lt.s32.totalorder %s30, 1
      %s612 = scalar_select %p611, %s30, 1
      %s613 = smul.addr %s612, 4
      %s614 = scalar_lea.vmem %s19, %s613
      %v615 = vld [vmem:[%s606] sm:$0x7]
      %v616 = vld [vmem:[%s2] sm:$0x1]
      %v617 = vld [vmem:[%s3] sm:$0x1]
      %v618 = vld [vmem:[%s4] sm:$0xff]
      %v619 = vld [vmem:[%s4 + $0x8] sm:$0xff]
      %v620 = vld [vmem:[%s4 + $0x10] sm:$0xff]
      %v621 = vld [vmem:[%s4 + $0x18] sm:$0xff]
      %v622 = vld [vmem:[%s4 + $0x20] sm:$0xff]
      %v623 = vld [vmem:[%s4 + $0x28] sm:$0xff]
      %v624 = vld [vmem:[%s4 + $0x30] sm:$0xff]
      %v625 = vld [vmem:[%s4 + $0x38] sm:$0xff]
      %v626 = vld [vmem:[%s5] sm:$0xff]
      %v627 = vld [vmem:[%s5 + $0x8] sm:$0xff]
      %v628 = vld [vmem:[%s5 + $0x10] sm:$0xff]
      %v629 = vld [vmem:[%s5 + $0x18] sm:$0xff]
      %v630 = vld [vmem:[%s5 + $0x20] sm:$0xff]
      %v631 = vld [vmem:[%s5 + $0x28] sm:$0xff]
      %v632 = vld [vmem:[%s5 + $0x30] sm:$0xff]
      %v633 = vld [vmem:[%s5 + $0x38] sm:$0xff]
      %v634 = vld [vmem:[%s6] sm:$0xff]
      %v635 = vld [vmem:[%s6 + $0x8] sm:$0xff]
      %v636 = vld [vmem:[%s6 + $0x10] sm:$0xff]
      %v637 = vld [vmem:[%s6 + $0x18] sm:$0xff]
      %v638 = vld [vmem:[%s6 + $0x20] sm:$0xff]
      %v639 = vld [vmem:[%s6 + $0x28] sm:$0xff]
      %v640 = vld [vmem:[%s6 + $0x30] sm:$0xff]
      %v641 = vld [vmem:[%s6 + $0x38] sm:$0xff]
      %v642 = vld [vmem:[%s7] sm:$0xff]
      %v643 = vld [vmem:[%s7 + $0x8] sm:$0xff]
      %v644 = vld [vmem:[%s7 + $0x10] sm:$0xff]
      %v645 = vld [vmem:[%s7 + $0x18] sm:$0xff]
      %v646 = vld [vmem:[%s8] sm:$0x1]
      %v647 = vld [vmem:[%s9] sm:$0x1]
      %v648 = vld [vmem:[%s10] sm:$0x1]
      %v649 = vld [vmem:[%s11] sm:$0xff]
      %v650 = vld [vmem:[%s11 + $0x8] sm:$0xff]
      %v651 = vld [vmem:[%s11 + $0x10] sm:$0xff]
      %v652 = vld [vmem:[%s11 + $0x18] sm:$0xff]
      %v653 = vld [vmem:[%s12] sm:$0x1]
      %v654 = vld [vmem:[%s13] sm:$0xff]
      %v655 = vld [vmem:[%s13 + $0x8] sm:$0xff]
      %v656 = vld [vmem:[%s13 + $0x10] sm:$0xff]
      %v657 = vld [vmem:[%s13 + $0x18] sm:$0xff]
      %v658 = vld [vmem:[%s13 + $0x20] sm:$0xff]
      %v659 = vld [vmem:[%s13 + $0x28] sm:$0xff]
      %v660 = vld [vmem:[%s13 + $0x30] sm:$0xff]
      %v661 = vld [vmem:[%s13 + $0x38] sm:$0xff]
      %v662 = vld [vmem:[%s14] sm:$0x1]
      %vm663 = vcmask 256000
      %v664 = vsel %vm663, %v615, 0.0
      %665 = vadd.xlane.f32.xlu0 %v664
      %v666 = vpop.xlane.xlu0 %665
      %v667 = vrcp.pop 32.0
      %v668 = vmul.f32 %v666, %v667
      %v669 = vsub.f32 %v615, %v668
      %v670 = vmul.f32 %v669, %v669
      %v671 = vsel %vm663, %v670, 0.0
      %672 = vadd.xlane.f32.xlu0 %v671
      %v673 = vpop.xlane.xlu0 %672
      %v674 = vmul.f32 %v673, %v667
      %v675 = vadd.f32 %v674, 1e-05
      %v676 = vrsqrt.pop %v675
      %v677 = vmul.f32 %v669, %v676
      %v679 = vlaneseq
      %v680 = vshrl.u32 %v679, 7
      %v681 = vsub.s32 0, %v680
      %v682 = vrot.slane %v616, %v681
      %v684 = vmul.f32 %v677, %v682
      %v686 = vlaneseq
      %v687 = vshrl.u32 %v686, 7
      %v688 = vsub.s32 0, %v687
      %v689 = vrot.slane %v617, %v688
      %v691 = vadd.f32 %v684, %v689
      %vm692 = vcmask 261120
      %v694 = vsel %vm692, %v691, 0
      %696 = vmatprep.subr.mxu0 0.0
      %697 = vmatpush1.msra.mxu0 0.0
      %698 = vmatprep.subr.mxu0 0.0
      %699 = vmatpush1.msra.mxu0 0.0
      %700 = vmatprep.subr.mxu0 0.0
      %701 = vmatpush1.msra.mxu0 0.0
      %702 = vmatprep.subr.mxu0 0.0
      %703 = vmatpush1.msra.mxu0 0.0
      %704 = vmatprep.subr.mxu0 0.0
      %705 = vmatpush1.msra.mxu0 0.0
      %706 = vmatprep.subr.mxu0 0.0
      %707 = vmatpush1.msra.mxu0 0.0
      %708 = vmatprep.subr.mxu0 0.0
      %709 = vmatpush1.msra.mxu0 0.0
      %710 = vmatprep.subr.mxu0 0.0
      %711 = vmatpush1.msra.mxu0 0.0
      %712 = vmatprep.subr.mxu0 0.0
      %713 = vmatpush1.msra.mxu0 0.0
      %714 = vmatprep.subr.mxu0 0.0
      %715 = vmatpush1.msra.mxu0 0.0
      %716 = vmatprep.subr.mxu0 0.0
      %717 = vmatpush1.msra.mxu0 0.0
      %718 = vmatprep.subr.mxu0 0.0
      %719 = vmatpush1.msra.mxu0 0.0
      %720 = vmatprep.subr.mxu0 0.0
      %721 = vmatpush1.msra.mxu0 %v621
      %722 = vmatprep.subr.mxu0 0.0
      %723 = vmatpush1.msra.mxu0 %v620
      %724 = vmatprep.subr.mxu0 0.0
      %725 = vmatpush1.msra.mxu0 %v619
      %726 = vmatprep.subr.mxu0 0.0
      %727 = vmatpush1.msra.mxu0 %v618
      %728 = vmatprep.subr.mxu0 0.0
      %729 = vmatpush2.msra.mxu0 0.0
      %730 = vmatprep.subr.mxu0 0.0
      %731 = vmatpush2.msra.mxu0 0.0
      %732 = vmatprep.subr.mxu0 0.0
      %733 = vmatpush2.msra.mxu0 0.0
      %734 = vmatprep.subr.mxu0 0.0
      %735 = vmatpush2.msra.mxu0 0.0
      %736 = vmatprep.subr.mxu0 0.0
      %737 = vmatpush2.msra.mxu0 0.0
      %738 = vmatprep.subr.mxu0 0.0
      %739 = vmatpush2.msra.mxu0 0.0
      %740 = vmatprep.subr.mxu0 0.0
      %741 = vmatpush2.msra.mxu0 0.0
      %742 = vmatprep.subr.mxu0 0.0
      %743 = vmatpush2.msra.mxu0 0.0
      %744 = vmatprep.subr.mxu0 0.0
      %745 = vmatpush2.msra.mxu0 0.0
      %746 = vmatprep.subr.mxu0 0.0
      %747 = vmatpush2.msra.mxu0 0.0
      %748 = vmatprep.subr.mxu0 0.0
      %749 = vmatpush2.msra.mxu0 0.0
      %750 = vmatprep.subr.mxu0 0.0
      %751 = vmatpush2.msra.mxu0 0.0
      %752 = vmatprep.subr.mxu0 0.0
      %753 = vmatpush2.msra.mxu0 0.0
      %754 = vmatprep.subr.mxu0 0.0
      %755 = vmatpush2.msra.mxu0 0.0
      %756 = vmatprep.subr.mxu0 0.0
      %757 = vmatpush2.msra.mxu0 0.0
      %758 = vmatprep.subr.mxu0 0.0
      %759 = vmatpush2.msra.mxu0 0.0
      %760 = vmatprep.mubr.f32.mxu0 0.0
      %761 = vmatmul.mubr.f32.gmra.mxu0 %v694
      %v762 = vpop.f32.mrf.mxu0
      %v763 = vadd.f32 0.0, %v762
      %v764 = vpop.f32.mrf.mxu0
      %765 = vdwg.mxu0
      %766 = vmatprep.subr.mxu0 0.0
      %767 = vmatpush1.msra.mxu0 0.0
      %768 = vmatprep.subr.mxu0 0.0
      %769 = vmatpush1.msra.mxu0 0.0
      %770 = vmatprep.subr.mxu0 0.0
      %771 = vmatpush1.msra.mxu0 0.0
      %772 = vmatprep.subr.mxu0 0.0
      %773 = vmatpush1.msra.mxu0 0.0
      %774 = vmatprep.subr.mxu0 0.0
      %775 = vmatpush1.msra.mxu0 0.0
      %776 = vmatprep.subr.mxu0 0.0
      %777 = vmatpush1.msra.mxu0 0.0
      %778 = vmatprep.subr.mxu0 0.0
      %779 = vmatpush1.msra.mxu0 0.0
      %780 = vmatprep.subr.mxu0 0.0
      %781 = vmatpush1.msra.mxu0 0.0
      %782 = vmatprep.subr.mxu0 0.0
      %783 = vmatpush1.msra.mxu0 0.0
      %784 = vmatprep.subr.mxu0 0.0
      %785 = vmatpush1.msra.mxu0 0.0
      %786 = vmatprep.subr.mxu0 0.0
      %787 = vmatpush1.msra.mxu0 0.0
      %788 = vmatprep.subr.mxu0 0.0
      %789 = vmatpush1.msra.mxu0 0.0
      %790 = vmatprep.subr.mxu0 0.0
      %791 = vmatpush1.msra.mxu0 %v625
      %792 = vmatprep.subr.mxu0 0.0
      %793 = vmatpush1.msra.mxu0 %v624
      %794 = vmatprep.subr.mxu0 0.0
      %795 = vmatpush1.msra.mxu0 %v623
      %796 = vmatprep.subr.mxu0 0.0
      %797 = vmatpush1.msra.mxu0 %v622
      %798 = vmatprep.subr.mxu0 0.0
      %799 = vmatpush2.msra.mxu0 0.0
      %800 = vmatprep.subr.mxu0 0.0
      %801 = vmatpush2.msra.mxu0 0.0
      %802 = vmatprep.subr.mxu0 0.0
      %803 = vmatpush2.msra.mxu0 0.0
      %804 = vmatprep.subr.mxu0 0.0
      %805 = vmatpush2.msra.mxu0 0.0
      %806 = vmatprep.subr.mxu0 0.0
      %807 = vmatpush2.msra.mxu0 0.0
      %808 = vmatprep.subr.mxu0 0.0
      %809 = vmatpush2.msra.mxu0 0.0
      %810 = vmatprep.subr.mxu0 0.0
      %811 = vmatpush2.msra.mxu0 0.0
      %812 = vmatprep.subr.mxu0 0.0
      %813 = vmatpush2.msra.mxu0 0.0
      %814 = vmatprep.subr.mxu0 0.0
      %815 = vmatpush2.msra.mxu0 0.0
      %816 = vmatprep.subr.mxu0 0.0
      %817 = vmatpush2.msra.mxu0 0.0
      %818 = vmatprep.subr.mxu0 0.0
      %819 = vmatpush2.msra.mxu0 0.0
      %820 = vmatprep.subr.mxu0 0.0
      %821 = vmatpush2.msra.mxu0 0.0
      %822 = vmatprep.subr.mxu0 0.0
      %823 = vmatpush2.msra.mxu0 0.0
      %824 = vmatprep.subr.mxu0 0.0
      %825 = vmatpush2.msra.mxu0 0.0
      %826 = vmatprep.subr.mxu0 0.0
      %827 = vmatpush2.msra.mxu0 0.0
      %828 = vmatprep.subr.mxu0 0.0
      %829 = vmatpush2.msra.mxu0 0.0
      %830 = vmatprep.mubr.f32.mxu0 0.0
      %831 = vmatmul.mubr.f32.gmra.mxu0 %v694
      %v832 = vpop.f32.mrf.mxu0
      %v833 = vadd.f32 0.0, %v832
      %v834 = vpop.f32.mrf.mxu0
      %835 = vdwg.mxu0
      %836 = vmatprep.subr.mxu0 0.0
      %837 = vmatpush1.msra.mxu0 0.0
      %838 = vmatprep.subr.mxu0 0.0
      %839 = vmatpush1.msra.mxu0 0.0
      %840 = vmatprep.subr.mxu0 0.0
      %841 = vmatpush1.msra.mxu0 0.0
      %842 = vmatprep.subr.mxu0 0.0
      %843 = vmatpush1.msra.mxu0 0.0
      %844 = vmatprep.subr.mxu0 0.0
      %845 = vmatpush1.msra.mxu0 0.0
      %846 = vmatprep.subr.mxu0 0.0
      %847 = vmatpush1.msra.mxu0 0.0
      %848 = vmatprep.subr.mxu0 0.0
      %849 = vmatpush1.msra.mxu0 0.0
      %850 = vmatprep.subr.mxu0 0.0
      %851 = vmatpush1.msra.mxu0 0.0
      %852 = vmatprep.subr.mxu0 0.0
      %853 = vmatpush1.msra.mxu0 0.0
      %854 = vmatprep.subr.mxu0 0.0
      %855 = vmatpush1.msra.mxu0 0.0
      %856 = vmatprep.subr.mxu0 0.0
      %857 = vmatpush1.msra.mxu0 0.0
      %858 = vmatprep.subr.mxu0 0.0
      %859 = vmatpush1.msra.mxu0 0.0
      %860 = vmatprep.subr.mxu0 0.0
      %861 = vmatpush1.msra.mxu0 %v629
      %862 = vmatprep.subr.mxu0 0.0
      %863 = vmatpush1.msra.mxu0 %v628
      %864 = vmatprep.subr.mxu0 0.0
      %865 = vmatpush1.msra.mxu0 %v627
      %866 = vmatprep.subr.mxu0 0.0
      %867 = vmatpush1.msra.mxu0 %v626
      %868 = vmatprep.subr.mxu0 0.0
      %869 = vmatpush2.msra.mxu0 0.0
      %870 = vmatprep.subr.mxu0 0.0
      %871 = vmatpush2.msra.mxu0 0.0
      %872 = vmatprep.subr.mxu0 0.0
      %873 = vmatpush2.msra.mxu0 0.0
      %874 = vmatprep.subr.mxu0 0.0
      %875 = vmatpush2.msra.mxu0 0.0
      %876 = vmatprep.subr.mxu0 0.0
      %877 = vmatpush2.msra.mxu0 0.0
      %878 = vmatprep.subr.mxu0 0.0
      %879 = vmatpush2.msra.mxu0 0.0
      %880 = vmatprep.subr.mxu0 0.0
      %881 = vmatpush2.msra.mxu0 0.0
      %882 = vmatprep.subr.mxu0 0.0
      %883 = vmatpush2.msra.mxu0 0.0
      %884 = vmatprep.subr.mxu0 0.0
      %885 = vmatpush2.msra.mxu0 0.0
      %886 = vmatprep.subr.mxu0 0.0
      %887 = vmatpush2.msra.mxu0 0.0
      %888 = vmatprep.subr.mxu0 0.0
      %889 = vmatpush2.msra.mxu0 0.0
      %890 = vmatprep.subr.mxu0 0.0
      %891 = vmatpush2.msra.mxu0 0.0
      %892 = vmatprep.subr.mxu0 0.0
      %893 = vmatpush2.msra.mxu0 0.0
      %894 = vmatprep.subr.mxu0 0.0
      %895 = vmatpush2.msra.mxu0 0.0
      %896 = vmatprep.subr.mxu0 0.0
      %897 = vmatpush2.msra.mxu0 0.0
      %898 = vmatprep.subr.mxu0 0.0
      %899 = vmatpush2.msra.mxu0 0.0
      %900 = vmatprep.mubr.f32.mxu0 0.0
      %901 = vmatmul.mubr.f32.gmra.mxu0 %v694
      %v902 = vpop.f32.mrf.mxu0
      %v903 = vadd.f32 0.0, %v902
      %v904 = vpop.f32.mrf.mxu0
      %905 = vdwg.mxu0
      %906 = vmatprep.subr.mxu0 0.0
      %907 = vmatpush1.msra.mxu0 0.0
      %908 = vmatprep.subr.mxu0 0.0
      %909 = vmatpush1.msra.mxu0 0.0
      %910 = vmatprep.subr.mxu0 0.0
      %911 = vmatpush1.msra.mxu0 0.0
      %912 = vmatprep.subr.mxu0 0.0
      %913 = vmatpush1.msra.mxu0 0.0
      %914 = vmatprep.subr.mxu0 0.0
      %915 = vmatpush1.msra.mxu0 0.0
      %916 = vmatprep.subr.mxu0 0.0
      %917 = vmatpush1.msra.mxu0 0.0
      %918 = vmatprep.subr.mxu0 0.0
      %919 = vmatpush1.msra.mxu0 0.0
      %920 = vmatprep.subr.mxu0 0.0
      %921 = vmatpush1.msra.mxu0 0.0
      %922 = vmatprep.subr.mxu0 0.0
      %923 = vmatpush1.msra.mxu0 0.0
      %924 = vmatprep.subr.mxu0 0.0
      %925 = vmatpush1.msra.mxu0 0.0
      %926 = vmatprep.subr.mxu0 0.0
      %927 = vmatpush1.msra.mxu0 0.0
      %928 = vmatprep.subr.mxu0 0.0
      %929 = vmatpush1.msra.mxu0 0.0
      %930 = vmatprep.subr.mxu0 0.0
      %931 = vmatpush1.msra.mxu0 %v633
      %932 = vmatprep.subr.mxu0 0.0
      %933 = vmatpush1.msra.mxu0 %v632
      %934 = vmatprep.subr.mxu0 0.0
      %935 = vmatpush1.msra.mxu0 %v631
      %936 = vmatprep.subr.mxu0 0.0
      %937 = vmatpush1.msra.mxu0 %v630
      %938 = vmatprep.subr.mxu0 0.0
      %939 = vmatpush2.msra.mxu0 0.0
      %940 = vmatprep.subr.mxu0 0.0
      %941 = vmatpush2.msra.mxu0 0.0
      %942 = vmatprep.subr.mxu0 0.0
      %943 = vmatpush2.msra.mxu0 0.0
      %944 = vmatprep.subr.mxu0 0.0
      %945 = vmatpush2.msra.mxu0 0.0
      %946 = vmatprep.subr.mxu0 0.0
      %947 = vmatpush2.msra.mxu0 0.0
      %948 = vmatprep.subr.mxu0 0.0
      %949 = vmatpush2.msra.mxu0 0.0
      %950 = vmatprep.subr.mxu0 0.0
      %951 = vmatpush2.msra.mxu0 0.0
      %952 = vmatprep.subr.mxu0 0.0
      %953 = vmatpush2.msra.mxu0 0.0
      %954 = vmatprep.subr.mxu0 0.0
      %955 = vmatpush2.msra.mxu0 0.0
      %956 = vmatprep.subr.mxu0 0.0
      %957 = vmatpush2.msra.mxu0 0.0
      %958 = vmatprep.subr.mxu0 0.0
      %959 = vmatpush2.msra.mxu0 0.0
      %960 = vmatprep.subr.mxu0 0.0
      %961 = vmatpush2.msra.mxu0 0.0
      %962 = vmatprep.subr.mxu0 0.0
      %963 = vmatpush2.msra.mxu0 0.0
      %964 = vmatprep.subr.mxu0 0.0
      %965 = vmatpush2.msra.mxu0 0.0
      %966 = vmatprep.subr.mxu0 0.0
      %967 = vmatpush2.msra.mxu0 0.0
      %968 = vmatprep.subr.mxu0 0.0
      %969 = vmatpush2.msra.mxu0 0.0
      %970 = vmatprep.mubr.f32.mxu0 0.0
      %971 = vmatmul.mubr.f32.gmra.mxu0 %v694
      %v972 = vpop.f32.mrf.mxu0
      %v973 = vadd.f32 0.0, %v972
      %v974 = vpop.f32.mrf.mxu0
      %975 = vdwg.mxu0
      %976 = vmatprep.subr.mxu0 0.0
      %977 = vmatpush1.msra.mxu0 0.0
      %978 = vmatprep.subr.mxu0 0.0
      %979 = vmatpush1.msra.mxu0 0.0
      %980 = vmatprep.subr.mxu0 0.0
      %981 = vmatpush1.msra.mxu0 0.0
      %982 = vmatprep.subr.mxu0 0.0
      %983 = vmatpush1.msra.mxu0 0.0
      %984 = vmatprep.subr.mxu0 0.0
      %985 = vmatpush1.msra.mxu0 0.0
      %986 = vmatprep.subr.mxu0 0.0
      %987 = vmatpush1.msra.mxu0 0.0
      %988 = vmatprep.subr.mxu0 0.0
      %989 = vmatpush1.msra.mxu0 0.0
      %990 = vmatprep.subr.mxu0 0.0
      %991 = vmatpush1.msra.mxu0 0.0
      %992 = vmatprep.subr.mxu0 0.0
      %993 = vmatpush1.msra.mxu0 0.0
      %994 = vmatprep.subr.mxu0 0.0
      %995 = vmatpush1.msra.mxu0 0.0
      %996 = vmatprep.subr.mxu0 0.0
      %997 = vmatpush1.msra.mxu0 0.0
      %998 = vmatprep.subr.mxu0 0.0
      %999 = vmatpush1.msra.mxu0 0.0
      %1000 = vmatprep.subr.mxu0 0.0
      %1001 = vmatpush1.msra.mxu0 %v637
      %1002 = vmatprep.subr.mxu0 0.0
      %1003 = vmatpush1.msra.mxu0 %v636
      %1004 = vmatprep.subr.mxu0 0.0
      %1005 = vmatpush1.msra.mxu0 %v635
      %1006 = vmatprep.subr.mxu0 0.0
      %1007 = vmatpush1.msra.mxu0 %v634
      %1008 = vmatprep.subr.mxu0 0.0
      %1009 = vmatpush2.msra.mxu0 0.0
      %1010 = vmatprep.subr.mxu0 0.0
      %1011 = vmatpush2.msra.mxu0 0.0
      %1012 = vmatprep.subr.mxu0 0.0
      %1013 = vmatpush2.msra.mxu0 0.0
      %1014 = vmatprep.subr.mxu0 0.0
      %1015 = vmatpush2.msra.mxu0 0.0
      %1016 = vmatprep.subr.mxu0 0.0
      %1017 = vmatpush2.msra.mxu0 0.0
      %1018 = vmatprep.subr.mxu0 0.0
      %1019 = vmatpush2.msra.mxu0 0.0
      %1020 = vmatprep.subr.mxu0 0.0
      %1021 = vmatpush2.msra.mxu0 0.0
      %1022 = vmatprep.subr.mxu0 0.0
      %1023 = vmatpush2.msra.mxu0 0.0
      %1024 = vmatprep.subr.mxu0 0.0
      %1025 = vmatpush2.msra.mxu0 0.0
      %1026 = vmatprep.subr.mxu0 0.0
      %1027 = vmatpush2.msra.mxu0 0.0
      %1028 = vmatprep.subr.mxu0 0.0
      %1029 = vmatpush2.msra.mxu0 0.0
      %1030 = vmatprep.subr.mxu0 0.0
      %1031 = vmatpush2.msra.mxu0 0.0
      %1032 = vmatprep.subr.mxu0 0.0
      %1033 = vmatpush2.msra.mxu0 0.0
      %1034 = vmatprep.subr.mxu0 0.0
      %1035 = vmatpush2.msra.mxu0 0.0
      %1036 = vmatprep.subr.mxu0 0.0
      %1037 = vmatpush2.msra.mxu0 0.0
      %1038 = vmatprep.subr.mxu0 0.0
      %1039 = vmatpush2.msra.mxu0 0.0
      %1040 = vmatprep.mubr.f32.mxu0 0.0
      %1041 = vmatmul.mubr.f32.gmra.mxu0 %v694
      %v1042 = vpop.f32.mrf.mxu0
      %v1043 = vadd.f32 0.0, %v1042
      %v1044 = vpop.f32.mrf.mxu0
      %1045 = vdwg.mxu0
      %1046 = vmatprep.subr.mxu0 0.0
      %1047 = vmatpush1.msra.mxu0 0.0
      %1048 = vmatprep.subr.mxu0 0.0
      %1049 = vmatpush1.msra.mxu0 0.0
      %1050 = vmatprep.subr.mxu0 0.0
      %1051 = vmatpush1.msra.mxu0 0.0
      %1052 = vmatprep.subr.mxu0 0.0
      %1053 = vmatpush1.msra.mxu0 0.0
      %1054 = vmatprep.subr.mxu0 0.0
      %1055 = vmatpush1.msra.mxu0 0.0
      %1056 = vmatprep.subr.mxu0 0.0
      %1057 = vmatpush1.msra.mxu0 0.0
      %1058 = vmatprep.subr.mxu0 0.0
      %1059 = vmatpush1.msra.mxu0 0.0
      %1060 = vmatprep.subr.mxu0 0.0
      %1061 = vmatpush1.msra.mxu0 0.0
      %1062 = vmatprep.subr.mxu0 0.0
      %1063 = vmatpush1.msra.mxu0 0.0
      %1064 = vmatprep.subr.mxu0 0.0
      %1065 = vmatpush1.msra.mxu0 0.0
      %1066 = vmatprep.subr.mxu0 0.0
      %1067 = vmatpush1.msra.mxu0 0.0
      %1068 = vmatprep.subr.mxu0 0.0
      %1069 = vmatpush1.msra.mxu0 0.0
      %1070 = vmatprep.subr.mxu0 0.0
      %1071 = vmatpush1.msra.mxu0 %v641
      %1072 = vmatprep.subr.mxu0 0.0
      %1073 = vmatpush1.msra.mxu0 %v640
      %1074 = vmatprep.subr.mxu0 0.0
      %1075 = vmatpush1.msra.mxu0 %v639
      %1076 = vmatprep.subr.mxu0 0.0
      %1077 = vmatpush1.msra.mxu0 %v638
      %1078 = vmatprep.subr.mxu0 0.0
      %1079 = vmatpush2.msra.mxu0 0.0
      %1080 = vmatprep.subr.mxu0 0.0
      %1081 = vmatpush2.msra.mxu0 0.0
      %1082 = vmatprep.subr.mxu0 0.0
      %1083 = vmatpush2.msra.mxu0 0.0
      %1084 = vmatprep.subr.mxu0 0.0
      %1085 = vmatpush2.msra.mxu0 0.0
      %1086 = vmatprep.subr.mxu0 0.0
      %1087 = vmatpush2.msra.mxu0 0.0
      %1088 = vmatprep.subr.mxu0 0.0
      %1089 = vmatpush2.msra.mxu0 0.0
      %1090 = vmatprep.subr.mxu0 0.0
      %1091 = vmatpush2.msra.mxu0 0.0
      %1092 = vmatprep.subr.mxu0 0.0
      %1093 = vmatpush2.msra.mxu0 0.0
      %1094 = vmatprep.subr.mxu0 0.0
      %1095 = vmatpush2.msra.mxu0 0.0
      %1096 = vmatprep.subr.mxu0 0.0
      %1097 = vmatpush2.msra.mxu0 0.0
      %1098 = vmatprep.subr.mxu0 0.0
      %1099 = vmatpush2.msra.mxu0 0.0
      %1100 = vmatprep.subr.mxu0 0.0
      %1101 = vmatpush2.msra.mxu0 0.0
      %1102 = vmatprep.subr.mxu0 0.0
      %1103 = vmatpush2.msra.mxu0 0.0
      %1104 = vmatprep.subr.mxu0 0.0
      %1105 = vmatpush2.msra.mxu0 0.0
      %1106 = vmatprep.subr.mxu0 0.0
      %1107 = vmatpush2.msra.mxu0 0.0
      %1108 = vmatprep.subr.mxu0 0.0
      %1109 = vmatpush2.msra.mxu0 0.0
      %1110 = vmatprep.mubr.f32.mxu0 0.0
      %1111 = vmatmul.mubr.f32.gmra.mxu0 %v694
      %v1112 = vpop.f32.mrf.mxu0
      %v1113 = vadd.f32 0.0, %v1112
      %v1114 = vpop.f32.mrf.mxu0
      %1115 = vdwg.mxu0
      %vm1116 = vcmask 130048
      %v1118 = vsel %vm1116, %v763, 0
      %v1121 = vsel %vm1116, %v903, 0
      %1123 = vmatprep.subr.mxu0 0.0
      %1124 = vmatpush1.xpose.msra.mxu0 0.0
      %1125 = vmatprep.subr.mxu0 0.0
      %1126 = vmatpush1.xpose.msra.mxu0 0.0
      %1127 = vmatprep.subr.mxu0 0.0
      %1128 = vmatpush1.xpose.msra.mxu0 0.0
      %1129 = vmatprep.subr.mxu0 0.0
      %1130 = vmatpush1.xpose.msra.mxu0 0.0
      %1131 = vmatprep.subr.mxu0 0.0
      %1132 = vmatpush1.xpose.msra.mxu0 0.0
      %1133 = vmatprep.subr.mxu0 0.0
      %1134 = vmatpush1.xpose.msra.mxu0 0.0
      %1135 = vmatprep.subr.mxu0 0.0
      %1136 = vmatpush1.xpose.msra.mxu0 0.0
      %1137 = vmatprep.subr.mxu0 0.0
      %1138 = vmatpush1.xpose.msra.mxu0 0.0
      %1139 = vmatprep.subr.mxu0 0.0
      %1140 = vmatpush1.xpose.msra.mxu0 0.0
      %1141 = vmatprep.subr.mxu0 0.0
      %1142 = vmatpush1.xpose.msra.mxu0 0.0
      %1143 = vmatprep.subr.mxu0 0.0
      %1144 = vmatpush1.xpose.msra.mxu0 0.0
      %1145 = vmatprep.subr.mxu0 0.0
      %1146 = vmatpush1.xpose.msra.mxu0 0.0
      %1147 = vmatprep.subr.mxu0 0.0
      %1148 = vmatpush1.xpose.msra.mxu0 0.0
      %1149 = vmatprep.subr.mxu0 0.0
      %1150 = vmatpush1.xpose.msra.mxu0 0.0
      %1151 = vmatprep.subr.mxu0 0.0
      %1152 = vmatpush1.xpose.msra.mxu0 0.0
      %1153 = vmatprep.subr.mxu0 0.0
      %1154 = vmatpush1.xpose.msra.mxu0 %v1121
      %1155 = vmatprep.subr.mxu0 0.0
      %1156 = vmatpush2.xpose.msra.mxu0 0.0
      %1157 = vmatprep.subr.mxu0 0.0
      %1158 = vmatpush2.xpose.msra.mxu0 0.0
      %1159 = vmatprep.subr.mxu0 0.0
      %1160 = vmatpush2.xpose.msra.mxu0 0.0
      %1161 = vmatprep.subr.mxu0 0.0
      %1162 = vmatpush2.xpose.msra.mxu0 0.0
      %1163 = vmatprep.subr.mxu0 0.0
      %1164 = vmatpush2.xpose.msra.mxu0 0.0
      %1165 = vmatprep.subr.mxu0 0.0
      %1166 = vmatpush2.xpose.msra.mxu0 0.0
      %1167 = vmatprep.subr.mxu0 0.0
      %1168 = vmatpush2.xpose.msra.mxu0 0.0
      %1169 = vmatprep.subr.mxu0 0.0
      %1170 = vmatpush2.xpose.msra.mxu0 0.0
      %1171 = vmatprep.subr.mxu0 0.0
      %1172 = vmatpush2.xpose.msra.mxu0 0.0
      %1173 = vmatprep.subr.mxu0 0.0
      %1174 = vmatpush2.xpose.msra.mxu0 0.0
      %1175 = vmatprep.subr.mxu0 0.0
      %1176 = vmatpush2.xpose.msra.mxu0 0.0
      %1177 = vmatprep.subr.mxu0 0.0
      %1178 = vmatpush2.xpose.msra.mxu0 0.0
      %1179 = vmatprep.subr.mxu0 0.0
      %1180 = vmatpush2.xpose.msra.mxu0 0.0
      %1181 = vmatprep.subr.mxu0 0.0
      %1182 = vmatpush2.xpose.msra.mxu0 0.0
      %1183 = vmatprep.subr.mxu0 0.0
      %1184 = vmatpush2.xpose.msra.mxu0 0.0
      %1185 = vmatprep.subr.mxu0 0.0
      %1186 = vmatpush2.xpose.msra.mxu0 0.0
      %1187 = vmatprep.mubr.f32.mxu0 0.0
      %1188 = vmatmul.mubr.f32.gmra.mxu0 %v1118
      %v1189 = vpop.f32.mrf.mxu0
      %v1190 = vadd.f32 0.0, %v1189
      %v1191 = vpop.f32.mrf.mxu0
      %1192 = vdwg.mxu0
      %v1194 = vsel %vm1116, %v833, 0
      %v1197 = vsel %vm1116, %v973, 0
      %1199 = vmatprep.subr.mxu0 0.0
      %1200 = vmatpush1.xpose.msra.mxu0 0.0
      %1201 = vmatprep.subr.mxu0 0.0
      %1202 = vmatpush1.xpose.msra.mxu0 0.0
      %1203 = vmatprep.subr.mxu0 0.0
      %1204 = vmatpush1.xpose.msra.mxu0 0.0
      %1205 = vmatprep.subr.mxu0 0.0
      %1206 = vmatpush1.xpose.msra.mxu0 0.0
      %1207 = vmatprep.subr.mxu0 0.0
      %1208 = vmatpush1.xpose.msra.mxu0 0.0
      %1209 = vmatprep.subr.mxu0 0.0
      %1210 = vmatpush1.xpose.msra.mxu0 0.0
      %1211 = vmatprep.subr.mxu0 0.0
      %1212 = vmatpush1.xpose.msra.mxu0 0.0
      %1213 = vmatprep.subr.mxu0 0.0
      %1214 = vmatpush1.xpose.msra.mxu0 0.0
      %1215 = vmatprep.subr.mxu0 0.0
      %1216 = vmatpush1.xpose.msra.mxu0 0.0
      %1217 = vmatprep.subr.mxu0 0.0
      %1218 = vmatpush1.xpose.msra.mxu0 0.0
      %1219 = vmatprep.subr.mxu0 0.0
      %1220 = vmatpush1.xpose.msra.mxu0 0.0
      %1221 = vmatprep.subr.mxu0 0.0
      %1222 = vmatpush1.xpose.msra.mxu0 0.0
      %1223 = vmatprep.subr.mxu0 0.0
      %1224 = vmatpush1.xpose.msra.mxu0 0.0
      %1225 = vmatprep.subr.mxu0 0.0
      %1226 = vmatpush1.xpose.msra.mxu0 0.0
      %1227 = vmatprep.subr.mxu0 0.0
      %1228 = vmatpush1.xpose.msra.mxu0 0.0
      %1229 = vmatprep.subr.mxu0 0.0
      %1230 = vmatpush1.xpose.msra.mxu0 %v1197
      %1231 = vmatprep.subr.mxu0 0.0
      %1232 = vmatpush2.xpose.msra.mxu0 0.0
      %1233 = vmatprep.subr.mxu0 0.0
      %1234 = vmatpush2.xpose.msra.mxu0 0.0
      %1235 = vmatprep.subr.mxu0 0.0
      %1236 = vmatpush2.xpose.msra.mxu0 0.0
      %1237 = vmatprep.subr.mxu0 0.0
      %1238 = vmatpush2.xpose.msra.mxu0 0.0
      %1239 = vmatprep.subr.mxu0 0.0
      %1240 = vmatpush2.xpose.msra.mxu0 0.0
      %1241 = vmatprep.subr.mxu0 0.0
      %1242 = vmatpush2.xpose.msra.mxu0 0.0
      %1243 = vmatprep.subr.mxu0 0.0
      %1244 = vmatpush2.xpose.msra.mxu0 0.0
      %1245 = vmatprep.subr.mxu0 0.0
      %1246 = vmatpush2.xpose.msra.mxu0 0.0
      %1247 = vmatprep.subr.mxu0 0.0
      %1248 = vmatpush2.xpose.msra.mxu0 0.0
      %1249 = vmatprep.subr.mxu0 0.0
      %1250 = vmatpush2.xpose.msra.mxu0 0.0
      %1251 = vmatprep.subr.mxu0 0.0
      %1252 = vmatpush2.xpose.msra.mxu0 0.0
      %1253 = vmatprep.subr.mxu0 0.0
      %1254 = vmatpush2.xpose.msra.mxu0 0.0
      %1255 = vmatprep.subr.mxu0 0.0
      %1256 = vmatpush2.xpose.msra.mxu0 0.0
      %1257 = vmatprep.subr.mxu0 0.0
      %1258 = vmatpush2.xpose.msra.mxu0 0.0
      %1259 = vmatprep.subr.mxu0 0.0
      %1260 = vmatpush2.xpose.msra.mxu0 0.0
      %1261 = vmatprep.subr.mxu0 0.0
      %1262 = vmatpush2.xpose.msra.mxu0 0.0
      %1263 = vmatprep.mubr.f32.mxu0 0.0
      %1264 = vmatmul.mubr.f32.gmra.mxu0 %v1194
      %v1265 = vpop.f32.mrf.mxu0
      %v1266 = vadd.f32 0.0, %v1265
      %v1267 = vpop.f32.mrf.mxu0
      %1268 = vdwg.mxu0
      %v1269 = vmul.f32 %v1190, 0.25
      %v1270 = vmul.f32 %v1266, 0.25
      %vm1271 = vcmask 18432
      %v1272 = vsel %vm1271, %v1269, -inf
      %1273 = vmax.xlane.f32.xlu0 %v1272
      %v1274 = vpop.xlane.xlu0 %1273
      %v1275 = vsel %vm1271, %v1270, -inf
      %1276 = vmax.xlane.f32.xlu0 %v1275
      %v1277 = vpop.xlane.xlu0 %1276
      %v1278 = vsub.f32 %v1269, %v1274
      %v1279 = vsub.f32 %v1270, %v1277
      %v1280 = vmul.f32 %v1278, 1.442695
      %v1281 = vpow.pop %v1280
      %v1282 = vmul.f32 %v1279, 1.442695
      %v1283 = vpow.pop %v1282
      %v1284 = vsel %vm1271, %v1281, 0.0
      %1285 = vadd.xlane.f32.xlu0 %v1284
      %v1286 = vpop.xlane.xlu0 %1285
      %v1287 = vsel %vm1271, %v1283, 0.0
      %1288 = vadd.xlane.f32.xlu0 %v1287
      %v1289 = vpop.xlane.xlu0 %1288
      %v1290 = vrcp.pop %v1286
      %v1291 = vmul.f32 %v1281, %v1290
      %v1292 = vrcp.pop %v1289
      %v1293 = vmul.f32 %v1283, %v1292
      %vm1294 = vcmask 23552
      %v1296 = vsel %vm1294, %v1291, 0
      %vm1298 = vcmask 1042432
      %v1300 = vsel %vm1298, %v1043, 0
      %1302 = vmatprep.subr.mxu0 0.0
      %1303 = vmatpush1.msra.mxu0 0.0
      %1304 = vmatprep.subr.mxu0 0.0
      %1305 = vmatpush1.msra.mxu0 0.0
      %1306 = vmatprep.subr.mxu0 0.0
      %1307 = vmatpush1.msra.mxu0 0.0
      %1308 = vmatprep.subr.mxu0 0.0
      %1309 = vmatpush1.msra.mxu0 0.0
      %1310 = vmatprep.subr.mxu0 0.0
      %1311 = vmatpush1.msra.mxu0 0.0
      %1312 = vmatprep.subr.mxu0 0.0
      %1313 = vmatpush1.msra.mxu0 0.0
      %1314 = vmatprep.subr.mxu0 0.0
      %1315 = vmatpush1.msra.mxu0 0.0
      %1316 = vmatprep.subr.mxu0 0.0
      %1317 = vmatpush1.msra.mxu0 0.0
      %1318 = vmatprep.subr.mxu0 0.0
      %1319 = vmatpush1.msra.mxu0 0.0
      %1320 = vmatprep.subr.mxu0 0.0
      %1321 = vmatpush1.msra.mxu0 0.0
      %1322 = vmatprep.subr.mxu0 0.0
      %1323 = vmatpush1.msra.mxu0 0.0
      %1324 = vmatprep.subr.mxu0 0.0
      %1325 = vmatpush1.msra.mxu0 0.0
      %1326 = vmatprep.subr.mxu0 0.0
      %1327 = vmatpush1.msra.mxu0 0.0
      %1328 = vmatprep.subr.mxu0 0.0
      %1329 = vmatpush1.msra.mxu0 0.0
      %1330 = vmatprep.subr.mxu0 0.0
      %1331 = vmatpush1.msra.mxu0 0.0
      %1332 = vmatprep.subr.mxu0 0.0
      %1333 = vmatpush1.msra.mxu0 %v1300
      %1334 = vmatprep.subr.mxu0 0.0
      %1335 = vmatpush2.msra.mxu0 0.0
      %1336 = vmatprep.subr.mxu0 0.0
      %1337 = vmatpush2.msra.mxu0 0.0
      %1338 = vmatprep.subr.mxu0 0.0
      %1339 = vmatpush2.msra.mxu0 0.0
      %1340 = vmatprep.subr.mxu0 0.0
      %1341 = vmatpush2.msra.mxu0 0.0
      %1342 = vmatprep.subr.mxu0 0.0
      %1343 = vmatpush2.msra.mxu0 0.0
      %1344 = vmatprep.subr.mxu0 0.0
      %1345 = vmatpush2.msra.mxu0 0.0
      %1346 = vmatprep.subr.mxu0 0.0
      %1347 = vmatpush2.msra.mxu0 0.0
      %1348 = vmatprep.subr.mxu0 0.0
      %1349 = vmatpush2.msra.mxu0 0.0
      %1350 = vmatprep.subr.mxu0 0.0
      %1351 = vmatpush2.msra.mxu0 0.0
      %1352 = vmatprep.subr.mxu0 0.0
      %1353 = vmatpush2.msra.mxu0 0.0
      %1354 = vmatprep.subr.mxu0 0.0
      %1355 = vmatpush2.msra.mxu0 0.0
      %1356 = vmatprep.subr.mxu0 0.0
      %1357 = vmatpush2.msra.mxu0 0.0
      %1358 = vmatprep.subr.mxu0 0.0
      %1359 = vmatpush2.msra.mxu0 0.0
      %1360 = vmatprep.subr.mxu0 0.0
      %1361 = vmatpush2.msra.mxu0 0.0
      %1362 = vmatprep.subr.mxu0 0.0
      %1363 = vmatpush2.msra.mxu0 0.0
      %1364 = vmatprep.subr.mxu0 0.0
      %1365 = vmatpush2.msra.mxu0 0.0
      %1366 = vmatprep.mubr.f32.mxu0 0.0
      %1367 = vmatmul.mubr.f32.gmra.mxu0 %v1296
      %v1368 = vpop.f32.mrf.mxu0
      %v1369 = vadd.f32 0.0, %v1368
      %v1370 = vpop.f32.mrf.mxu0
      %1371 = vdwg.mxu0
      %v1373 = vsel %vm1294, %v1293, 0
      %v1376 = vsel %vm1298, %v1113, 0
      %1378 = vmatprep.subr.mxu0 0.0
      %1379 = vmatpush1.msra.mxu0 0.0
      %1380 = vmatprep.subr.mxu0 0.0
      %1381 = vmatpush1.msra.mxu0 0.0
      %1382 = vmatprep.subr.mxu0 0.0
      %1383 = vmatpush1.msra.mxu0 0.0
      %1384 = vmatprep.subr.mxu0 0.0
      %1385 = vmatpush1.msra.mxu0 0.0
      %1386 = vmatprep.subr.mxu0 0.0
      %1387 = vmatpush1.msra.mxu0 0.0
      %1388 = vmatprep.subr.mxu0 0.0
      %1389 = vmatpush1.msra.mxu0 0.0
      %1390 = vmatprep.subr.mxu0 0.0
      %1391 = vmatpush1.msra.mxu0 0.0
      %1392 = vmatprep.subr.mxu0 0.0
      %1393 = vmatpush1.msra.mxu0 0.0
      %1394 = vmatprep.subr.mxu0 0.0
      %1395 = vmatpush1.msra.mxu0 0.0
      %1396 = vmatprep.subr.mxu0 0.0
      %1397 = vmatpush1.msra.mxu0 0.0
      %1398 = vmatprep.subr.mxu0 0.0
      %1399 = vmatpush1.msra.mxu0 0.0
      %1400 = vmatprep.subr.mxu0 0.0
      %1401 = vmatpush1.msra.mxu0 0.0
      %1402 = vmatprep.subr.mxu0 0.0
      %1403 = vmatpush1.msra.mxu0 0.0
      %1404 = vmatprep.subr.mxu0 0.0
      %1405 = vmatpush1.msra.mxu0 0.0
      %1406 = vmatprep.subr.mxu0 0.0
      %1407 = vmatpush1.msra.mxu0 0.0
      %1408 = vmatprep.subr.mxu0 0.0
      %1409 = vmatpush1.msra.mxu0 %v1376
      %1410 = vmatprep.subr.mxu0 0.0
      %1411 = vmatpush2.msra.mxu0 0.0
      %1412 = vmatprep.subr.mxu0 0.0
      %1413 = vmatpush2.msra.mxu0 0.0
      %1414 = vmatprep.subr.mxu0 0.0
      %1415 = vmatpush2.msra.mxu0 0.0
      %1416 = vmatprep.subr.mxu0 0.0
      %1417 = vmatpush2.msra.mxu0 0.0
      %1418 = vmatprep.subr.mxu0 0.0
      %1419 = vmatpush2.msra.mxu0 0.0
      %1420 = vmatprep.subr.mxu0 0.0
      %1421 = vmatpush2.msra.mxu0 0.0
      %1422 = vmatprep.subr.mxu0 0.0
      %1423 = vmatpush2.msra.mxu0 0.0
      %1424 = vmatprep.subr.mxu0 0.0
      %1425 = vmatpush2.msra.mxu0 0.0
      %1426 = vmatprep.subr.mxu0 0.0
      %1427 = vmatpush2.msra.mxu0 0.0
      %1428 = vmatprep.subr.mxu0 0.0
      %1429 = vmatpush2.msra.mxu0 0.0
      %1430 = vmatprep.subr.mxu0 0.0
      %1431 = vmatpush2.msra.mxu0 0.0
      %1432 = vmatprep.subr.mxu0 0.0
      %1433 = vmatpush2.msra.mxu0 0.0
      %1434 = vmatprep.subr.mxu0 0.0
      %1435 = vmatpush2.msra.mxu0 0.0
      %1436 = vmatprep.subr.mxu0 0.0
      %1437 = vmatpush2.msra.mxu0 0.0
      %1438 = vmatprep.subr.mxu0 0.0
      %1439 = vmatpush2.msra.mxu0 0.0
      %1440 = vmatprep.subr.mxu0 0.0
      %1441 = vmatpush2.msra.mxu0 0.0
      %1442 = vmatprep.mubr.f32.mxu0 0.0
      %1443 = vmatmul.mubr.f32.gmra.mxu0 %v1373
      %v1444 = vpop.f32.mrf.mxu0
      %v1445 = vadd.f32 0.0, %v1444
      %v1446 = vpop.f32.mrf.mxu0
      %1447 = vdwg.mxu0
      %v1449 = vsel %vm1116, %v1369, 0
      %1451 = vmatprep.subr.mxu0 0.0
      %1452 = vmatpush1.msra.mxu0 0.0
      %1453 = vmatprep.subr.mxu0 0.0
      %1454 = vmatpush1.msra.mxu0 0.0
      %1455 = vmatprep.subr.mxu0 0.0
      %1456 = vmatpush1.msra.mxu0 0.0
      %1457 = vmatprep.subr.mxu0 0.0
      %1458 = vmatpush1.msra.mxu0 0.0
      %1459 = vmatprep.subr.mxu0 0.0
      %1460 = vmatpush1.msra.mxu0 0.0
      %1461 = vmatprep.subr.mxu0 0.0
      %1462 = vmatpush1.msra.mxu0 0.0
      %1463 = vmatprep.subr.mxu0 0.0
      %1464 = vmatpush1.msra.mxu0 0.0
      %1465 = vmatprep.subr.mxu0 0.0
      %1466 = vmatpush1.msra.mxu0 0.0
      %1467 = vmatprep.subr.mxu0 0.0
      %1468 = vmatpush1.msra.mxu0 0.0
      %1469 = vmatprep.subr.mxu0 0.0
      %1470 = vmatpush1.msra.mxu0 0.0
      %1471 = vmatprep.subr.mxu0 0.0
      %1472 = vmatpush1.msra.mxu0 0.0
      %1473 = vmatprep.subr.mxu0 0.0
      %1474 = vmatpush1.msra.mxu0 0.0
      %1475 = vmatprep.subr.mxu0 0.0
      %1476 = vmatpush1.msra.mxu0 0.0
      %1477 = vmatprep.subr.mxu0 0.0
      %1478 = vmatpush1.msra.mxu0 0.0
      %1479 = vmatprep.subr.mxu0 0.0
      %1480 = vmatpush1.msra.mxu0 %v643
      %1481 = vmatprep.subr.mxu0 0.0
      %1482 = vmatpush1.msra.mxu0 %v642
      %1483 = vmatprep.subr.mxu0 0.0
      %1484 = vmatpush2.msra.mxu0 0.0
      %1485 = vmatprep.subr.mxu0 0.0
      %1486 = vmatpush2.msra.mxu0 0.0
      %1487 = vmatprep.subr.mxu0 0.0
      %1488 = vmatpush2.msra.mxu0 0.0
      %1489 = vmatprep.subr.mxu0 0.0
      %1490 = vmatpush2.msra.mxu0 0.0
      %1491 = vmatprep.subr.mxu0 0.0
      %1492 = vmatpush2.msra.mxu0 0.0
      %1493 = vmatprep.subr.mxu0 0.0
      %1494 = vmatpush2.msra.mxu0 0.0
      %1495 = vmatprep.subr.mxu0 0.0
      %1496 = vmatpush2.msra.mxu0 0.0
      %1497 = vmatprep.subr.mxu0 0.0
      %1498 = vmatpush2.msra.mxu0 0.0
      %1499 = vmatprep.subr.mxu0 0.0
      %1500 = vmatpush2.msra.mxu0 0.0
      %1501 = vmatprep.subr.mxu0 0.0
      %1502 = vmatpush2.msra.mxu0 0.0
      %1503 = vmatprep.subr.mxu0 0.0
      %1504 = vmatpush2.msra.mxu0 0.0
      %1505 = vmatprep.subr.mxu0 0.0
      %1506 = vmatpush2.msra.mxu0 0.0
      %1507 = vmatprep.subr.mxu0 0.0
      %1508 = vmatpush2.msra.mxu0 0.0
      %1509 = vmatprep.subr.mxu0 0.0
      %1510 = vmatpush2.msra.mxu0 0.0
      %1511 = vmatprep.subr.mxu0 0.0
      %1512 = vmatpush2.msra.mxu0 0.0
      %1513 = vmatprep.subr.mxu0 0.0
      %1514 = vmatpush2.msra.mxu0 0.0
      %1515 = vmatprep.mubr.f32.mxu0 0.0
      %1516 = vmatmul.mubr.f32.gmra.mxu0 %v1449
      %v1517 = vpop.f32.mrf.mxu0
      %v1518 = vadd.f32 0.0, %v1517
      %v1519 = vpop.f32.mrf.mxu0
      %1520 = vdwg.mxu0
      %v1522 = vsel %vm1116, %v1445, 0
      %1524 = vmatprep.subr.mxu0 0.0
      %1525 = vmatpush1.msra.mxu0 0.0
      %1526 = vmatprep.subr.mxu0 0.0
      %1527 = vmatpush1.msra.mxu0 0.0
      %1528 = vmatprep.subr.mxu0 0.0
      %1529 = vmatpush1.msra.mxu0 0.0
      %1530 = vmatprep.subr.mxu0 0.0
      %1531 = vmatpush1.msra.mxu0 0.0
      %1532 = vmatprep.subr.mxu0 0.0
      %1533 = vmatpush1.msra.mxu0 0.0
      %1534 = vmatprep.subr.mxu0 0.0
      %1535 = vmatpush1.msra.mxu0 0.0
      %1536 = vmatprep.subr.mxu0 0.0
      %1537 = vmatpush1.msra.mxu0 0.0
      %1538 = vmatprep.subr.mxu0 0.0
      %1539 = vmatpush1.msra.mxu0 0.0
      %1540 = vmatprep.subr.mxu0 0.0
      %1541 = vmatpush1.msra.mxu0 0.0
      %1542 = vmatprep.subr.mxu0 0.0
      %1543 = vmatpush1.msra.mxu0 0.0
      %1544 = vmatprep.subr.mxu0 0.0
      %1545 = vmatpush1.msra.mxu0 0.0
      %1546 = vmatprep.subr.mxu0 0.0
      %1547 = vmatpush1.msra.mxu0 0.0
      %1548 = vmatprep.subr.mxu0 0.0
      %1549 = vmatpush1.msra.mxu0 0.0
      %1550 = vmatprep.subr.mxu0 0.0
      %1551 = vmatpush1.msra.mxu0 0.0
      %1552 = vmatprep.subr.mxu0 0.0
      %1553 = vmatpush1.msra.mxu0 %v645
      %1554 = vmatprep.subr.mxu0 0.0
      %1555 = vmatpush1.msra.mxu0 %v644
      %1556 = vmatprep.subr.mxu0 0.0
      %1557 = vmatpush2.msra.mxu0 0.0
      %1558 = vmatprep.subr.mxu0 0.0
      %1559 = vmatpush2.msra.mxu0 0.0
      %1560 = vmatprep.subr.mxu0 0.0
      %1561 = vmatpush2.msra.mxu0 0.0
      %1562 = vmatprep.subr.mxu0 0.0
      %1563 = vmatpush2.msra.mxu0 0.0
      %1564 = vmatprep.subr.mxu0 0.0
      %1565 = vmatpush2.msra.mxu0 0.0
      %1566 = vmatprep.subr.mxu0 0.0
      %1567 = vmatpush2.msra.mxu0 0.0
      %1568 = vmatprep.subr.mxu0 0.0
      %1569 = vmatpush2.msra.mxu0 0.0
      %1570 = vmatprep.subr.mxu0 0.0
      %1571 = vmatpush2.msra.mxu0 0.0
      %1572 = vmatprep.subr.mxu0 0.0
      %1573 = vmatpush2.msra.mxu0 0.0
      %1574 = vmatprep.subr.mxu0 0.0
      %1575 = vmatpush2.msra.mxu0 0.0
      %1576 = vmatprep.subr.mxu0 0.0
      %1577 = vmatpush2.msra.mxu0 0.0
      %1578 = vmatprep.subr.mxu0 0.0
      %1579 = vmatpush2.msra.mxu0 0.0
      %1580 = vmatprep.subr.mxu0 0.0
      %1581 = vmatpush2.msra.mxu0 0.0
      %1582 = vmatprep.subr.mxu0 0.0
      %1583 = vmatpush2.msra.mxu0 0.0
      %1584 = vmatprep.subr.mxu0 0.0
      %1585 = vmatpush2.msra.mxu0 0.0
      %1586 = vmatprep.subr.mxu0 0.0
      %1587 = vmatpush2.msra.mxu0 0.0
      %1588 = vmatprep.mubr.f32.mxu0 0.0
      %1589 = vmatmul.mubr.f32.gmra.mxu0 %v1522
      %v1590 = vpop.f32.mrf.mxu0
      %v1591 = vadd.f32 0.0, %v1590
      %v1592 = vpop.f32.mrf.mxu0
      %1593 = vdwg.mxu0
      %v1595 = vlaneseq
      %v1596 = vshrl.u32 %v1595, 7
      %v1597 = vsub.s32 0, %v1596
      %v1598 = vrot.slane %v646, %v1597
      %v1600 = vadd.f32 %v1598, %v1518
      %v1601 = vadd.f32 %v1600, %v1591
      %v1602 = vadd.f32 %v615, %v1601
      %v1603 = vsel %vm663, %v1602, 0.0
      %1604 = vadd.xlane.f32.xlu0 %v1603
      %v1605 = vpop.xlane.xlu0 %1604
      %v1606 = vmul.f32 %v1605, %v667
      %v1607 = vsub.f32 %v1602, %v1606
      %v1608 = vmul.f32 %v1607, %v1607
      %v1609 = vsel %vm663, %v1608, 0.0
      %1610 = vadd.xlane.f32.xlu0 %v1609
      %v1611 = vpop.xlane.xlu0 %1610
      %v1612 = vmul.f32 %v1611, %v667
      %v1613 = vadd.f32 %v1612, 1e-05
      %v1614 = vrsqrt.pop %v1613
      %v1615 = vmul.f32 %v1607, %v1614
      %v1617 = vlaneseq
      %v1618 = vshrl.u32 %v1617, 7
      %v1619 = vsub.s32 0, %v1618
      %v1620 = vrot.slane %v647, %v1619
      %v1622 = vmul.f32 %v1615, %v1620
      %v1624 = vlaneseq
      %v1625 = vshrl.u32 %v1624, 7
      %v1626 = vsub.s32 0, %v1625
      %v1627 = vrot.slane %v648, %v1626
      %v1629 = vadd.f32 %v1622, %v1627
      %v1631 = vlaneseq
      %v1632 = vshrl.u32 %v1631, 7
      %v1633 = vsub.s32 0, %v1632
      %v1634 = vrot.slane %v653, %v1633
      %v1637 = vsel %vm692, %v1629, 0
      %1639 = vmatprep.subr.mxu0 0.0
      %1640 = vmatpush1.msra.mxu0 0.0
      %1641 = vmatprep.subr.mxu0 0.0
      %1642 = vmatpush1.msra.mxu0 0.0
      %1643 = vmatprep.subr.mxu0 0.0
      %1644 = vmatpush1.msra.mxu0 0.0
      %1645 = vmatprep.subr.mxu0 0.0
      %1646 = vmatpush1.msra.mxu0 0.0
      %1647 = vmatprep.subr.mxu0 0.0
      %1648 = vmatpush1.msra.mxu0 0.0
      %1649 = vmatprep.subr.mxu0 0.0
      %1650 = vmatpush1.msra.mxu0 0.0
      %1651 = vmatprep.subr.mxu0 0.0
      %1652 = vmatpush1.msra.mxu0 0.0
      %1653 = vmatprep.subr.mxu0 0.0
      %1654 = vmatpush1.msra.mxu0 0.0
      %1655 = vmatprep.subr.mxu0 0.0
      %1656 = vmatpush1.msra.mxu0 0.0
      %1657 = vmatprep.subr.mxu0 0.0
      %1658 = vmatpush1.msra.mxu0 0.0
      %1659 = vmatprep.subr.mxu0 0.0
      %1660 = vmatpush1.msra.mxu0 0.0
      %1661 = vmatprep.subr.mxu0 0.0
      %1662 = vmatpush1.msra.mxu0 0.0
      %1663 = vmatprep.subr.mxu0 0.0
      %1664 = vmatpush1.msra.mxu0 %v652
      %1665 = vmatprep.subr.mxu0 0.0
      %1666 = vmatpush1.msra.mxu0 %v651
      %1667 = vmatprep.subr.mxu0 0.0
      %1668 = vmatpush1.msra.mxu0 %v650
      %1669 = vmatprep.subr.mxu0 0.0
      %1670 = vmatpush1.msra.mxu0 %v649
      %1671 = vmatprep.subr.mxu0 0.0
      %1672 = vmatpush2.msra.mxu0 0.0
      %1673 = vmatprep.subr.mxu0 0.0
      %1674 = vmatpush2.msra.mxu0 0.0
      %1675 = vmatprep.subr.mxu0 0.0
      %1676 = vmatpush2.msra.mxu0 0.0
      %1677 = vmatprep.subr.mxu0 0.0
      %1678 = vmatpush2.msra.mxu0 0.0
      %1679 = vmatprep.subr.mxu0 0.0
      %1680 = vmatpush2.msra.mxu0 0.0
      %1681 = vmatprep.subr.mxu0 0.0
      %1682 = vmatpush2.msra.mxu0 0.0
      %1683 = vmatprep.subr.mxu0 0.0
      %1684 = vmatpush2.msra.mxu0 0.0
      %1685 = vmatprep.subr.mxu0 0.0
      %1686 = vmatpush2.msra.mxu0 0.0
      %1687 = vmatprep.subr.mxu0 0.0
      %1688 = vmatpush2.msra.mxu0 0.0
      %1689 = vmatprep.subr.mxu0 0.0
      %1690 = vmatpush2.msra.mxu0 0.0
      %1691 = vmatprep.subr.mxu0 0.0
      %1692 = vmatpush2.msra.mxu0 0.0
      %1693 = vmatprep.subr.mxu0 0.0
      %1694 = vmatpush2.msra.mxu0 0.0
      %1695 = vmatprep.subr.mxu0 0.0
      %1696 = vmatpush2.msra.mxu0 0.0
      %1697 = vmatprep.subr.mxu0 0.0
      %1698 = vmatpush2.msra.mxu0 0.0
      %1699 = vmatprep.subr.mxu0 0.0
      %1700 = vmatpush2.msra.mxu0 0.0
      %1701 = vmatprep.subr.mxu0 0.0
      %1702 = vmatpush2.msra.mxu0 0.0
      %1703 = vmatprep.mubr.f32.mxu0 0.0
      %1704 = vmatmul.mubr.f32.gmra.mxu0 %v1637
      %v1705 = vpop.f32.mrf.mxu0
      %v1706 = vadd.f32 %v1634, %v1705
      %v1707 = vpop.f32.mrf.mxu0
      %1708 = vdwg.mxu0
      %v1709 = vmul.f32 %v1706, 0.5
      %v1710 = vmul.f32 %v1706, 0.70710677
      %v1711 = vand.u32 2147483647, %v1710
      %v1712 = vmul.f32 %v1711, 0.3275911
      %v1713 = vadd.f32 %v1712, 1.0
      %v1714 = vrcp.pop %v1713
      %v1715 = vmul.f32 1.0, %v1714
      %v1716 = vmul.f32 %v1715, 1.0614054
      %v1717 = vadd.f32 %v1716, -1.4531521
      %v1718 = vmul.f32 %v1717, %v1715
      %v1719 = vadd.f32 %v1718, 1.4214138
      %v1720 = vmul.f32 %v1719, %v1715
      %v1721 = vadd.f32 %v1720, -0.28449672
      %v1722 = vmul.f32 %v1721, %v1715
      %v1723 = vadd.f32 %v1722, 0.2548296
      %v1724 = vmul.f32 %v1723, %v1715
      %v1725 = vsub.f32 0.0, %v1711
      %v1726 = vmul.f32 %v1725, %v1711
      %v1727 = vmul.f32 %v1726, 1.442695
      %v1728 = vpow.pop %v1727
      %v1729 = vmul.f32 %v1724, %v1728
      %v1730 = vsub.f32 1.0, %v1729
      %vm1731 = vcmp.ge.f32.partialorder %v1710, 0.0
      %v1732 = vsub.f32 0.0, %v1730
      %v1733 = vsel %vm1731, %v1730, %v1732
      %v1734 = vadd.f32 %v1733, 1.0
      %v1735 = vmul.f32 %v1709, %v1734
      %vm1736 = vcmask 523264
      %v1738 = vsel %vm1736, %v1735, 0
      %1740 = vmatprep.subr.mxu0 0.0
      %1741 = vmatpush1.msra.mxu0 0.0
      %1742 = vmatprep.subr.mxu0 0.0
      %1743 = vmatpush1.msra.mxu0 0.0
      %1744 = vmatprep.subr.mxu0 0.0
      %1745 = vmatpush1.msra.mxu0 0.0
      %1746 = vmatprep.subr.mxu0 0.0
      %1747 = vmatpush1.msra.mxu0 0.0
      %1748 = vmatprep.subr.mxu0 0.0
      %1749 = vmatpush1.msra.mxu0 0.0
      %1750 = vmatprep.subr.mxu0 0.0
      %1751 = vmatpush1.msra.mxu0 0.0
      %1752 = vmatprep.subr.mxu0 0.0
      %1753 = vmatpush1.msra.mxu0 0.0
      %1754 = vmatprep.subr.mxu0 0.0
      %1755 = vmatpush1.msra.mxu0 0.0
      %1756 = vmatprep.subr.mxu0 0.0
      %1757 = vmatpush1.msra.mxu0 %v661
      %1758 = vmatprep.subr.mxu0 0.0
      %1759 = vmatpush1.msra.mxu0 %v660
      %1760 = vmatprep.subr.mxu0 0.0
      %1761 = vmatpush1.msra.mxu0 %v659
      %1762 = vmatprep.subr.mxu0 0.0
      %1763 = vmatpush1.msra.mxu0 %v658
      %1764 = vmatprep.subr.mxu0 0.0
      %1765 = vmatpush1.msra.mxu0 %v657
      %1766 = vmatprep.subr.mxu0 0.0
      %1767 = vmatpush1.msra.mxu0 %v656
      %1768 = vmatprep.subr.mxu0 0.0
      %1769 = vmatpush1.msra.mxu0 %v655
      %1770 = vmatprep.subr.mxu0 0.0
      %1771 = vmatpush1.msra.mxu0 %v654
      %1772 = vmatprep.subr.mxu0 0.0
      %1773 = vmatpush2.msra.mxu0 0.0
      %1774 = vmatprep.subr.mxu0 0.0
      %1775 = vmatpush2.msra.mxu0 0.0
      %1776 = vmatprep.subr.mxu0 0.0
      %1777 = vmatpush2.msra.mxu0 0.0
      %1778 = vmatprep.subr.mxu0 0.0
      %1779 = vmatpush2.msra.mxu0 0.0
      %1780 = vmatprep.subr.mxu0 0.0
      %1781 = vmatpush2.msra.mxu0 0.0
      %1782 = vmatprep.subr.mxu0 0.0
      %1783 = vmatpush2.msra.mxu0 0.0
      %1784 = vmatprep.subr.mxu0 0.0
      %1785 = vmatpush2.msra.mxu0 0.0
      %1786 = vmatprep.subr.mxu0 0.0
      %1787 = vmatpush2.msra.mxu0 0.0
      %1788 = vmatprep.subr.mxu0 0.0
      %1789 = vmatpush2.msra.mxu0 0.0
      %1790 = vmatprep.subr.mxu0 0.0
      %1791 = vmatpush2.msra.mxu0 0.0
      %1792 = vmatprep.subr.mxu0 0.0
      %1793 = vmatpush2.msra.mxu0 0.0
      %1794 = vmatprep.subr.mxu0 0.0
      %1795 = vmatpush2.msra.mxu0 0.0
      %1796 = vmatprep.subr.mxu0 0.0
      %1797 = vmatpush2.msra.mxu0 0.0
      %1798 = vmatprep.subr.mxu0 0.0
      %1799 = vmatpush2.msra.mxu0 0.0
      %1800 = vmatprep.subr.mxu0 0.0
      %1801 = vmatpush2.msra.mxu0 0.0
      %1802 = vmatprep.subr.mxu0 0.0
      %1803 = vmatpush2.msra.mxu0 0.0
      %1804 = vmatprep.mubr.f32.mxu0 0.0
      %1805 = vmatmul.mubr.f32.gmra.mxu0 %v1738
      %v1806 = vpop.f32.mrf.mxu0
      %v1807 = vadd.f32 0.0, %v1806
      %v1808 = vpop.f32.mrf.mxu0
      %1809 = vdwg.mxu0
      %v1810 = vadd.f32 %v1602, %v1807
      %v1812 = vlaneseq
      %v1813 = vshrl.u32 %v1812, 7
      %v1814 = vsub.s32 0, %v1813
      %v1815 = vrot.slane %v662, %v1814
      %v1817 = vadd.f32 %v1810, %v1815
      %v1818 = vld [vmem:[%s15] sm:$0x1]
      %v1819 = vld [vmem:[%s16] sm:$0x1]
      %v1820 = vsel %vm663, %v1817, 0.0
      %1821 = vadd.xlane.f32.xlu0 %v1820
      %v1822 = vpop.xlane.xlu0 %1821
      %v1823 = vmul.f32 %v1822, %v667
      %v1824 = vsub.f32 %v1817, %v1823
      %v1825 = vmul.f32 %v1824, %v1824
      %v1826 = vsel %vm663, %v1825, 0.0
      %1827 = vadd.xlane.f32.xlu0 %v1826
      %v1828 = vpop.xlane.xlu0 %1827
      %v1829 = vmul.f32 %v1828, %v667
      %v1830 = vadd.f32 %v1829, 1e-05
      %v1831 = vrsqrt.pop %v1830
      %v1832 = vmul.f32 %v1824, %v1831
      %v1834 = vlaneseq
      %v1835 = vshrl.u32 %v1834, 7
      %v1836 = vsub.s32 0, %v1835
      %v1837 = vrot.slane %v1818, %v1836
      %v1839 = vmul.f32 %v1832, %v1837
      %v1841 = vlaneseq
      %v1842 = vshrl.u32 %v1841, 7
      %v1843 = vsub.s32 0, %v1842
      %v1844 = vrot.slane %v1819, %v1843
      %v1846 = vadd.f32 %v1839, %v1844
      %v1847 = vld [vmem:[%s17] sm:$0xff]
      %v1848 = vld [vmem:[%s17 + $0x8] sm:$0xff]
      %v1849 = vld [vmem:[%s17 + $0x10] sm:$0xff]
      %v1850 = vld [vmem:[%s17 + $0x18] sm:$0xff]
      %v1851 = vld [vmem:[%s18] sm:$0x1]
      %v1853 = vlaneseq
      %v1854 = vshrl.u32 %v1853, 7
      %v1855 = vsub.s32 0, %v1854
      %v1856 = vrot.slane %v1851, %v1855
      %v1859 = vsel %vm692, %v1846, 0
      %1861 = vmatprep.subr.mxu0 0.0
      %1862 = vmatpush1.msra.mxu0 0.0
      %1863 = vmatprep.subr.mxu0 0.0
      %1864 = vmatpush1.msra.mxu0 0.0
      %1865 = vmatprep.subr.mxu0 0.0
      %1866 = vmatpush1.msra.mxu0 0.0
      %1867 = vmatprep.subr.mxu0 0.0
      %1868 = vmatpush1.msra.mxu0 0.0
      %1869 = vmatprep.subr.mxu0 0.0
      %1870 = vmatpush1.msra.mxu0 0.0
      %1871 = vmatprep.subr.mxu0 0.0
      %1872 = vmatpush1.msra.mxu0 0.0
      %1873 = vmatprep.subr.mxu0 0.0
      %1874 = vmatpush1.msra.mxu0 0.0
      %1875 = vmatprep.subr.mxu0 0.0
      %1876 = vmatpush1.msra.mxu0 0.0
      %1877 = vmatprep.subr.mxu0 0.0
      %1878 = vmatpush1.msra.mxu0 0.0
      %1879 = vmatprep.subr.mxu0 0.0
      %1880 = vmatpush1.msra.mxu0 0.0
      %1881 = vmatprep.subr.mxu0 0.0
      %1882 = vmatpush1.msra.mxu0 0.0
      %1883 = vmatprep.subr.mxu0 0.0
      %1884 = vmatpush1.msra.mxu0 0.0
      %1885 = vmatprep.subr.mxu0 0.0
      %1886 = vmatpush1.msra.mxu0 %v1850
      %1887 = vmatprep.subr.mxu0 0.0
      %1888 = vmatpush1.msra.mxu0 %v1849
      %1889 = vmatprep.subr.mxu0 0.0
      %1890 = vmatpush1.msra.mxu0 %v1848
      %1891 = vmatprep.subr.mxu0 0.0
      %1892 = vmatpush1.msra.mxu0 %v1847
      %1893 = vmatprep.subr.mxu0 0.0
      %1894 = vmatpush2.msra.mxu0 0.0
      %1895 = vmatprep.subr.mxu0 0.0
      %1896 = vmatpush2.msra.mxu0 0.0
      %1897 = vmatprep.subr.mxu0 0.0
      %1898 = vmatpush2.msra.mxu0 0.0
      %1899 = vmatprep.subr.mxu0 0.0
      %1900 = vmatpush2.msra.mxu0 0.0
      %1901 = vmatprep.subr.mxu0 0.0
      %1902 = vmatpush2.msra.mxu0 0.0
      %1903 = vmatprep.subr.mxu0 0.0
      %1904 = vmatpush2.msra.mxu0 0.0
      %1905 = vmatprep.subr.mxu0 0.0
      %1906 = vmatpush2.msra.mxu0 0.0
      %1907 = vmatprep.subr.mxu0 0.0
      %1908 = vmatpush2.msra.mxu0 0.0
      %1909 = vmatprep.subr.mxu0 0.0
      %1910 = vmatpush2.msra.mxu0 0.0
      %1911 = vmatprep.subr.mxu0 0.0
      %1912 = vmatpush2.msra.mxu0 0.0
      %1913 = vmatprep.subr.mxu0 0.0
      %1914 = vmatpush2.msra.mxu0 0.0
      %1915 = vmatprep.subr.mxu0 0.0
      %1916 = vmatpush2.msra.mxu0 0.0
      %1917 = vmatprep.subr.mxu0 0.0
      %1918 = vmatpush2.msra.mxu0 0.0
      %1919 = vmatprep.subr.mxu0 0.0
      %1920 = vmatpush2.msra.mxu0 0.0
      %1921 = vmatprep.subr.mxu0 0.0
      %1922 = vmatpush2.msra.mxu0 0.0
      %1923 = vmatprep.subr.mxu0 0.0
      %1924 = vmatpush2.msra.mxu0 0.0
      %1925 = vmatprep.mubr.f32.mxu0 0.0
      %1926 = vmatmul.mubr.f32.gmra.mxu0 %v1859
      %v1927 = vpop.f32.mrf.mxu0
      %v1928 = vadd.f32 %v1856, %v1927
      %v1929 = vpop.f32.mrf.mxu0
      %1930 = vdwg.mxu0
      %v1931 = vld [vmem:[%s610] sm:$0x7]
      %v1932 = vadd.f32 %v1928, %v1931
      %vm1933 = vcmask 387072
      %1934 = vst.msk [vmem:[%s614] sm:$0x7] %vm1933, %v1932
      %p1935 = scmp.lt.s32.totalorder %s30, 1
      %s1936 = scalar_select %p1935, %s30, 1
      %s1937 = smul.addr %s1936, 4
      %s1938 = scalar_lea.vmem %s19, %s1937
      // Predicated region
      $region97: #{multispectral_mae_forward.5} parent=95 // pred_check
        %p1939 = pneg %p457
      $region98: #{multispectral_mae_forward.5} parent=95 // pred_check_branch
        %1941 = sbr.rel (%p1939) target = $region100
      $region99: #{multispectral_mae_forward.5} parent=95 // pred_region
        _
      $region100: #{multispectral_mae_forward.5} parent=95 // pred_fallthru
        _
    $region96: #{multispectral_mae_forward.5} parent=5 // pred_fallthru
      _
    %p1942 = scmp.le.s32.totalorder 2, %s25
    // Predicated region
    $region101: #{multispectral_mae_forward.5} parent=5 // pred_check
      %p1943 = pneg %p1942
    $region102: #{multispectral_mae_forward.5} parent=5 // pred_check_branch
      %1945 = sbr.rel (%p1943) target = $region104
    $region103: #{multispectral_mae_forward.5} parent=5 // pred_region
      %s1946 = ssub.s32 %s25, 2
      // Predicated region
      $region105: #{multispectral_mae_forward.5} parent=103 // pred_check
        %p1947 = pneg %p463
      $region106: #{multispectral_mae_forward.5} parent=103 // pred_check_branch
        %1949 = sbr.rel (%p1947) target = $region108
      $region107: #{multispectral_mae_forward.5} parent=103 // pred_region
        %p1950 = scmp.lt.s32.totalorder %s31, 1
        %s1951 = scalar_select %p1950, %s31, 1
        %s1952 = smul.addr %s1951, 4
        %s1953 = scalar_lea.vmem %s19, %s1952
      $region108: #{multispectral_mae_forward.5} parent=103 // pred_fallthru
        _
    $region104: #{multispectral_mae_forward.5} parent=5 // pred_fallthru
      _
  $region6: #{multispectral_mae_forward.5} parent=0 // loop_footer
    %s29 = sadd.s32 1, %s25
  $region7: #{multispectral_mae_forward.5} parent=0 // loop_footer_branch
    %24 = sbr.rel target = $region3
  $region8: #{multispectral_mae_forward.5} parent=0 // loop_exit
    _

// kernel: multispectral_mae_forward.7
$region0: #{multispectral_mae_forward.7}
  #allocation0 [shape = 'u32[]', space=smem, size = 0x4, offset = 0x4, fixed_abs, tag = 'smem constant byte address 0x4 - core index']
  #allocation1 [shape = 'u32[144,128]{1,0:T(1,128)}', space=vmem, size = 0x12000, scoped, tag = 'internal scratch']
  %s0 = inlined_call_operand.vmem [shape: f32[2,9,48], index: 0, kind: input, shape index: {}]
  %s1 = inlined_call_operand.vmem [shape: f32[48,64], index: 1, kind: input, shape index: {}]
  %s2 = inlined_call_operand.vmem [shape: f32[1,64], index: 2, kind: input, shape index: {}]
  %s3 = inlined_call_operand.vmem [shape: f32[2,9,64], index: 3, kind: input, shape index: {}]
  %s4 = inlined_call_operand.vmem [shape: f32[2,9,64], index: 4, kind: output, shape index: {0}]
  %s5 = inlined_call_operand.vmem [shape: f32[2,1,1], index: 5, kind: output, shape index: {1}]
  %6 = xla_tuple %s4, %s5
  %s7 = sld [smem:[#allocation0]]
  $region57: #{multispectral_mae_forward.7} parent=0
    _
  %s9 = ssub.s32 1, %s7
  %s10 = scalar_select 0, %s9, %s7
  loop: start=0, step=1, limit=4
  $region2: #{multispectral_mae_forward.7} parent=0 // loop_pre_header
    _
  $region3: #{multispectral_mae_forward.7} parent=0 // loop_header
    %s12 = sphi 0, %s16
    %p13 = scmp.ge.s32.totalorder %s12, 4
    %s22 = sphi 0, %s24
    %s25 = sphi 0, %s22
    %s26 = sphi 0, %s25
    %s42 = sphi 0, %s26
    %s46 = sphi 0, %s46
    %s48 = sphi 0, %s46
    %s49 = sphi 0, %s48
    %s63 = sphi 0, %s49
    %s67 = sphi 0, %s67
    %s69 = sphi 0, %s67
    %s70 = sphi 0, %s69
    %s84 = sphi 0, %s70
    %s90 = sphi 0, %s92
    %s93 = sphi 0, %s90
    %s94 = sphi 0, %s93
    %s110 = sphi 0, %s94
    %s116 = sphi 0, %s118
    %s119 = sphi 0, %s116
    %s120 = sphi 0, %s119
    %s136 = sphi 0, %s120
    %s142 = sphi 0, %s144
    %s145 = sphi 0, %s142
    %s146 = sphi 0, %s145
    %s162 = sphi 0, %s146
  $region4: #{multispectral_mae_forward.7} parent=0 // loop_header_branch
    %15 = sbr.rel (%p13) target = $region8
  $region5: #{multispectral_mae_forward.7} parent=0 // loop_body
    %s17 = ssub.s32 %s12, 1
    %s18 = ssub.s32 %s12, 2
    %s19 = sadd.s32 %s12, 1
    %s20 = ssub.s32 %s12, %s19
    %p21 = scmp.eq.s32.totalorder %s20, 0
    %s23 = sadd.s32 %s22, 1
    %s24 = scalar_select %p21, %s22, %s23
    %p27 = pneg %p21
    %p28 = scmp.eq.s32.totalorder %s12, 1
    %p29 = por %p27, %p28
    %p30 = scmp.ne.s32.totalorder %s22, %s25
    %p31 = scmp.eq.s32.totalorder %s12, 0
    %p32 = por %p30, %p31
    %p33 = scmp.ne.s32.totalorder %s22, %s25
    %p34 = scmp.eq.s32.totalorder %s17, 1
    %p35 = por %p33, %p34
    %p36 = scmp.ne.s32.totalorder %s25, %s26
    %p37 = scmp.eq.s32.totalorder %s17, 0
    %p38 = por %p36, %p37
    %p39 = scmp.ne.s32.totalorder %s25, %s26
    %p40 = scmp.eq.s32.totalorder %s18, 1
    %p41 = por %p39, %p40
    %p43 = scmp.ne.s32.totalorder %s26, %s42
    %p44 = scmp.eq.s32.totalorder %s18, 0
    %p45 = por %p43, %p44
    %s47 = sadd.s32 %s46, 1
    %p50 = scmp.eq.s32.totalorder %s12, 1
    %p51 = scmp.ne.s32.totalorder %s46, %s48
    %p52 = scmp.eq.s32.totalorder %s12, 0
    %p53 = por %p51, %p52
    %p54 = scmp.ne.s32.totalorder %s46, %s48
    %p55 = scmp.eq.s32.totalorder %s17, 1
    %p56 = por %p54, %p55
    %p57 = scmp.ne.s32.totalorder %s48, %s49
    %p58 = scmp.eq.s32.totalorder %s17, 0
    %p59 = por %p57, %p58
    %p60 = scmp.ne.s32.totalorder %s48, %s49
    %p61 = scmp.eq.s32.totalorder %s18, 1
    %p62 = por %p60, %p61
    %p64 = scmp.ne.s32.totalorder %s49, %s63
    %p65 = scmp.eq.s32.totalorder %s18, 0
    %p66 = por %p64, %p65
    %s68 = sadd.s32 %s67, 1
    %p71 = scmp.eq.s32.totalorder %s12, 1
    %p72 = scmp.ne.s32.totalorder %s67, %s69
    %p73 = scmp.eq.s32.totalorder %s12, 0
    %p74 = por %p72, %p73
    %p75 = scmp.ne.s32.totalorder %s67, %s69
    %p76 = scmp.eq.s32.totalorder %s17, 1
    %p77 = por %p75, %p76
    %p78 = scmp.ne.s32.totalorder %s69, %s70
    %p79 = scmp.eq.s32.totalorder %s17, 0
    %p80 = por %p78, %p79
    %p81 = scmp.ne.s32.totalorder %s69, %s70
    %p82 = scmp.eq.s32.totalorder %s18, 1
    %p83 = por %p81, %p82
    %p85 = scmp.ne.s32.totalorder %s70, %s84
    %p86 = scmp.eq.s32.totalorder %s18, 0
    %p87 = por %p85, %p86
    %s88 = ssub.s32 %s12, %s19
    %p89 = scmp.eq.s32.totalorder %s88, 0
    %s91 = sadd.s32 %s90, 1
    %s92 = scalar_select %p89, %s90, %s91
    %p95 = pneg %p89
    %p96 = scmp.eq.s32.totalorder %s12, 1
    %p97 = por %p95, %p96
    %p98 = scmp.ne.s32.totalorder %s90, %s93
    %p99 = scmp.eq.s32.totalorder %s12, 0
    %p100 = por %p98, %p99
    %p101 = scmp.ne.s32.totalorder %s90, %s93
    %p102 = scmp.eq.s32.totalorder %s17, 1
    %p103 = por %p101, %p102
    %p104 = scmp.ne.s32.totalorder %s93, %s94
    %p105 = scmp.eq.s32.totalorder %s17, 0
    %p106 = por %p104, %p105
    %p107 = scmp.ne.s32.totalorder %s93, %s94
    %p108 = scmp.eq.s32.totalorder %s18, 1
    %p109 = por %p107, %p108
    %p111 = scmp.ne.s32.totalorder %s94, %s110
    %p112 = scmp.eq.s32.totalorder %s18, 0
    %p113 = por %p111, %p112
    %s114 = ssub.s32 %s12, %s19
    %p115 = scmp.eq.s32.totalorder %s114, 0
    %s117 = sadd.s32 %s116, 1
    %s118 = scalar_select %p115, %s116, %s117
    %p121 = pneg %p115
    %p122 = scmp.eq.s32.totalorder %s12, 1
    %p123 = por %p121, %p122
    %p124 = scmp.ne.s32.totalorder %s116, %s119
    %p125 = scmp.eq.s32.totalorder %s12, 0
    %p126 = por %p124, %p125
    %p127 = scmp.ne.s32.totalorder %s116, %s119
    %p128 = scmp.eq.s32.totalorder %s17, 1
    %p129 = por %p127, %p128
    %p130 = scmp.ne.s32.totalorder %s119, %s120
    %p131 = scmp.eq.s32.totalorder %s17, 0
    %p132 = por %p130, %p131
    %p133 = scmp.ne.s32.totalorder %s119, %s120
    %p134 = scmp.eq.s32.totalorder %s18, 1
    %p135 = por %p133, %p134
    %p137 = scmp.ne.s32.totalorder %s120, %s136
    %p138 = scmp.eq.s32.totalorder %s18, 0
    %p139 = por %p137, %p138
    %s140 = ssub.s32 %s12, %s19
    %p141 = scmp.eq.s32.totalorder %s140, 0
    %s143 = sadd.s32 %s142, 1
    %s144 = scalar_select %p141, %s142, %s143
    %p147 = pneg %p141
    %p148 = scmp.eq.s32.totalorder %s12, 1
    %p149 = por %p147, %p148
    %p150 = scmp.ne.s32.totalorder %s142, %s145
    %p151 = scmp.eq.s32.totalorder %s12, 0
    %p152 = por %p150, %p151
    %p153 = scmp.ne.s32.totalorder %s142, %s145
    %p154 = scmp.eq.s32.totalorder %s17, 1
    %p155 = por %p153, %p154
    %p156 = scmp.ne.s32.totalorder %s145, %s146
    %p157 = scmp.eq.s32.totalorder %s17, 0
    %p158 = por %p156, %p157
    %p159 = scmp.ne.s32.totalorder %s145, %s146
    %p160 = scmp.eq.s32.totalorder %s18, 1
    %p161 = por %p159, %p160
    %p163 = scmp.ne.s32.totalorder %s146, %s162
    %p164 = scmp.eq.s32.totalorder %s18, 0
    %p165 = por %p163, %p164
    %p166 = scmp.le.s32.totalorder 1, %s12
    %p167 = scmp.lt.s32.totalorder %s12, 3
    %p168 = pnand %p166, %p167
    %p169 = pneg %p168
    // Predicated region
    $region9: #{multispectral_mae_forward.7} parent=5 // pred_check
      _
    $region10: #{multispectral_mae_forward.7} parent=5 // pred_check_branch
      %171 = sbr.rel (%p168) target = $region12
    $region11: #{multispectral_mae_forward.7} parent=5 // pred_region
      %s172 = ssub.s32 %s12, 1
      // Predicated region
      $region13: #{multispectral_mae_forward.7} parent=11 // pred_check
        %p173 = pneg %p59
      $region14: #{multispectral_mae_forward.7} parent=11 // pred_check_branch
        %175 = sbr.rel (%p173) target = $region16
      $region15: #{multispectral_mae_forward.7} parent=11 // pred_region
        _
      $region16: #{multispectral_mae_forward.7} parent=11 // pred_fallthru
        _
      // Predicated region
      $region17: #{multispectral_mae_forward.7} parent=11 // pred_check
        %p176 = pneg %p80
      $region18: #{multispectral_mae_forward.7} parent=11 // pred_check_branch
        %178 = sbr.rel (%p176) target = $region20
      $region19: #{multispectral_mae_forward.7} parent=11 // pred_region
        _
      $region20: #{multispectral_mae_forward.7} parent=11 // pred_fallthru
        _
    $region12: #{multispectral_mae_forward.7} parent=5 // pred_fallthru
      _
    %p179 = scmp.lt.s32.totalorder %s12, 2
    // Predicated region
    $region21: #{multispectral_mae_forward.7} parent=5 // pred_check
      %p180 = pneg %p179
    $region22: #{multispectral_mae_forward.7} parent=5 // pred_check_branch
      %182 = sbr.rel (%p180) target = $region24
    $region23: #{multispectral_mae_forward.7} parent=5 // pred_region
      // Predicated region
      $region25: #{multispectral_mae_forward.7} parent=23 // pred_check
        %p183 = pneg %p32
      $region26: #{multispectral_mae_forward.7} parent=23 // pred_check_branch
        %185 = sbr.rel (%p183) target = $region28
      $region27: #{multispectral_mae_forward.7} parent=23 // pred_region
        %p186 = scmp.lt.s32.totalorder %s12, 1
        %s187 = scalar_select %p186, %s12, 1
        %s188 = smul.addr %s187, 2
        %s189 = smul.addr %s188, 8
        %s190 = scalar_lea.vmem %s0, %s189
      $region28: #{multispectral_mae_forward.7} parent=23 // pred_fallthru
        _
      // Predicated region
      $region29: #{multispectral_mae_forward.7} parent=23 // pred_check
        %p191 = pneg %p100
      $region30: #{multispectral_mae_forward.7} parent=23 // pred_check_branch
        %193 = sbr.rel (%p191) target = $region32
      $region31: #{multispectral_mae_forward.7} parent=23 // pred_region
        %p194 = scmp.lt.s32.totalorder %s12, 1
        %s195 = scalar_select %p194, %s12, 1
        %s196 = smul.addr %s195, 2
        %s197 = smul.addr %s196, 8
        %s198 = scalar_lea.vmem %s3, %s197
      $region32: #{multispectral_mae_forward.7} parent=23 // pred_fallthru
        _
    $region24: #{multispectral_mae_forward.7} parent=5 // pred_fallthru
      _
    %p199 = scmp.le.s32.totalorder 1, %s12
    %p200 = scmp.lt.s32.totalorder %s12, 3
    %p201 = pnand %p199, %p200
    %p202 = pneg %p201
    // Predicated region
    $region33: #{multispectral_mae_forward.7} parent=5 // pred_check
      _
    $region34: #{multispectral_mae_forward.7} parent=5 // pred_check_branch
      %204 = sbr.rel (%p201) target = $region36
    $region35: #{multispectral_mae_forward.7} parent=5 // pred_region
      %s205 = ssub.s32 %s12, 1
      %p206 = scmp.lt.s32.totalorder %s17, 1
      %s207 = scalar_select %p206, %s17, 1
      %s208 = smul.addr %s207, 2
      %s209 = smul.addr %s208, 8
      %s210 = scalar_lea.vmem %s0, %s209
      %p211 = pneg %p38
      %p212 = pneg %p35
      %p213 = pneg %p59
      %p214 = pneg %p56
      %p215 = pneg %p80
      %p216 = pneg %p77
      %p217 = scmp.lt.s32.totalorder %s17, 1
      %s218 = scalar_select %p217, %s17, 1
      %s219 = smul.addr %s218, 2
      %s220 = smul.addr %s219, 8
      %s221 = scalar_lea.vmem %s3, %s220
      %p222 = pneg %p106
      %p223 = pneg %p103
      %p224 = pneg %p132
      %p225 = pneg %p129
      %p226 = scmp.lt.s32.totalorder %s17, 1
      %s227 = scalar_select %p226, %s17, 1
      %s228 = smul.addr %s227, 2
      %s229 = smul.addr %s228, 8
      %s230 = scalar_lea.vmem %s4, %s229
      %p231 = pneg %p158
      %p232 = pneg %p155
      %p233 = scmp.lt.s32.totalorder %s17, 1
      %s234 = scalar_select %p233, %s17, 1
      %s235 = scalar_lea.vmem %s5, %s234
      %p236 = scmp.lt.s32.totalorder %s17, 1
      %s237 = scalar_select %p236, %s17, 1
      %s238 = smul.addr %s237, 2
      %s239 = smul.addr %s238, 8
      %s240 = scalar_lea.vmem %s0, %s239
      %p241 = scmp.lt.s32.totalorder %s17, 1
      %s242 = scalar_select %p241, %s17, 1
      %s243 = smul.addr %s242, 2
      %s244 = smul.addr %s243, 8
      %s245 = scalar_lea.vmem %s3, %s244
      %p246 = scmp.lt.s32.totalorder %s17, 1
      %s247 = scalar_select %p246, %s17, 1
      %s248 = smul.addr %s247, 2
      %s249 = smul.addr %s248, 8
      %s250 = scalar_lea.vmem %s4, %s249
      %p251 = scmp.lt.s32.totalorder %s17, 1
      %s252 = scalar_select %p251, %s17, 1
      %s253 = scalar_lea.vmem %s5, %s252
      %v254 = vld [vmem:[%s240] sm:$0xff]
      %v255 = vld [vmem:[%s240 + $0x8] sm:$0x1]
      %v256 = vld [vmem:[%s1] sm:$0xff]
      %v257 = vld [vmem:[%s1 + $0x8] sm:$0xff]
      %v258 = vld [vmem:[%s1 + $0x10] sm:$0xff]
      %v259 = vld [vmem:[%s1 + $0x18] sm:$0xff]
      %v260 = vld [vmem:[%s1 + $0x20] sm:$0xff]
      %v261 = vld [vmem:[%s1 + $0x28] sm:$0xff]
      %v262 = vld [vmem:[%s2] sm:$0x1]
      %v264 = vlaneseq
      %v265 = vshrl.u32 %v264, 7
      %v266 = vsub.s32 0, %v265
      %v267 = vrot.slane %v262, %v266
      %vm269 = vcmask 392192
      %v271 = vsel %vm269, %v254, 0
      %v274 = vsel %vm269, %v255, 0
      %276 = vmatprep.subr.mxu0 0.0
      %277 = vmatpush1.msra.mxu0 0.0
      %278 = vmatprep.subr.mxu0 0.0
      %279 = vmatpush1.msra.mxu0 0.0
      %280 = vmatprep.subr.mxu0 0.0
      %281 = vmatpush1.msra.mxu0 0.0
      %282 = vmatprep.subr.mxu0 0.0
      %283 = vmatpush1.msra.mxu0 0.0
      %284 = vmatprep.subr.mxu0 0.0
      %285 = vmatpush1.msra.mxu0 0.0
      %286 = vmatprep.subr.mxu0 0.0
      %287 = vmatpush1.msra.mxu0 0.0
      %288 = vmatprep.subr.mxu0 0.0
      %289 = vmatpush1.msra.mxu0 0.0
      %290 = vmatprep.subr.mxu0 0.0
      %291 = vmatpush1.msra.mxu0 0.0
      %292 = vmatprep.subr.mxu0 0.0
      %293 = vmatpush1.msra.mxu0 0.0
      %294 = vmatprep.subr.mxu0 0.0
      %295 = vmatpush1.msra.mxu0 0.0
      %296 = vmatprep.subr.mxu0 0.0
      %297 = vmatpush1.msra.mxu0 %v261
      %298 = vmatprep.subr.mxu0 0.0
      %299 = vmatpush1.msra.mxu0 %v260
      %300 = vmatprep.subr.mxu0 0.0
      %301 = vmatpush1.msra.mxu0 %v259
      %302 = vmatprep.subr.mxu0 0.0
      %303 = vmatpush1.msra.mxu0 %v258
      %304 = vmatprep.subr.mxu0 0.0
      %305 = vmatpush1.msra.mxu0 %v257
      %306 = vmatprep.subr.mxu0 0.0
      %307 = vmatpush1.msra.mxu0 %v256
      %308 = vmatprep.subr.mxu0 0.0
      %309 = vmatpush2.msra.mxu0 0.0
      %310 = vmatprep.subr.mxu0 0.0
      %311 = vmatpush2.msra.mxu0 0.0
      %312 = vmatprep.subr.mxu0 0.0
      %313 = vmatpush2.msra.mxu0 0.0
      %314 = vmatprep.subr.mxu0 0.0
      %315 = vmatpush2.msra.mxu0 0.0
      %316 = vmatprep.subr.mxu0 0.0
      %317 = vmatpush2.msra.mxu0 0.0
      %318 = vmatprep.subr.mxu0 0.0
      %319 = vmatpush2.msra.mxu0 0.0
      %320 = vmatprep.subr.mxu0 0.0
      %321 = vmatpush2.msra.mxu0 0.0
      %322 = vmatprep.subr.mxu0 0.0
      %323 = vmatpush2.msra.mxu0 0.0
      %324 = vmatprep.subr.mxu0 0.0
      %325 = vmatpush2.msra.mxu0 0.0
      %326 = vmatprep.subr.mxu0 0.0
      %327 = vmatpush2.msra.mxu0 0.0
      %328 = vmatprep.subr.mxu0 0.0
      %329 = vmatpush2.msra.mxu0 0.0
      %330 = vmatprep.subr.mxu0 0.0
      %331 = vmatpush2.msra.mxu0 0.0
      %332 = vmatprep.subr.mxu0 0.0
      %333 = vmatpush2.msra.mxu0 0.0
      %334 = vmatprep.subr.mxu0 0.0
      %335 = vmatpush2.msra.mxu0 0.0
      %336 = vmatprep.subr.mxu0 0.0
      %337 = vmatpush2.msra.mxu0 0.0
      %338 = vmatprep.subr.mxu0 0.0
      %339 = vmatpush2.msra.mxu0 0.0
      %340 = vmatprep.mubr.f32.mxu0 0.0
      %341 = vmatmul.mubr.f32.gmra.mxu0 %v271
      %v342 = vpop.f32.mrf.mxu0
      %v343 = vadd.f32 %v267, %v342
      %v344 = vpop.f32.mrf.mxu0
      %345 = vmatprep.mubr.f32.mxu0 0.0
      %346 = vmatmul.mubr.f32.gmra.mxu0 %v274
      %v347 = vpop.f32.mrf.mxu0
      %v348 = vadd.f32 %v267, %v347
      %v349 = vpop.f32.mrf.mxu0
      %350 = vdwg.mxu0
      %vm351 = vcmask 523264
      %352 = vst.msk [vmem:[%s250] sm:$0xff] %vm351, %v343
      %vm353 = vcmask 516096
      %354 = vst.msk [vmem:[%s250 + $0x8] sm:$0x1] %vm353, %v348
      %v355 = vld [vmem:[%s245] sm:$0xff]
      %v356 = vld [vmem:[%s245 + $0x8] sm:$0x1]
      %v357 = vsub.f32 %v343, %v355
      %v358 = vsub.f32 %v348, %v356
      %v359 = vmul.f32 %v357, %v357
      %v360 = vmul.f32 %v358, %v358
      %v361 = vsel %vm351, %v359, 0.0
      %362 = vadd.xlane.f32.xlu0 %v361
      %v363 = vpop.xlane.xlu0 %362
      %v364 = vsel %vm353, %v360, 0.0
      %365 = vadd.xlane.f32.xlu0 %v364
      %v366 = vpop.xlane.xlu0 %365
      %vm367 = vcmask 1040384
      %v368 = vsel %vm367, %v366, 0.0
      %v369 = vadd.f32 %v363, %v368
      %v370 = vrot.slane %v369, 4
      %v371 = vadd.f32 %v369, %v370
      %v372 = vrot.slane %v371, 2
      %v373 = vadd.f32 %v371, %v372
      %v374 = vrot.slane %v373, 1
      %v375 = vadd.f32 %v373, %v374
      %vm376 = vcmask 0
      %377 = vst.msk [vmem:[%s253] sm:$0x1] %vm376, %v375
      %p378 = scmp.lt.s32.totalorder %s17, 1
      %s379 = scalar_select %p378, %s17, 1
      %s380 = smul.addr %s379, 2
      %s381 = smul.addr %s380, 8
      %s382 = scalar_lea.vmem %s4, %s381
      %p383 = scmp.lt.s32.totalorder %s17, 1
      %s384 = scalar_select %p383, %s17, 1
      %s385 = scalar_lea.vmem %s5, %s384
      // Predicated region
      $region37: #{multispectral_mae_forward.7} parent=35 // pred_check
        %p386 = pneg %p129
      $region38: #{multispectral_mae_forward.7} parent=35 // pred_check_branch
        %388 = sbr.rel (%p386) target = $region40
      $region39: #{multispectral_mae_forward.7} parent=35 // pred_region
        _
      $region40: #{multispectral_mae_forward.7} parent=35 // pred_fallthru
        _
      // Predicated region
      $region41: #{multispectral_mae_forward.7} parent=35 // pred_check
        %p389 = pneg %p155
      $region42: #{multispectral_mae_forward.7} parent=35 // pred_check_branch
        %391 = sbr.rel (%p389) target = $region44
      $region43: #{multispectral_mae_forward.7} parent=35 // pred_region
        _
      $region44: #{multispectral_mae_forward.7} parent=35 // pred_fallthru
        _
    $region36: #{multispectral_mae_forward.7} parent=5 // pred_fallthru
      _
    %p392 = scmp.le.s32.totalorder 2, %s12
    // Predicated region
    $region45: #{multispectral_mae_forward.7} parent=5 // pred_check
      %p393 = pneg %p392
    $region46: #{multispectral_mae_forward.7} parent=5 // pred_check_branch
      %395 = sbr.rel (%p393) target = $region48
    $region47: #{multispectral_mae_forward.7} parent=5 // pred_region
      %s396 = ssub.s32 %s12, 2
      // Predicated region
      $region49: #{multispectral_mae_forward.7} parent=47 // pred_check
        %p397 = pneg %p135
      $region50: #{multispectral_mae_forward.7} parent=47 // pred_check_branch
        %399 = sbr.rel (%p397) target = $region52
      $region51: #{multispectral_mae_forward.7} parent=47 // pred_region
        %p400 = scmp.lt.s32.totalorder %s18, 1
        %s401 = scalar_select %p400, %s18, 1
        %s402 = smul.addr %s401, 2
        %s403 = smul.addr %s402, 8
        %s404 = scalar_lea.vmem %s4, %s403
      $region52: #{multispectral_mae_forward.7} parent=47 // pred_fallthru
        _
      // Predicated region
      $region53: #{multispectral_mae_forward.7} parent=47 // pred_check
        %p405 = pneg %p161
      $region54: #{multispectral_mae_forward.7} parent=47 // pred_check_branch
        %407 = sbr.rel (%p405) target = $region56
      $region55: #{multispectral_mae_forward.7} parent=47 // pred_region
        %p408 = scmp.lt.s32.totalorder %s18, 1
        %s409 = scalar_select %p408, %s18, 1
        %s410 = scalar_lea.vmem %s5, %s409
      $region56: #{multispectral_mae_forward.7} parent=47 // pred_fallthru
        _
    $region48: #{multispectral_mae_forward.7} parent=5 // pred_fallthru
      _
  $region6: #{multispectral_mae_forward.7} parent=0 // loop_footer
    %s16 = sadd.s32 1, %s12
  $region7: #{multispectral_mae_forward.7} parent=0 // loop_footer_branch
    %11 = sbr.rel target = $region3
  $region8: #{multispectral_mae_forward.7} parent=0 // loop_exit
    _

// kernel: multispectral_mae_forward.6
$region0: #{multispectral_mae_forward.6}
  #allocation0 [shape = 'u32[]', space=smem, size = 0x4, offset = 0x4, fixed_abs, tag = 'smem constant byte address 0x4 - core index']
  #allocation1 [shape = 'u32[144,128]{1,0:T(1,128)}', space=vmem, size = 0x12000, scoped, tag = 'internal scratch']
  %s0 = inlined_call_operand.vmem [shape: f32[2,12,48], index: 0, kind: input, shape index: {}]
  %s1 = inlined_call_operand.vmem [shape: f32[1,48], index: 1, kind: input, shape index: {}]
  %s2 = inlined_call_operand.vmem [shape: f32[1,48], index: 2, kind: input, shape index: {}]
  %s3 = inlined_call_operand.vmem [shape: f32[2,48,16], index: 3, kind: input, shape index: {}]
  %s4 = inlined_call_operand.vmem [shape: f32[2,48,16], index: 4, kind: input, shape index: {}]
  %s5 = inlined_call_operand.vmem [shape: f32[2,48,16], index: 5, kind: input, shape index: {}]
  %s6 = inlined_call_operand.vmem [shape: f32[2,16,48], index: 6, kind: input, shape index: {}]
  %s7 = inlined_call_operand.vmem [shape: f32[1,48], index: 7, kind: input, shape index: {}]
  %s8 = inlined_call_operand.vmem [shape: f32[1,48], index: 8, kind: input, shape index: {}]
  %s9 = inlined_call_operand.vmem [shape: f32[1,48], index: 9, kind: input, shape index: {}]
  %s10 = inlined_call_operand.vmem [shape: f32[48,192], index: 10, kind: input, shape index: {}]
  %s11 = inlined_call_operand.vmem [shape: f32[1,192], index: 11, kind: input, shape index: {}]
  %s12 = inlined_call_operand.vmem [shape: f32[192,48], index: 12, kind: input, shape index: {}]
  %s13 = inlined_call_operand.vmem [shape: f32[1,48], index: 13, kind: input, shape index: {}]
  %s14 = inlined_call_operand.vmem [shape: f32[1,48], index: 14, kind: input, shape index: {}]
  %s15 = inlined_call_operand.vmem [shape: f32[1,48], index: 15, kind: input, shape index: {}]
  %s16 = inlined_call_operand.vmem [shape: f32[2,12,48], index: 16, kind: output, shape index: {}]
  %s17 = sld [smem:[#allocation0]]
  $region97: #{multispectral_mae_forward.6} parent=0
    _
  %s19 = ssub.s32 1, %s17
  %s20 = scalar_select 0, %s19, %s17
  loop: start=0, step=1, limit=4
  $region2: #{multispectral_mae_forward.6} parent=0 // loop_pre_header
    _
  $region3: #{multispectral_mae_forward.6} parent=0 // loop_header
    %s22 = sphi 0, %s26
    %p23 = scmp.ge.s32.totalorder %s22, 4
    %s32 = sphi 0, %s34
    %s35 = sphi 0, %s32
    %s36 = sphi 0, %s35
    %s52 = sphi 0, %s36
    %s56 = sphi 0, %s56
    %s58 = sphi 0, %s56
    %s59 = sphi 0, %s58
    %s73 = sphi 0, %s59
    %s77 = sphi 0, %s77
    %s79 = sphi 0, %s77
    %s80 = sphi 0, %s79
    %s94 = sphi 0, %s80
    %s98 = sphi 0, %s98
    %s100 = sphi 0, %s98
    %s101 = sphi 0, %s100
    %s115 = sphi 0, %s101
    %s119 = sphi 0, %s119
    %s121 = sphi 0, %s119
    %s122 = sphi 0, %s121
    %s136 = sphi 0, %s122
    %s140 = sphi 0, %s140
    %s142 = sphi 0, %s140
    %s143 = sphi 0, %s142
    %s157 = sphi 0, %s143
    %s161 = sphi 0, %s161
    %s163 = sphi 0, %s161
    %s164 = sphi 0, %s163
    %s178 = sphi 0, %s164
    %s182 = sphi 0, %s182
    %s184 = sphi 0, %s182
    %s185 = sphi 0, %s184
    %s199 = sphi 0, %s185
    %s203 = sphi 0, %s203
    %s205 = sphi 0, %s203
    %s206 = sphi 0, %s205
    %s220 = sphi 0, %s206
    %s224 = sphi 0, %s224
    %s226 = sphi 0, %s224
    %s227 = sphi 0, %s226
    %s241 = sphi 0, %s227
    %s245 = sphi 0, %s245
    %s247 = sphi 0, %s245
    %s248 = sphi 0, %s247
    %s262 = sphi 0, %s248
    %s266 = sphi 0, %s266
    %s268 = sphi 0, %s266
    %s269 = sphi 0, %s268
    %s283 = sphi 0, %s269
    %s287 = sphi 0, %s287
    %s289 = sphi 0, %s287
    %s290 = sphi 0, %s289
    %s304 = sphi 0, %s290
    %s308 = sphi 0, %s308
    %s310 = sphi 0, %s308
    %s311 = sphi 0, %s310
    %s325 = sphi 0, %s311
    %s329 = sphi 0, %s329
    %s331 = sphi 0, %s329
    %s332 = sphi 0, %s331
    %s346 = sphi 0, %s332
    %s350 = sphi 0, %s350
    %s352 = sphi 0, %s350
    %s353 = sphi 0, %s352
    %s367 = sphi 0, %s353
    %s373 = sphi 0, %s375
    %s376 = sphi 0, %s373
    %s377 = sphi 0, %s376
    %s393 = sphi 0, %s377
  $region4: #{multispectral_mae_forward.6} parent=0 // loop_header_branch
    %25 = sbr.rel (%p23) target = $region8
  $region5: #{multispectral_mae_forward.6} parent=0 // loop_body
    %s27 = ssub.s32 %s22, 1
    %s28 = ssub.s32 %s22, 2
    %s29 = sadd.s32 %s22, 1
    %s30 = ssub.s32 %s22, %s29
    %p31 = scmp.eq.s32.totalorder %s30, 0
    %s33 = sadd.s32 %s32, 1
    %s34 = scalar_select %p31, %s32, %s33
    %p37 = pneg %p31
    %p38 = scmp.eq.s32.totalorder %s22, 1
    %p39 = por %p37, %p38
    %p40 = scmp.ne.s32.totalorder %s32, %s35
    %p41 = scmp.eq.s32.totalorder %s22, 0
    %p42 = por %p40, %p41
    %p43 = scmp.ne.s32.totalorder %s32, %s35
    %p44 = scmp.eq.s32.totalorder %s27, 1
    %p45 = por %p43, %p44
    %p46 = scmp.ne.s32.totalorder %s35, %s36
    %p47 = scmp.eq.s32.totalorder %s27, 0
    %p48 = por %p46, %p47
    %p49 = scmp.ne.s32.totalorder %s35, %s36
    %p50 = scmp.eq.s32.totalorder %s28, 1
    %p51 = por %p49, %p50
    %p53 = scmp.ne.s32.totalorder %s36, %s52
    %p54 = scmp.eq.s32.totalorder %s28, 0
    %p55 = por %p53, %p54
    %s57 = sadd.s32 %s56, 1
    %p60 = scmp.eq.s32.totalorder %s22, 1
    %p61 = scmp.ne.s32.totalorder %s56, %s58
    %p62 = scmp.eq.s32.totalorder %s22, 0
    %p63 = por %p61, %p62
    %p64 = scmp.ne.s32.totalorder %s56, %s58
    %p65 = scmp.eq.s32.totalorder %s27, 1
    %p66 = por %p64, %p65
    %p67 = scmp.ne.s32.totalorder %s58, %s59
    %p68 = scmp.eq.s32.totalorder %s27, 0
    %p69 = por %p67, %p68
    %p70 = scmp.ne.s32.totalorder %s58, %s59
    %p71 = scmp.eq.s32.totalorder %s28, 1
    %p72 = por %p70, %p71
    %p74 = scmp.ne.s32.totalorder %s59, %s73
    %p75 = scmp.eq.s32.totalorder %s28, 0
    %p76 = por %p74, %p75
    %s78 = sadd.s32 %s77, 1
    %p81 = scmp.eq.s32.totalorder %s22, 1
    %p82 = scmp.ne.s32.totalorder %s77, %s79
    %p83 = scmp.eq.s32.totalorder %s22, 0
    %p84 = por %p82, %p83
    %p85 = scmp.ne.s32.totalorder %s77, %s79
    %p86 = scmp.eq.s32.totalorder %s27, 1
    %p87 = por %p85, %p86
    %p88 = scmp.ne.s32.totalorder %s79, %s80
    %p89 = scmp.eq.s32.totalorder %s27, 0
    %p90 = por %p88, %p89
    %p91 = scmp.ne.s32.totalorder %s79, %s80
    %p92 = scmp.eq.s32.totalorder %s28, 1
    %p93 = por %p91, %p92
    %p95 = scmp.ne.s32.totalorder %s80, %s94
    %p96 = scmp.eq.s32.totalorder %s28, 0
    %p97 = por %p95, %p96
    %s99 = sadd.s32 %s98, 1
    %p102 = scmp.eq.s32.totalorder %s22, 1
    %p103 = scmp.ne.s32.totalorder %s98, %s100
    %p104 = scmp.eq.s32.totalorder %s22, 0
    %p105 = por %p103, %p104
    %p106 = scmp.ne.s32.totalorder %s98, %s100
    %p107 = scmp.eq.s32.totalorder %s27, 1
    %p108 = por %p106, %p107
    %p109 = scmp.ne.s32.totalorder %s100, %s101
    %p110 = scmp.eq.s32.totalorder %s27, 0
    %p111 = por %p109, %p110
    %p112 = scmp.ne.s32.totalorder %s100, %s101
    %p113 = scmp.eq.s32.totalorder %s28, 1
    %p114 = por %p112, %p113
    %p116 = scmp.ne.s32.totalorder %s101, %s115
    %p117 = scmp.eq.s32.totalorder %s28, 0
    %p118 = por %p116, %p117
    %s120 = sadd.s32 %s119, 1
    %p123 = scmp.eq.s32.totalorder %s22, 1
    %p124 = scmp.ne.s32.totalorder %s119, %s121
    %p125 = scmp.eq.s32.totalorder %s22, 0
    %p126 = por %p124, %p125
    %p127 = scmp.ne.s32.totalorder %s119, %s121
    %p128 = scmp.eq.s32.totalorder %s27, 1
    %p129 = por %p127, %p128
    %p130 = scmp.ne.s32.totalorder %s121, %s122
    %p131 = scmp.eq.s32.totalorder %s27, 0
    %p132 = por %p130, %p131
    %p133 = scmp.ne.s32.totalorder %s121, %s122
    %p134 = scmp.eq.s32.totalorder %s28, 1
    %p135 = por %p133, %p134
    %p137 = scmp.ne.s32.totalorder %s122, %s136
    %p138 = scmp.eq.s32.totalorder %s28, 0
    %p139 = por %p137, %p138
    %s141 = sadd.s32 %s140, 1
    %p144 = scmp.eq.s32.totalorder %s22, 1
    %p145 = scmp.ne.s32.totalorder %s140, %s142
    %p146 = scmp.eq.s32.totalorder %s22, 0
    %p147 = por %p145, %p146
    %p148 = scmp.ne.s32.totalorder %s140, %s142
    %p149 = scmp.eq.s32.totalorder %s27, 1
    %p150 = por %p148, %p149
    %p151 = scmp.ne.s32.totalorder %s142, %s143
    %p152 = scmp.eq.s32.totalorder %s27, 0
    %p153 = por %p151, %p152
    %p154 = scmp.ne.s32.totalorder %s142, %s143
    %p155 = scmp.eq.s32.totalorder %s28, 1
    %p156 = por %p154, %p155
    %p158 = scmp.ne.s32.totalorder %s143, %s157
    %p159 = scmp.eq.s32.totalorder %s28, 0
    %p160 = por %p158, %p159
    %s162 = sadd.s32 %s161, 1
    %p165 = scmp.eq.s32.totalorder %s22, 1
    %p166 = scmp.ne.s32.totalorder %s161, %s163
    %p167 = scmp.eq.s32.totalorder %s22, 0
    %p168 = por %p166, %p167
    %p169 = scmp.ne.s32.totalorder %s161, %s163
    %p170 = scmp.eq.s32.totalorder %s27, 1
    %p171 = por %p169, %p170
    %p172 = scmp.ne.s32.totalorder %s163, %s164
    %p173 = scmp.eq.s32.totalorder %s27, 0
    %p174 = por %p172, %p173
    %p175 = scmp.ne.s32.totalorder %s163, %s164
    %p176 = scmp.eq.s32.totalorder %s28, 1
    %p177 = por %p175, %p176
    %p179 = scmp.ne.s32.totalorder %s164, %s178
    %p180 = scmp.eq.s32.totalorder %s28, 0
    %p181 = por %p179, %p180
    %s183 = sadd.s32 %s182, 1
    %p186 = scmp.eq.s32.totalorder %s22, 1
    %p187 = scmp.ne.s32.totalorder %s182, %s184
    %p188 = scmp.eq.s32.totalorder %s22, 0
    %p189 = por %p187, %p188
    %p190 = scmp.ne.s32.totalorder %s182, %s184
    %p191 = scmp.eq.s32.totalorder %s27, 1
    %p192 = por %p190, %p191
    %p193 = scmp.ne.s32.totalorder %s184, %s185
    %p194 = scmp.eq.s32.totalorder %s27, 0
    %p195 = por %p193, %p194
    %p196 = scmp.ne.s32.totalorder %s184, %s185
    %p197 = scmp.eq.s32.totalorder %s28, 1
    %p198 = por %p196, %p197
    %p200 = scmp.ne.s32.totalorder %s185, %s199
    %p201 = scmp.eq.s32.totalorder %s28, 0
    %p202 = por %p200, %p201
    %s204 = sadd.s32 %s203, 1
    %p207 = scmp.eq.s32.totalorder %s22, 1
    %p208 = scmp.ne.s32.totalorder %s203, %s205
    %p209 = scmp.eq.s32.totalorder %s22, 0
    %p210 = por %p208, %p209
    %p211 = scmp.ne.s32.totalorder %s203, %s205
    %p212 = scmp.eq.s32.totalorder %s27, 1
    %p213 = por %p211, %p212
    %p214 = scmp.ne.s32.totalorder %s205, %s206
    %p215 = scmp.eq.s32.totalorder %s27, 0
    %p216 = por %p214, %p215
    %p217 = scmp.ne.s32.totalorder %s205, %s206
    %p218 = scmp.eq.s32.totalorder %s28, 1
    %p219 = por %p217, %p218
    %p221 = scmp.ne.s32.totalorder %s206, %s220
    %p222 = scmp.eq.s32.totalorder %s28, 0
    %p223 = por %p221, %p222
    %s225 = sadd.s32 %s224, 1
    %p228 = scmp.eq.s32.totalorder %s22, 1
    %p229 = scmp.ne.s32.totalorder %s224, %s226
    %p230 = scmp.eq.s32.totalorder %s22, 0
    %p231 = por %p229, %p230
    %p232 = scmp.ne.s32.totalorder %s224, %s226
    %p233 = scmp.eq.s32.totalorder %s27, 1
    %p234 = por %p232, %p233
    %p235 = scmp.ne.s32.totalorder %s226, %s227
    %p236 = scmp.eq.s32.totalorder %s27, 0
    %p237 = por %p235, %p236
    %p238 = scmp.ne.s32.totalorder %s226, %s227
    %p239 = scmp.eq.s32.totalorder %s28, 1
    %p240 = por %p238, %p239
    %p242 = scmp.ne.s32.totalorder %s227, %s241
    %p243 = scmp.eq.s32.totalorder %s28, 0
    %p244 = por %p242, %p243
    %s246 = sadd.s32 %s245, 1
    %p249 = scmp.eq.s32.totalorder %s22, 1
    %p250 = scmp.ne.s32.totalorder %s245, %s247
    %p251 = scmp.eq.s32.totalorder %s22, 0
    %p252 = por %p250, %p251
    %p253 = scmp.ne.s32.totalorder %s245, %s247
    %p254 = scmp.eq.s32.totalorder %s27, 1
    %p255 = por %p253, %p254
    %p256 = scmp.ne.s32.totalorder %s247, %s248
    %p257 = scmp.eq.s32.totalorder %s27, 0
    %p258 = por %p256, %p257
    %p259 = scmp.ne.s32.totalorder %s247, %s248
    %p260 = scmp.eq.s32.totalorder %s28, 1
    %p261 = por %p259, %p260
    %p263 = scmp.ne.s32.totalorder %s248, %s262
    %p264 = scmp.eq.s32.totalorder %s28, 0
    %p265 = por %p263, %p264
    %s267 = sadd.s32 %s266, 1
    %p270 = scmp.eq.s32.totalorder %s22, 1
    %p271 = scmp.ne.s32.totalorder %s266, %s268
    %p272 = scmp.eq.s32.totalorder %s22, 0
    %p273 = por %p271, %p272
    %p274 = scmp.ne.s32.totalorder %s266, %s268
    %p275 = scmp.eq.s32.totalorder %s27, 1
    %p276 = por %p274, %p275
    %p277 = scmp.ne.s32.totalorder %s268, %s269
    %p278 = scmp.eq.s32.totalorder %s27, 0
    %p279 = por %p277, %p278
    %p280 = scmp.ne.s32.totalorder %s268, %s269
    %p281 = scmp.eq.s32.totalorder %s28, 1
    %p282 = por %p280, %p281
    %p284 = scmp.ne.s32.totalorder %s269, %s283
    %p285 = scmp.eq.s32.totalorder %s28, 0
    %p286 = por %p284, %p285
    %s288 = sadd.s32 %s287, 1
    %p291 = scmp.eq.s32.totalorder %s22, 1
    %p292 = scmp.ne.s32.totalorder %s287, %s289
    %p293 = scmp.eq.s32.totalorder %s22, 0
    %p294 = por %p292, %p293
    %p295 = scmp.ne.s32.totalorder %s287, %s289
    %p296 = scmp.eq.s32.totalorder %s27, 1
    %p297 = por %p295, %p296
    %p298 = scmp.ne.s32.totalorder %s289, %s290
    %p299 = scmp.eq.s32.totalorder %s27, 0
    %p300 = por %p298, %p299
    %p301 = scmp.ne.s32.totalorder %s289, %s290
    %p302 = scmp.eq.s32.totalorder %s28, 1
    %p303 = por %p301, %p302
    %p305 = scmp.ne.s32.totalorder %s290, %s304
    %p306 = scmp.eq.s32.totalorder %s28, 0
    %p307 = por %p305, %p306
    %s309 = sadd.s32 %s308, 1
    %p312 = scmp.eq.s32.totalorder %s22, 1
    %p313 = scmp.ne.s32.totalorder %s308, %s310
    %p314 = scmp.eq.s32.totalorder %s22, 0
    %p315 = por %p313, %p314
    %p316 = scmp.ne.s32.totalorder %s308, %s310
    %p317 = scmp.eq.s32.totalorder %s27, 1
    %p318 = por %p316, %p317
    %p319 = scmp.ne.s32.totalorder %s310, %s311
    %p320 = scmp.eq.s32.totalorder %s27, 0
    %p321 = por %p319, %p320
    %p322 = scmp.ne.s32.totalorder %s310, %s311
    %p323 = scmp.eq.s32.totalorder %s28, 1
    %p324 = por %p322, %p323
    %p326 = scmp.ne.s32.totalorder %s311, %s325
    %p327 = scmp.eq.s32.totalorder %s28, 0
    %p328 = por %p326, %p327
    %s330 = sadd.s32 %s329, 1
    %p333 = scmp.eq.s32.totalorder %s22, 1
    %p334 = scmp.ne.s32.totalorder %s329, %s331
    %p335 = scmp.eq.s32.totalorder %s22, 0
    %p336 = por %p334, %p335
    %p337 = scmp.ne.s32.totalorder %s329, %s331
    %p338 = scmp.eq.s32.totalorder %s27, 1
    %p339 = por %p337, %p338
    %p340 = scmp.ne.s32.totalorder %s331, %s332
    %p341 = scmp.eq.s32.totalorder %s27, 0
    %p342 = por %p340, %p341
    %p343 = scmp.ne.s32.totalorder %s331, %s332
    %p344 = scmp.eq.s32.totalorder %s28, 1
    %p345 = por %p343, %p344
    %p347 = scmp.ne.s32.totalorder %s332, %s346
    %p348 = scmp.eq.s32.totalorder %s28, 0
    %p349 = por %p347, %p348
    %s351 = sadd.s32 %s350, 1
    %p354 = scmp.eq.s32.totalorder %s22, 1
    %p355 = scmp.ne.s32.totalorder %s350, %s352
    %p356 = scmp.eq.s32.totalorder %s22, 0
    %p357 = por %p355, %p356
    %p358 = scmp.ne.s32.totalorder %s350, %s352
    %p359 = scmp.eq.s32.totalorder %s27, 1
    %p360 = por %p358, %p359
    %p361 = scmp.ne.s32.totalorder %s352, %s353
    %p362 = scmp.eq.s32.totalorder %s27, 0
    %p363 = por %p361, %p362
    %p364 = scmp.ne.s32.totalorder %s352, %s353
    %p365 = scmp.eq.s32.totalorder %s28, 1
    %p366 = por %p364, %p365
    %p368 = scmp.ne.s32.totalorder %s353, %s367
    %p369 = scmp.eq.s32.totalorder %s28, 0
    %p370 = por %p368, %p369
    %s371 = ssub.s32 %s22, %s29
    %p372 = scmp.eq.s32.totalorder %s371, 0
    %s374 = sadd.s32 %s373, 1
    %s375 = scalar_select %p372, %s373, %s374
    %p378 = pneg %p372
    %p379 = scmp.eq.s32.totalorder %s22, 1
    %p380 = por %p378, %p379
    %p381 = scmp.ne.s32.totalorder %s373, %s376
    %p382 = scmp.eq.s32.totalorder %s22, 0
    %p383 = por %p381, %p382
    %p384 = scmp.ne.s32.totalorder %s373, %s376
    %p385 = scmp.eq.s32.totalorder %s27, 1
    %p386 = por %p384, %p385
    %p387 = scmp.ne.s32.totalorder %s376, %s377
    %p388 = scmp.eq.s32.totalorder %s27, 0
    %p389 = por %p387, %p388
    %p390 = scmp.ne.s32.totalorder %s376, %s377
    %p391 = scmp.eq.s32.totalorder %s28, 1
    %p392 = por %p390, %p391
    %p394 = scmp.ne.s32.totalorder %s377, %s393
    %p395 = scmp.eq.s32.totalorder %s28, 0
    %p396 = por %p394, %p395
    %p397 = scmp.le.s32.totalorder 1, %s22
    %p398 = scmp.lt.s32.totalorder %s22, 3
    %p399 = pnand %p397, %p398
    %p400 = pneg %p399
    // Predicated region
    $region9: #{multispectral_mae_forward.6} parent=5 // pred_check
      _
    $region10: #{multispectral_mae_forward.6} parent=5 // pred_check_branch
      %402 = sbr.rel (%p399) target = $region12
    $region11: #{multispectral_mae_forward.6} parent=5 // pred_region
      %s403 = ssub.s32 %s22, 1
      // Predicated region
      $region13: #{multispectral_mae_forward.6} parent=11 // pred_check
        %p404 = pneg %p69
      $region14: #{multispectral_mae_forward.6} parent=11 // pred_check_branch
        %406 = sbr.rel (%p404) target = $region16
      $region15: #{multispectral_mae_forward.6} parent=11 // pred_region
        _
      $region16: #{multispectral_mae_forward.6} parent=11 // pred_fallthru
        _
      // Predicated region
      $region17: #{multispectral_mae_forward.6} parent=11 // pred_check
        %p407 = pneg %p90
      $region18: #{multispectral_mae_forward.6} parent=11 // pred_check_branch
        %409 = sbr.rel (%p407) target = $region20
      $region19: #{multispectral_mae_forward.6} parent=11 // pred_region
        _
      $region20: #{multispectral_mae_forward.6} parent=11 // pred_fallthru
        _
      // Predicated region
      $region21: #{multispectral_mae_forward.6} parent=11 // pred_check
        %p410 = pneg %p111
      $region22: #{multispectral_mae_forward.6} parent=11 // pred_check_branch
        %412 = sbr.rel (%p410) target = $region24
      $region23: #{multispectral_mae_forward.6} parent=11 // pred_region
        _
      $region24: #{multispectral_mae_forward.6} parent=11 // pred_fallthru
        _
      // Predicated region
      $region25: #{multispectral_mae_forward.6} parent=11 // pred_check
        %p413 = pneg %p132
      $region26: #{multispectral_mae_forward.6} parent=11 // pred_check_branch
        %415 = sbr.rel (%p413) target = $region28
      $region27: #{multispectral_mae_forward.6} parent=11 // pred_region
        _
      $region28: #{multispectral_mae_forward.6} parent=11 // pred_fallthru
        _
      // Predicated region
      $region29: #{multispectral_mae_forward.6} parent=11 // pred_check
        %p416 = pneg %p153
      $region30: #{multispectral_mae_forward.6} parent=11 // pred_check_branch
        %418 = sbr.rel (%p416) target = $region32
      $region31: #{multispectral_mae_forward.6} parent=11 // pred_region
        _
      $region32: #{multispectral_mae_forward.6} parent=11 // pred_fallthru
        _
      // Predicated region
      $region33: #{multispectral_mae_forward.6} parent=11 // pred_check
        %p419 = pneg %p174
      $region34: #{multispectral_mae_forward.6} parent=11 // pred_check_branch
        %421 = sbr.rel (%p419) target = $region36
      $region35: #{multispectral_mae_forward.6} parent=11 // pred_region
        _
      $region36: #{multispectral_mae_forward.6} parent=11 // pred_fallthru
        _
      // Predicated region
      $region37: #{multispectral_mae_forward.6} parent=11 // pred_check
        %p422 = pneg %p195
      $region38: #{multispectral_mae_forward.6} parent=11 // pred_check_branch
        %424 = sbr.rel (%p422) target = $region40
      $region39: #{multispectral_mae_forward.6} parent=11 // pred_region
        _
      $region40: #{multispectral_mae_forward.6} parent=11 // pred_fallthru
        _
      // Predicated region
      $region41: #{multispectral_mae_forward.6} parent=11 // pred_check
        %p425 = pneg %p216
      $region42: #{multispectral_mae_forward.6} parent=11 // pred_check_branch
        %427 = sbr.rel (%p425) target = $region44
      $region43: #{multispectral_mae_forward.6} parent=11 // pred_region
        _
      $region44: #{multispectral_mae_forward.6} parent=11 // pred_fallthru
        _
      // Predicated region
      $region45: #{multispectral_mae_forward.6} parent=11 // pred_check
        %p428 = pneg %p237
      $region46: #{multispectral_mae_forward.6} parent=11 // pred_check_branch
        %430 = sbr.rel (%p428) target = $region48
      $region47: #{multispectral_mae_forward.6} parent=11 // pred_region
        _
      $region48: #{multispectral_mae_forward.6} parent=11 // pred_fallthru
        _
      // Predicated region
      $region49: #{multispectral_mae_forward.6} parent=11 // pred_check
        %p431 = pneg %p258
      $region50: #{multispectral_mae_forward.6} parent=11 // pred_check_branch
        %433 = sbr.rel (%p431) target = $region52
      $region51: #{multispectral_mae_forward.6} parent=11 // pred_region
        _
      $region52: #{multispectral_mae_forward.6} parent=11 // pred_fallthru
        _
      // Predicated region
      $region53: #{multispectral_mae_forward.6} parent=11 // pred_check
        %p434 = pneg %p279
      $region54: #{multispectral_mae_forward.6} parent=11 // pred_check_branch
        %436 = sbr.rel (%p434) target = $region56
      $region55: #{multispectral_mae_forward.6} parent=11 // pred_region
        _
      $region56: #{multispectral_mae_forward.6} parent=11 // pred_fallthru
        _
      // Predicated region
      $region57: #{multispectral_mae_forward.6} parent=11 // pred_check
        %p437 = pneg %p300
      $region58: #{multispectral_mae_forward.6} parent=11 // pred_check_branch
        %439 = sbr.rel (%p437) target = $region60
      $region59: #{multispectral_mae_forward.6} parent=11 // pred_region
        _
      $region60: #{multispectral_mae_forward.6} parent=11 // pred_fallthru
        _
      // Predicated region
      $region61: #{multispectral_mae_forward.6} parent=11 // pred_check
        %p440 = pneg %p321
      $region62: #{multispectral_mae_forward.6} parent=11 // pred_check_branch
        %442 = sbr.rel (%p440) target = $region64
      $region63: #{multispectral_mae_forward.6} parent=11 // pred_region
        _
      $region64: #{multispectral_mae_forward.6} parent=11 // pred_fallthru
        _
      // Predicated region
      $region65: #{multispectral_mae_forward.6} parent=11 // pred_check
        %p443 = pneg %p342
      $region66: #{multispectral_mae_forward.6} parent=11 // pred_check_branch
        %445 = sbr.rel (%p443) target = $region68
      $region67: #{multispectral_mae_forward.6} parent=11 // pred_region
        _
      $region68: #{multispectral_mae_forward.6} parent=11 // pred_fallthru
        _
      // Predicated region
      $region69: #{multispectral_mae_forward.6} parent=11 // pred_check
        %p446 = pneg %p363
      $region70: #{multispectral_mae_forward.6} parent=11 // pred_check_branch
        %448 = sbr.rel (%p446) target = $region72
      $region71: #{multispectral_mae_forward.6} parent=11 // pred_region
        _
      $region72: #{multispectral_mae_forward.6} parent=11 // pred_fallthru
        _
    $region12: #{multispectral_mae_forward.6} parent=5 // pred_fallthru
      _
    %p449 = scmp.lt.s32.totalorder %s22, 2
    // Predicated region
    $region73: #{multispectral_mae_forward.6} parent=5 // pred_check
      %p450 = pneg %p449
    $region74: #{multispectral_mae_forward.6} parent=5 // pred_check_branch
      %452 = sbr.rel (%p450) target = $region76
    $region75: #{multispectral_mae_forward.6} parent=5 // pred_region
      // Predicated region
      $region77: #{multispectral_mae_forward.6} parent=75 // pred_check
        %p453 = pneg %p42
      $region78: #{multispectral_mae_forward.6} parent=75 // pred_check_branch
        %455 = sbr.rel (%p453) target = $region80
      $region79: #{multispectral_mae_forward.6} parent=75 // pred_region
        %p456 = scmp.lt.s32.totalorder %s22, 1
        %s457 = scalar_select %p456, %s22, 1
        %s458 = smul.addr %s457, 2
        %s459 = smul.addr %s458, 8
        %s460 = scalar_lea.vmem %s0, %s459
      $region80: #{multispectral_mae_forward.6} parent=75 // pred_fallthru
        _
    $region76: #{multispectral_mae_forward.6} parent=5 // pred_fallthru
      _
    %p461 = scmp.le.s32.totalorder 1, %s22
    %p462 = scmp.lt.s32.totalorder %s22, 3
    %p463 = pnand %p461, %p462
    %p464 = pneg %p463
    // Predicated region
    $region81: #{multispectral_mae_forward.6} parent=5 // pred_check
      _
    $region82: #{multispectral_mae_forward.6} parent=5 // pred_check_branch
      %466 = sbr.rel (%p463) target = $region84
    $region83: #{multispectral_mae_forward.6} parent=5 // pred_region
      %s467 = ssub.s32 %s22, 1
      %p468 = scmp.lt.s32.totalorder %s27, 1
      %s469 = scalar_select %p468, %s27, 1
      %s470 = smul.addr %s469, 2
      %s471 = smul.addr %s470, 8
      %s472 = scalar_lea.vmem %s0, %s471
      %p473 = pneg %p48
      %p474 = pneg %p45
      %p475 = pneg %p69
      %p476 = pneg %p66
      %p477 = pneg %p90
      %p478 = pneg %p87
      %p479 = pneg %p111
      %p480 = pneg %p108
      %p481 = pneg %p132
      %p482 = pneg %p129
      %p483 = pneg %p153
      %p484 = pneg %p150
      %p485 = pneg %p174
      %p486 = pneg %p171
      %p487 = pneg %p195
      %p488 = pneg %p192
      %p489 = pneg %p216
      %p490 = pneg %p213
      %p491 = pneg %p237
      %p492 = pneg %p234
      %p493 = pneg %p258
      %p494 = pneg %p255
      %p495 = pneg %p279
      %p496 = pneg %p276
      %p497 = pneg %p300
      %p498 = pneg %p297
      %p499 = pneg %p321
      %p500 = pneg %p318
      %p501 = pneg %p342
      %p502 = pneg %p339
      %p503 = pneg %p363
      %p504 = pneg %p360
      %p505 = pneg %p389
      %p506 = pneg %p386
      %p507 = scmp.lt.s32.totalorder %s27, 1
      %s508 = scalar_select %p507, %s27, 1
      %s509 = smul.addr %s508, 2
      %s510 = smul.addr %s509, 8
      %s511 = scalar_lea.vmem %s16, %s510
      %p512 = scmp.lt.s32.totalorder %s27, 1
      %s513 = scalar_select %p512, %s27, 1
      %s514 = smul.addr %s513, 2
      %s515 = smul.addr %s514, 8
      %s516 = scalar_lea.vmem %s0, %s515
      %p517 = scmp.lt.s32.totalorder %s27, 1
      %s518 = scalar_select %p517, %s27, 1
      %s519 = smul.addr %s518, 2
      %s520 = smul.addr %s519, 8
      %s521 = scalar_lea.vmem %s16, %s520
      %v522 = vld [vmem:[%s516] sm:$0xff]
      %v523 = vld [vmem:[%s516 + $0x8] sm:$0xf]
      %v524 = vld [vmem:[%s1] sm:$0x1]
      %v525 = vld [vmem:[%s2] sm:$0x1]
      %v526 = vld [vmem:[%s3] sm:$0xff]
      %v527 = vld [vmem:[%s3 + $0x8] sm:$0xff]
      %v528 = vld [vmem:[%s3 + $0x10] sm:$0xff]
      %v529 = vld [vmem:[%s3 + $0x18] sm:$0xff]
      %v530 = vld [vmem:[%s3 + $0x20] sm:$0xff]
      %v531 = vld [vmem:[%s3 + $0x28] sm:$0xff]
      %v532 = vld [vmem:[%s3 + $0x30] sm:$0xff]
      %v533 = vld [vmem:[%s3 + $0x38] sm:$0xff]
      %v534 = vld [vmem:[%s3 + $0x40] sm:$0xff]
      %v535 = vld [vmem:[%s3 + $0x48] sm:$0xff]
      %v536 = vld [vmem:[%s3 + $0x50] sm:$0xff]
      %v537 = vld [vmem:[%s3 + $0x58] sm:$0xff]
      %v538 = vld [vmem:[%s4] sm:$0xff]
      %v539 = vld [vmem:[%s4 + $0x8] sm:$0xff]
      %v540 = vld [vmem:[%s4 + $0x10] sm:$0xff]
      %v541 = vld [vmem:[%s4 + $0x18] sm:$0xff]
      %v542 = vld [vmem:[%s4 + $0x20] sm:$0xff]
      %v543 = vld [vmem:[%s4 + $0x28] sm:$0xff]
      %v544 = vld [vmem:[%s4 + $0x30] sm:$0xff]
      %v545 = vld [vmem:[%s4 + $0x38] sm:$0xff]
      %v546 = vld [vmem:[%s4 + $0x40] sm:$0xff]
      %v547 = vld [vmem:[%s4 + $0x48] sm:$0xff]
      %v548 = vld [vmem:[%s4 + $0x50] sm:$0xff]
      %v549 = vld [vmem:[%s4 + $0x58] sm:$0xff]
      %v550 = vld [vmem:[%s5] sm:$0xff]
      %v551 = vld [vmem:[%s5 + $0x8] sm:$0xff]
      %v552 = vld [vmem:[%s5 + $0x10] sm:$0xff]
      %v553 = vld [vmem:[%s5 + $0x18] sm:$0xff]
      %v554 = vld [vmem:[%s5 + $0x20] sm:$0xff]
      %v555 = vld [vmem:[%s5 + $0x28] sm:$0xff]
      %v556 = vld [vmem:[%s5 + $0x30] sm:$0xff]
      %v557 = vld [vmem:[%s5 + $0x38] sm:$0xff]
      %v558 = vld [vmem:[%s5 + $0x40] sm:$0xff]
      %v559 = vld [vmem:[%s5 + $0x48] sm:$0xff]
      %v560 = vld [vmem:[%s5 + $0x50] sm:$0xff]
      %v561 = vld [vmem:[%s5 + $0x58] sm:$0xff]
      %v562 = vld [vmem:[%s6] sm:$0xff]
      %v563 = vld [vmem:[%s6 + $0x8] sm:$0xff]
      %v564 = vld [vmem:[%s6 + $0x10] sm:$0xff]
      %v565 = vld [vmem:[%s6 + $0x18] sm:$0xff]
      %v566 = vld [vmem:[%s7] sm:$0x1]
      %v567 = vld [vmem:[%s8] sm:$0x1]
      %v568 = vld [vmem:[%s9] sm:$0x1]
      %v569 = vld [vmem:[%s10] sm:$0xff]
      %v570 = vld [vmem:[%s10 + $0x8] sm:$0xff]
      %v571 = vld [vmem:[%s10 + $0x10] sm:$0xff]
      %v572 = vld [vmem:[%s10 + $0x18] sm:$0xff]
      %v573 = vld [vmem:[%s10 + $0x20] sm:$0xff]
      %v574 = vld [vmem:[%s10 + $0x28] sm:$0xff]
      %v575 = vld [vmem:[%s10 + $0x30] sm:$0xff]
      %v576 = vld [vmem:[%s10 + $0x38] sm:$0xff]
      %v577 = vld [vmem:[%s10 + $0x40] sm:$0xff]
      %v578 = vld [vmem:[%s10 + $0x48] sm:$0xff]
      %v579 = vld [vmem:[%s10 + $0x50] sm:$0xff]
      %v580 = vld [vmem:[%s10 + $0x58] sm:$0xff]
      %v581 = vld [vmem:[%s11] sm:$0x3]
      %v582 = vld [vmem:[%s12] sm:$0xff]
      %v583 = vld [vmem:[%s12 + $0x8] sm:$0xff]
      %v584 = vld [vmem:[%s12 + $0x10] sm:$0xff]
      %v585 = vld [vmem:[%s12 + $0x18] sm:$0xff]
      %v586 = vld [vmem:[%s12 + $0x20] sm:$0xff]
      %v587 = vld [vmem:[%s12 + $0x28] sm:$0xff]
      %v588 = vld [vmem:[%s12 + $0x30] sm:$0xff]
      %v589 = vld [vmem:[%s12 + $0x38] sm:$0xff]
      %v590 = vld [vmem:[%s12 + $0x40] sm:$0xff]
      %v591 = vld [vmem:[%s12 + $0x48] sm:$0xff]
      %v592 = vld [vmem:[%s12 + $0x50] sm:$0xff]
      %v593 = vld [vmem:[%s12 + $0x58] sm:$0xff]
      %v594 = vld [vmem:[%s12 + $0x60] sm:$0xff]
      %v595 = vld [vmem:[%s12 + $0x68] sm:$0xff]
      %v596 = vld [vmem:[%s12 + $0x70] sm:$0xff]
      %v597 = vld [vmem:[%s12 + $0x78] sm:$0xff]
      %v598 = vld [vmem:[%s12 + $0x80] sm:$0xff]
      %v599 = vld [vmem:[%s12 + $0x88] sm:$0xff]
      %v600 = vld [vmem:[%s12 + $0x90] sm:$0xff]
      %v601 = vld [vmem:[%s12 + $0x98] sm:$0xff]
      %v602 = vld [vmem:[%s12 + $0xa0] sm:$0xff]
      %v603 = vld [vmem:[%s12 + $0xa8] sm:$0xff]
      %v604 = vld [vmem:[%s12 + $0xb0] sm:$0xff]
      %v605 = vld [vmem:[%s12 + $0xb8] sm:$0xff]
      %v606 = vld [vmem:[%s13] sm:$0x1]
      %vm607 = vcmask 392192
      %v608 = vsel %vm607, %v522, 0.0
      %609 = vadd.xlane.f32.xlu0 %v608
      %v610 = vpop.xlane.xlu0 %609
      %vm611 = vcmask 388096
      %v612 = vsel %vm611, %v523, 0.0
      %613 = vadd.xlane.f32.xlu0 %v612
      %v614 = vpop.xlane.xlu0 %613
      %v615 = vrcp.pop 48.0
      %v616 = vmul.f32 %v610, %v615
      %v617 = vmul.f32 %v614, %v615
      %v618 = vsub.f32 %v522, %v616
      %v619 = vsub.f32 %v523, %v617
      %v620 = vmul.f32 %v618, %v618
      %v621 = vmul.f32 %v619, %v619
      %v622 = vsel %vm607, %v620, 0.0
      %623 = vadd.xlane.f32.xlu0 %v622
      %v624 = vpop.xlane.xlu0 %623
      %v625 = vsel %vm611, %v621, 0.0
      %626 = vadd.xlane.f32.xlu0 %v625
      %v627 = vpop.xlane.xlu0 %626
      %v628 = vmul.f32 %v624, %v615
      %v629 = vmul.f32 %v627, %v615
      %v630 = vadd.f32 %v628, 1e-05
      %v631 = vadd.f32 %v629, 1e-05
      %v632 = vrsqrt.pop %v630
      %v633 = vrsqrt.pop %v631
      %v634 = vmul.f32 %v618, %v632
      %v635 = vmul.f32 %v619, %v633
      %v637 = vlaneseq
      %v638 = vshrl.u32 %v637, 7
      %v639 = vsub.s32 0, %v638
      %v640 = vrot.slane %v524, %v639
      %v642 = vmul.f32 %v634, %v640
      %v643 = vmul.f32 %v635, %v640
      %v645 = vlaneseq
      %v646 = vshrl.u32 %v645, 7
      %v647 = vsub.s32 0, %v646
      %v648 = vrot.slane %v525, %v647
      %v650 = vadd.f32 %v642, %v648
      %v651 = vadd.f32 %v643, %v648
      %v653 = vsel %vm607, %v650, 0
      %v656 = vsel %vm607, %v651, 0
      %658 = vmatprep.subr.mxu0 0.0
      %659 = vmatpush1.msra.mxu0 0.0
      %660 = vmatprep.subr.mxu0 0.0
      %661 = vmatpush1.msra.mxu0 0.0
      %662 = vmatprep.subr.mxu0 0.0
      %663 = vmatpush1.msra.mxu0 0.0
      %664 = vmatprep.subr.mxu0 0.0
      %665 = vmatpush1.msra.mxu0 0.0
      %666 = vmatprep.subr.mxu0 0.0
      %667 = vmatpush1.msra.mxu0 0.0
      %668 = vmatprep.subr.mxu0 0.0
      %669 = vmatpush1.msra.mxu0 0.0
      %670 = vmatprep.subr.mxu0 0.0
      %671 = vmatpush1.msra.mxu0 0.0
      %672 = vmatprep.subr.mxu0 0.0
      %673 = vmatpush1.msra.mxu0 0.0
      %674 = vmatprep.subr.mxu0 0.0
      %675 = vmatpush1.msra.mxu0 0.0
      %676 = vmatprep.subr.mxu0 0.0
      %677 = vmatpush1.msra.mxu0 0.0
      %678 = vmatprep.subr.mxu0 0.0
      %679 = vmatpush1.msra.mxu0 %v531
      %680 = vmatprep.subr.mxu0 0.0
      %681 = vmatpush1.msra.mxu0 %v530
      %682 = vmatprep.subr.mxu0 0.0
      %683 = vmatpush1.msra.mxu0 %v529
      %684 = vmatprep.subr.mxu0 0.0
      %685 = vmatpush1.msra.mxu0 %v528
      %686 = vmatprep.subr.mxu0 0.0
      %687 = vmatpush1.msra.mxu0 %v527
      %688 = vmatprep.subr.mxu0 0.0
      %689 = vmatpush1.msra.mxu0 %v526
      %690 = vmatprep.subr.mxu0 0.0
      %691 = vmatpush2.msra.mxu0 0.0
      %692 = vmatprep.subr.mxu0 0.0
      %693 = vmatpush2.msra.mxu0 0.0
      %694 = vmatprep.subr.mxu0 0.0
      %695 = vmatpush2.msra.mxu0 0.0
      %696 = vmatprep.subr.mxu0 0.0
      %697 = vmatpush2.msra.mxu0 0.0
      %698 = vmatprep.subr.mxu0 0.0
      %699 = vmatpush2.msra.mxu0 0.0
      %700 = vmatprep.subr.mxu0 0.0
      %701 = vmatpush2.msra.mxu0 0.0
      %702 = vmatprep.subr.mxu0 0.0
      %703 = vmatpush2.msra.mxu0 0.0
      %704 = vmatprep.subr.mxu0 0.0
      %705 = vmatpush2.msra.mxu0 0.0
      %706 = vmatprep.subr.mxu0 0.0
      %707 = vmatpush2.msra.mxu0 0.0
      %708 = vmatprep.subr.mxu0 0.0
      %709 = vmatpush2.msra.mxu0 0.0
      %710 = vmatprep.subr.mxu0 0.0
      %711 = vmatpush2.msra.mxu0 0.0
      %712 = vmatprep.subr.mxu0 0.0
      %713 = vmatpush2.msra.mxu0 0.0
      %714 = vmatprep.subr.mxu0 0.0
      %715 = vmatpush2.msra.mxu0 0.0
      %716 = vmatprep.subr.mxu0 0.0
      %717 = vmatpush2.msra.mxu0 0.0
      %718 = vmatprep.subr.mxu0 0.0
      %719 = vmatpush2.msra.mxu0 0.0
      %720 = vmatprep.subr.mxu0 0.0
      %721 = vmatpush2.msra.mxu0 0.0
      %722 = vmatprep.mubr.f32.mxu0 0.0
      %723 = vmatmul.mubr.f32.gmra.mxu0 %v653
      %v724 = vpop.f32.mrf.mxu0
      %v725 = vadd.f32 0.0, %v724
      %v726 = vpop.f32.mrf.mxu0
      %727 = vmatprep.mubr.f32.mxu0 0.0
      %728 = vmatmul.mubr.f32.gmra.mxu0 %v656
      %v729 = vpop.f32.mrf.mxu0
      %v730 = vadd.f32 0.0, %v729
      %v731 = vpop.f32.mrf.mxu0
      %732 = vdwg.mxu0
      %733 = vmatprep.subr.mxu0 0.0
      %734 = vmatpush1.msra.mxu0 0.0
      %735 = vmatprep.subr.mxu0 0.0
      %736 = vmatpush1.msra.mxu0 0.0
      %737 = vmatprep.subr.mxu0 0.0
      %738 = vmatpush1.msra.mxu0 0.0
      %739 = vmatprep.subr.mxu0 0.0
      %740 = vmatpush1.msra.mxu0 0.0
      %741 = vmatprep.subr.mxu0 0.0
      %742 = vmatpush1.msra.mxu0 0.0
      %743 = vmatprep.subr.mxu0 0.0
      %744 = vmatpush1.msra.mxu0 0.0
      %745 = vmatprep.subr.mxu0 0.0
      %746 = vmatpush1.msra.mxu0 0.0
      %747 = vmatprep.subr.mxu0 0.0
      %748 = vmatpush1.msra.mxu0 0.0
      %749 = vmatprep.subr.mxu0 0.0
      %750 = vmatpush1.msra.mxu0 0.0
      %751 = vmatprep.subr.mxu0 0.0
      %752 = vmatpush1.msra.mxu0 0.0
      %753 = vmatprep.subr.mxu0 0.0
      %754 = vmatpush1.msra.mxu0 %v537
      %755 = vmatprep.subr.mxu0 0.0
      %756 = vmatpush1.msra.mxu0 %v536
      %757 = vmatprep.subr.mxu0 0.0
      %758 = vmatpush1.msra.mxu0 %v535
      %759 = vmatprep.subr.mxu0 0.0
      %760 = vmatpush1.msra.mxu0 %v534
      %761 = vmatprep.subr.mxu0 0.0
      %762 = vmatpush1.msra.mxu0 %v533
      %763 = vmatprep.subr.mxu0 0.0
      %764 = vmatpush1.msra.mxu0 %v532
      %765 = vmatprep.subr.mxu0 0.0
      %766 = vmatpush2.msra.mxu0 0.0
      %767 = vmatprep.subr.mxu0 0.0
      %768 = vmatpush2.msra.mxu0 0.0
      %769 = vmatprep.subr.mxu0 0.0
      %770 = vmatpush2.msra.mxu0 0.0
      %771 = vmatprep.subr.mxu0 0.0
      %772 = vmatpush2.msra.mxu0 0.0
      %773 = vmatprep.subr.mxu0 0.0
      %774 = vmatpush2.msra.mxu0 0.0
      %775 = vmatprep.subr.mxu0 0.0
      %776 = vmatpush2.msra.mxu0 0.0
      %777 = vmatprep.subr.mxu0 0.0
      %778 = vmatpush2.msra.mxu0 0.0
      %779 = vmatprep.subr.mxu0 0.0
      %780 = vmatpush2.msra.mxu0 0.0
      %781 = vmatprep.subr.mxu0 0.0
      %782 = vmatpush2.msra.mxu0 0.0
      %783 = vmatprep.subr.mxu0 0.0
      %784 = vmatpush2.msra.mxu0 0.0
      %785 = vmatprep.subr.mxu0 0.0
      %786 = vmatpush2.msra.mxu0 0.0
      %787 = vmatprep.subr.mxu0 0.0
      %788 = vmatpush2.msra.mxu0 0.0
      %789 = vmatprep.subr.mxu0 0.0
      %790 = vmatpush2.msra.mxu0 0.0
      %791 = vmatprep.subr.mxu0 0.0
      %792 = vmatpush2.msra.mxu0 0.0
      %793 = vmatprep.subr.mxu0 0.0
      %794 = vmatpush2.msra.mxu0 0.0
      %795 = vmatprep.subr.mxu0 0.0
      %796 = vmatpush2.msra.mxu0 0.0
      %797 = vmatprep.mubr.f32.mxu0 0.0
      %798 = vmatmul.mubr.f32.gmra.mxu0 %v653
      %v799 = vpop.f32.mrf.mxu0
      %v800 = vadd.f32 0.0, %v799
      %v801 = vpop.f32.mrf.mxu0
      %802 = vmatprep.mubr.f32.mxu0 0.0
      %803 = vmatmul.mubr.f32.gmra.mxu0 %v656
      %v804 = vpop.f32.mrf.mxu0
      %v805 = vadd.f32 0.0, %v804
      %v806 = vpop.f32.mrf.mxu0
      %807 = vdwg.mxu0
      %808 = vmatprep.subr.mxu0 0.0
      %809 = vmatpush1.msra.mxu0 0.0
      %810 = vmatprep.subr.mxu0 0.0
      %811 = vmatpush1.msra.mxu0 0.0
      %812 = vmatprep.subr.mxu0 0.0
      %813 = vmatpush1.msra.mxu0 0.0
      %814 = vmatprep.subr.mxu0 0.0
      %815 = vmatpush1.msra.mxu0 0.0
      %816 = vmatprep.subr.mxu0 0.0
      %817 = vmatpush1.msra.mxu0 0.0
      %818 = vmatprep.subr.mxu0 0.0
      %819 = vmatpush1.msra.mxu0 0.0
      %820 = vmatprep.subr.mxu0 0.0
      %821 = vmatpush1.msra.mxu0 0.0
      %822 = vmatprep.subr.mxu0 0.0
      %823 = vmatpush1.msra.mxu0 0.0
      %824 = vmatprep.subr.mxu0 0.0
      %825 = vmatpush1.msra.mxu0 0.0
      %826 = vmatprep.subr.mxu0 0.0
      %827 = vmatpush1.msra.mxu0 0.0
      %828 = vmatprep.subr.mxu0 0.0
      %829 = vmatpush1.msra.mxu0 %v543
      %830 = vmatprep.subr.mxu0 0.0
      %831 = vmatpush1.msra.mxu0 %v542
      %832 = vmatprep.subr.mxu0 0.0
      %833 = vmatpush1.msra.mxu0 %v541
      %834 = vmatprep.subr.mxu0 0.0
      %835 = vmatpush1.msra.mxu0 %v540
      %836 = vmatprep.subr.mxu0 0.0
      %837 = vmatpush1.msra.mxu0 %v539
      %838 = vmatprep.subr.mxu0 0.0
      %839 = vmatpush1.msra.mxu0 %v538
      %840 = vmatprep.subr.mxu0 0.0
      %841 = vmatpush2.msra.mxu0 0.0
      %842 = vmatprep.subr.mxu0 0.0
      %843 = vmatpush2.msra.mxu0 0.0
      %844 = vmatprep.subr.mxu0 0.0
      %845 = vmatpush2.msra.mxu0 0.0
      %846 = vmatprep.subr.mxu0 0.0
      %847 = vmatpush2.msra.mxu0 0.0
      %848 = vmatprep.subr.mxu0 0.0
      %849 = vmatpush2.msra.mxu0 0.0
      %850 = vmatprep.subr.mxu0 0.0
      %851 = vmatpush2.msra.mxu0 0.0
      %852 = vmatprep.subr.mxu0 0.0
      %853 = vmatpush2.msra.mxu0 0.0
      %854 = vmatprep.subr.mxu0 0.0
      %855 = vmatpush2.msra.mxu0 0.0
      %856 = vmatprep.subr.mxu0 0.0
      %857 = vmatpush2.msra.mxu0 0.0
      %858 = vmatprep.subr.mxu0 0.0
      %859 = vmatpush2.msra.mxu0 0.0
      %860 = vmatprep.subr.mxu0 0.0
      %861 = vmatpush2.msra.mxu0 0.0
      %862 = vmatprep.subr.mxu0 0.0
      %863 = vmatpush2.msra.mxu0 0.0
      %864 = vmatprep.subr.mxu0 0.0
      %865 = vmatpush2.msra.mxu0 0.0
      %866 = vmatprep.subr.mxu0 0.0
      %867 = vmatpush2.msra.mxu0 0.0
      %868 = vmatprep.subr.mxu0 0.0
      %869 = vmatpush2.msra.mxu0 0.0
      %870 = vmatprep.subr.mxu0 0.0
      %871 = vmatpush2.msra.mxu0 0.0
      %872 = vmatprep.mubr.f32.mxu0 0.0
      %873 = vmatmul.mubr.f32.gmra.mxu0 %v653
      %v874 = vpop.f32.mrf.mxu0
      %v875 = vadd.f32 0.0, %v874
      %v876 = vpop.f32.mrf.mxu0
      %877 = vmatprep.mubr.f32.mxu0 0.0
      %878 = vmatmul.mubr.f32.gmra.mxu0 %v656
      %v879 = vpop.f32.mrf.mxu0
      %v880 = vadd.f32 0.0, %v879
      %v881 = vpop.f32.mrf.mxu0
      %882 = vdwg.mxu0
      %883 = vmatprep.subr.mxu0 0.0
      %884 = vmatpush1.msra.mxu0 0.0
      %885 = vmatprep.subr.mxu0 0.0
      %886 = vmatpush1.msra.mxu0 0.0
      %887 = vmatprep.subr.mxu0 0.0
      %888 = vmatpush1.msra.mxu0 0.0
      %889 = vmatprep.subr.mxu0 0.0
      %890 = vmatpush1.msra.mxu0 0.0
      %891 = vmatprep.subr.mxu0 0.0
      %892 = vmatpush1.msra.mxu0 0.0
      %893 = vmatprep.subr.mxu0 0.0
      %894 = vmatpush1.msra.mxu0 0.0
      %895 = vmatprep.subr.mxu0 0.0
      %896 = vmatpush1.msra.mxu0 0.0
      %897 = vmatprep.subr.mxu0 0.0
      %898 = vmatpush1.msra.mxu0 0.0
      %899 = vmatprep.subr.mxu0 0.0
      %900 = vmatpush1.msra.mxu0 0.0
      %901 = vmatprep.subr.mxu0 0.0
      %902 = vmatpush1.msra.mxu0 0.0
      %903 = vmatprep.subr.mxu0 0.0
      %904 = vmatpush1.msra.mxu0 %v549
      %905 = vmatprep.subr.mxu0 0.0
      %906 = vmatpush1.msra.mxu0 %v548
      %907 = vmatprep.subr.mxu0 0.0
      %908 = vmatpush1.msra.mxu0 %v547
      %909 = vmatprep.subr.mxu0 0.0
      %910 = vmatpush1.msra.mxu0 %v546
      %911 = vmatprep.subr.mxu0 0.0
      %912 = vmatpush1.msra.mxu0 %v545
      %913 = vmatprep.subr.mxu0 0.0
      %914 = vmatpush1.msra.mxu0 %v544
      %915 = vmatprep.subr.mxu0 0.0
      %916 = vmatpush2.msra.mxu0 0.0
      %917 = vmatprep.subr.mxu0 0.0
      %918 = vmatpush2.msra.mxu0 0.0
      %919 = vmatprep.subr.mxu0 0.0
      %920 = vmatpush2.msra.mxu0 0.0
      %921 = vmatprep.subr.mxu0 0.0
      %922 = vmatpush2.msra.mxu0 0.0
      %923 = vmatprep.subr.mxu0 0.0
      %924 = vmatpush2.msra.mxu0 0.0
      %925 = vmatprep.subr.mxu0 0.0
      %926 = vmatpush2.msra.mxu0 0.0
      %927 = vmatprep.subr.mxu0 0.0
      %928 = vmatpush2.msra.mxu0 0.0
      %929 = vmatprep.subr.mxu0 0.0
      %930 = vmatpush2.msra.mxu0 0.0
      %931 = vmatprep.subr.mxu0 0.0
      %932 = vmatpush2.msra.mxu0 0.0
      %933 = vmatprep.subr.mxu0 0.0
      %934 = vmatpush2.msra.mxu0 0.0
      %935 = vmatprep.subr.mxu0 0.0
      %936 = vmatpush2.msra.mxu0 0.0
      %937 = vmatprep.subr.mxu0 0.0
      %938 = vmatpush2.msra.mxu0 0.0
      %939 = vmatprep.subr.mxu0 0.0
      %940 = vmatpush2.msra.mxu0 0.0
      %941 = vmatprep.subr.mxu0 0.0
      %942 = vmatpush2.msra.mxu0 0.0
      %943 = vmatprep.subr.mxu0 0.0
      %944 = vmatpush2.msra.mxu0 0.0
      %945 = vmatprep.subr.mxu0 0.0
      %946 = vmatpush2.msra.mxu0 0.0
      %947 = vmatprep.mubr.f32.mxu0 0.0
      %948 = vmatmul.mubr.f32.gmra.mxu0 %v653
      %v949 = vpop.f32.mrf.mxu0
      %v950 = vadd.f32 0.0, %v949
      %v951 = vpop.f32.mrf.mxu0
      %952 = vmatprep.mubr.f32.mxu0 0.0
      %953 = vmatmul.mubr.f32.gmra.mxu0 %v656
      %v954 = vpop.f32.mrf.mxu0
      %v955 = vadd.f32 0.0, %v954
      %v956 = vpop.f32.mrf.mxu0
      %957 = vdwg.mxu0
      %958 = vmatprep.subr.mxu0 0.0
      %959 = vmatpush1.msra.mxu0 0.0
      %960 = vmatprep.subr.mxu0 0.0
      %961 = vmatpush1.msra.mxu0 0.0
      %962 = vmatprep.subr.mxu0 0.0
      %963 = vmatpush1.msra.mxu0 0.0
      %964 = vmatprep.subr.mxu0 0.0
      %965 = vmatpush1.msra.mxu0 0.0
      %966 = vmatprep.subr.mxu0 0.0
      %967 = vmatpush1.msra.mxu0 0.0
      %968 = vmatprep.subr.mxu0 0.0
      %969 = vmatpush1.msra.mxu0 0.0
      %970 = vmatprep.subr.mxu0 0.0
      %971 = vmatpush1.msra.mxu0 0.0
      %972 = vmatprep.subr.mxu0 0.0
      %973 = vmatpush1.msra.mxu0 0.0
      %974 = vmatprep.subr.mxu0 0.0
      %975 = vmatpush1.msra.mxu0 0.0
      %976 = vmatprep.subr.mxu0 0.0
      %977 = vmatpush1.msra.mxu0 0.0
      %978 = vmatprep.subr.mxu0 0.0
      %979 = vmatpush1.msra.mxu0 %v555
      %980 = vmatprep.subr.mxu0 0.0
      %981 = vmatpush1.msra.mxu0 %v554
      %982 = vmatprep.subr.mxu0 0.0
      %983 = vmatpush1.msra.mxu0 %v553
      %984 = vmatprep.subr.mxu0 0.0
      %985 = vmatpush1.msra.mxu0 %v552
      %986 = vmatprep.subr.mxu0 0.0
      %987 = vmatpush1.msra.mxu0 %v551
      %988 = vmatprep.subr.mxu0 0.0
      %989 = vmatpush1.msra.mxu0 %v550
      %990 = vmatprep.subr.mxu0 0.0
      %991 = vmatpush2.msra.mxu0 0.0
      %992 = vmatprep.subr.mxu0 0.0
      %993 = vmatpush2.msra.mxu0 0.0
      %994 = vmatprep.subr.mxu0 0.0
      %995 = vmatpush2.msra.mxu0 0.0
      %996 = vmatprep.subr.mxu0 0.0
      %997 = vmatpush2.msra.mxu0 0.0
      %998 = vmatprep.subr.mxu0 0.0
      %999 = vmatpush2.msra.mxu0 0.0
      %1000 = vmatprep.subr.mxu0 0.0
      %1001 = vmatpush2.msra.mxu0 0.0
      %1002 = vmatprep.subr.mxu0 0.0
      %1003 = vmatpush2.msra.mxu0 0.0
      %1004 = vmatprep.subr.mxu0 0.0
      %1005 = vmatpush2.msra.mxu0 0.0
      %1006 = vmatprep.subr.mxu0 0.0
      %1007 = vmatpush2.msra.mxu0 0.0
      %1008 = vmatprep.subr.mxu0 0.0
      %1009 = vmatpush2.msra.mxu0 0.0
      %1010 = vmatprep.subr.mxu0 0.0
      %1011 = vmatpush2.msra.mxu0 0.0
      %1012 = vmatprep.subr.mxu0 0.0
      %1013 = vmatpush2.msra.mxu0 0.0
      %1014 = vmatprep.subr.mxu0 0.0
      %1015 = vmatpush2.msra.mxu0 0.0
      %1016 = vmatprep.subr.mxu0 0.0
      %1017 = vmatpush2.msra.mxu0 0.0
      %1018 = vmatprep.subr.mxu0 0.0
      %1019 = vmatpush2.msra.mxu0 0.0
      %1020 = vmatprep.subr.mxu0 0.0
      %1021 = vmatpush2.msra.mxu0 0.0
      %1022 = vmatprep.mubr.f32.mxu0 0.0
      %1023 = vmatmul.mubr.f32.gmra.mxu0 %v653
      %v1024 = vpop.f32.mrf.mxu0
      %v1025 = vadd.f32 0.0, %v1024
      %v1026 = vpop.f32.mrf.mxu0
      %1027 = vmatprep.mubr.f32.mxu0 0.0
      %1028 = vmatmul.mubr.f32.gmra.mxu0 %v656
      %v1029 = vpop.f32.mrf.mxu0
      %v1030 = vadd.f32 0.0, %v1029
      %v1031 = vpop.f32.mrf.mxu0
      %1032 = vdwg.mxu0
      %1033 = vmatprep.subr.mxu0 0.0
      %1034 = vmatpush1.msra.mxu0 0.0
      %1035 = vmatprep.subr.mxu0 0.0
      %1036 = vmatpush1.msra.mxu0 0.0
      %1037 = vmatprep.subr.mxu0 0.0
      %1038 = vmatpush1.msra.mxu0 0.0
      %1039 = vmatprep.subr.mxu0 0.0
      %1040 = vmatpush1.msra.mxu0 0.0
      %1041 = vmatprep.subr.mxu0 0.0
      %1042 = vmatpush1.msra.mxu0 0.0
      %1043 = vmatprep.subr.mxu0 0.0
      %1044 = vmatpush1.msra.mxu0 0.0
      %1045 = vmatprep.subr.mxu0 0.0
      %1046 = vmatpush1.msra.mxu0 0.0
      %1047 = vmatprep.subr.mxu0 0.0
      %1048 = vmatpush1.msra.mxu0 0.0
      %1049 = vmatprep.subr.mxu0 0.0
      %1050 = vmatpush1.msra.mxu0 0.0
      %1051 = vmatprep.subr.mxu0 0.0
      %1052 = vmatpush1.msra.mxu0 0.0
      %1053 = vmatprep.subr.mxu0 0.0
      %1054 = vmatpush1.msra.mxu0 %v561
      %1055 = vmatprep.subr.mxu0 0.0
      %1056 = vmatpush1.msra.mxu0 %v560
      %1057 = vmatprep.subr.mxu0 0.0
      %1058 = vmatpush1.msra.mxu0 %v559
      %1059 = vmatprep.subr.mxu0 0.0
      %1060 = vmatpush1.msra.mxu0 %v558
      %1061 = vmatprep.subr.mxu0 0.0
      %1062 = vmatpush1.msra.mxu0 %v557
      %1063 = vmatprep.subr.mxu0 0.0
      %1064 = vmatpush1.msra.mxu0 %v556
      %1065 = vmatprep.subr.mxu0 0.0
      %1066 = vmatpush2.msra.mxu0 0.0
      %1067 = vmatprep.subr.mxu0 0.0
      %1068 = vmatpush2.msra.mxu0 0.0
      %1069 = vmatprep.subr.mxu0 0.0
      %1070 = vmatpush2.msra.mxu0 0.0
      %1071 = vmatprep.subr.mxu0 0.0
      %1072 = vmatpush2.msra.mxu0 0.0
      %1073 = vmatprep.subr.mxu0 0.0
      %1074 = vmatpush2.msra.mxu0 0.0
      %1075 = vmatprep.subr.mxu0 0.0
      %1076 = vmatpush2.msra.mxu0 0.0
      %1077 = vmatprep.subr.mxu0 0.0
      %1078 = vmatpush2.msra.mxu0 0.0
      %1079 = vmatprep.subr.mxu0 0.0
      %1080 = vmatpush2.msra.mxu0 0.0
      %1081 = vmatprep.subr.mxu0 0.0
      %1082 = vmatpush2.msra.mxu0 0.0
      %1083 = vmatprep.subr.mxu0 0.0
      %1084 = vmatpush2.msra.mxu0 0.0
      %1085 = vmatprep.subr.mxu0 0.0
      %1086 = vmatpush2.msra.mxu0 0.0
      %1087 = vmatprep.subr.mxu0 0.0
      %1088 = vmatpush2.msra.mxu0 0.0
      %1089 = vmatprep.subr.mxu0 0.0
      %1090 = vmatpush2.msra.mxu0 0.0
      %1091 = vmatprep.subr.mxu0 0.0
      %1092 = vmatpush2.msra.mxu0 0.0
      %1093 = vmatprep.subr.mxu0 0.0
      %1094 = vmatpush2.msra.mxu0 0.0
      %1095 = vmatprep.subr.mxu0 0.0
      %1096 = vmatpush2.msra.mxu0 0.0
      %1097 = vmatprep.mubr.f32.mxu0 0.0
      %1098 = vmatmul.mubr.f32.gmra.mxu0 %v653
      %v1099 = vpop.f32.mrf.mxu0
      %v1100 = vadd.f32 0.0, %v1099
      %v1101 = vpop.f32.mrf.mxu0
      %1102 = vmatprep.mubr.f32.mxu0 0.0
      %1103 = vmatmul.mubr.f32.gmra.mxu0 %v656
      %v1104 = vpop.f32.mrf.mxu0
      %v1105 = vadd.f32 0.0, %v1104
      %v1106 = vpop.f32.mrf.mxu0
      %1107 = vdwg.mxu0
      %vm1108 = vcmask 130048
      %v1110 = vsel %vm1108, %v725, 0
      %v1113 = vsel %vm1108, %v730, 0
      %v1116 = vsel %vm1108, %v875, 0
      %v1119 = vsel %vm1108, %v880, 0
      %1121 = vmatprep.subr.mxu0 0.0
      %1122 = vmatpush1.xpose.msra.mxu0 0.0
      %1123 = vmatprep.subr.mxu0 0.0
      %1124 = vmatpush1.xpose.msra.mxu0 0.0
      %1125 = vmatprep.subr.mxu0 0.0
      %1126 = vmatpush1.xpose.msra.mxu0 0.0
      %1127 = vmatprep.subr.mxu0 0.0
      %1128 = vmatpush1.xpose.msra.mxu0 0.0
      %1129 = vmatprep.subr.mxu0 0.0
      %1130 = vmatpush1.xpose.msra.mxu0 0.0
      %1131 = vmatprep.subr.mxu0 0.0
      %1132 = vmatpush1.xpose.msra.mxu0 0.0
      %1133 = vmatprep.subr.mxu0 0.0
      %1134 = vmatpush1.xpose.msra.mxu0 0.0
      %1135 = vmatprep.subr.mxu0 0.0
      %1136 = vmatpush1.xpose.msra.mxu0 0.0
      %1137 = vmatprep.subr.mxu0 0.0
      %1138 = vmatpush1.xpose.msra.mxu0 0.0
      %1139 = vmatprep.subr.mxu0 0.0
      %1140 = vmatpush1.xpose.msra.mxu0 0.0
      %1141 = vmatprep.subr.mxu0 0.0
      %1142 = vmatpush1.xpose.msra.mxu0 0.0
      %1143 = vmatprep.subr.mxu0 0.0
      %1144 = vmatpush1.xpose.msra.mxu0 0.0
      %1145 = vmatprep.subr.mxu0 0.0
      %1146 = vmatpush1.xpose.msra.mxu0 0.0
      %1147 = vmatprep.subr.mxu0 0.0
      %1148 = vmatpush1.xpose.msra.mxu0 0.0
      %1149 = vmatprep.subr.mxu0 0.0
      %1150 = vmatpush1.xpose.msra.mxu0 %v1119
      %1151 = vmatprep.subr.mxu0 0.0
      %1152 = vmatpush1.xpose.msra.mxu0 %v1116
      %1153 = vmatprep.subr.mxu0 0.0
      %1154 = vmatpush2.xpose.msra.mxu0 0.0
      %1155 = vmatprep.subr.mxu0 0.0
      %1156 = vmatpush2.xpose.msra.mxu0 0.0
      %1157 = vmatprep.subr.mxu0 0.0
      %1158 = vmatpush2.xpose.msra.mxu0 0.0
      %1159 = vmatprep.subr.mxu0 0.0
      %1160 = vmatpush2.xpose.msra.mxu0 0.0
      %1161 = vmatprep.subr.mxu0 0.0
      %1162 = vmatpush2.xpose.msra.mxu0 0.0
      %1163 = vmatprep.subr.mxu0 0.0
      %1164 = vmatpush2.xpose.msra.mxu0 0.0
      %1165 = vmatprep.subr.mxu0 0.0
      %1166 = vmatpush2.xpose.msra.mxu0 0.0
      %1167 = vmatprep.subr.mxu0 0.0
      %1168 = vmatpush2.xpose.msra.mxu0 0.0
      %1169 = vmatprep.subr.mxu0 0.0
      %1170 = vmatpush2.xpose.msra.mxu0 0.0
      %1171 = vmatprep.subr.mxu0 0.0
      %1172 = vmatpush2.xpose.msra.mxu0 0.0
      %1173 = vmatprep.subr.mxu0 0.0
      %1174 = vmatpush2.xpose.msra.mxu0 0.0
      %1175 = vmatprep.subr.mxu0 0.0
      %1176 = vmatpush2.xpose.msra.mxu0 0.0
      %1177 = vmatprep.subr.mxu0 0.0
      %1178 = vmatpush2.xpose.msra.mxu0 0.0
      %1179 = vmatprep.subr.mxu0 0.0
      %1180 = vmatpush2.xpose.msra.mxu0 0.0
      %1181 = vmatprep.subr.mxu0 0.0
      %1182 = vmatpush2.xpose.msra.mxu0 0.0
      %1183 = vmatprep.subr.mxu0 0.0
      %1184 = vmatpush2.xpose.msra.mxu0 0.0
      %1185 = vmatprep.mubr.f32.mxu0 0.0
      %1186 = vmatmul.mubr.f32.gmra.mxu0 %v1110
      %v1187 = vpop.f32.mrf.mxu0
      %v1188 = vadd.f32 0.0, %v1187
      %v1189 = vpop.f32.mrf.mxu0
      %1190 = vmatprep.mubr.f32.mxu0 0.0
      %1191 = vmatmul.mubr.f32.gmra.mxu0 %v1113
      %v1192 = vpop.f32.mrf.mxu0
      %v1193 = vadd.f32 0.0, %v1192
      %v1194 = vpop.f32.mrf.mxu0
      %1195 = vdwg.mxu0
      %v1197 = vsel %vm1108, %v800, 0
      %v1200 = vsel %vm1108, %v805, 0
      %v1203 = vsel %vm1108, %v950, 0
      %v1206 = vsel %vm1108, %v955, 0
      %1208 = vmatprep.subr.mxu0 0.0
      %1209 = vmatpush1.xpose.msra.mxu0 0.0
      %1210 = vmatprep.subr.mxu0 0.0
      %1211 = vmatpush1.xpose.msra.mxu0 0.0
      %1212 = vmatprep.subr.mxu0 0.0
      %1213 = vmatpush1.xpose.msra.mxu0 0.0
      %1214 = vmatprep.subr.mxu0 0.0
      %1215 = vmatpush1.xpose.msra.mxu0 0.0
      %1216 = vmatprep.subr.mxu0 0.0
      %1217 = vmatpush1.xpose.msra.mxu0 0.0
      %1218 = vmatprep.subr.mxu0 0.0
      %1219 = vmatpush1.xpose.msra.mxu0 0.0
      %1220 = vmatprep.subr.mxu0 0.0
      %1221 = vmatpush1.xpose.msra.mxu0 0.0
      %1222 = vmatprep.subr.mxu0 0.0
      %1223 = vmatpush1.xpose.msra.mxu0 0.0
      %1224 = vmatprep.subr.mxu0 0.0
      %1225 = vmatpush1.xpose.msra.mxu0 0.0
      %1226 = vmatprep.subr.mxu0 0.0
      %1227 = vmatpush1.xpose.msra.mxu0 0.0
      %1228 = vmatprep.subr.mxu0 0.0
      %1229 = vmatpush1.xpose.msra.mxu0 0.0
      %1230 = vmatprep.subr.mxu0 0.0
      %1231 = vmatpush1.xpose.msra.mxu0 0.0
      %1232 = vmatprep.subr.mxu0 0.0
      %1233 = vmatpush1.xpose.msra.mxu0 0.0
      %1234 = vmatprep.subr.mxu0 0.0
      %1235 = vmatpush1.xpose.msra.mxu0 0.0
      %1236 = vmatprep.subr.mxu0 0.0
      %1237 = vmatpush1.xpose.msra.mxu0 %v1206
      %1238 = vmatprep.subr.mxu0 0.0
      %1239 = vmatpush1.xpose.msra.mxu0 %v1203
      %1240 = vmatprep.subr.mxu0 0.0
      %1241 = vmatpush2.xpose.msra.mxu0 0.0
      %1242 = vmatprep.subr.mxu0 0.0
      %1243 = vmatpush2.xpose.msra.mxu0 0.0
      %1244 = vmatprep.subr.mxu0 0.0
      %1245 = vmatpush2.xpose.msra.mxu0 0.0
      %1246 = vmatprep.subr.mxu0 0.0
      %1247 = vmatpush2.xpose.msra.mxu0 0.0
      %1248 = vmatprep.subr.mxu0 0.0
      %1249 = vmatpush2.xpose.msra.mxu0 0.0
      %1250 = vmatprep.subr.mxu0 0.0
      %1251 = vmatpush2.xpose.msra.mxu0 0.0
      %1252 = vmatprep.subr.mxu0 0.0
      %1253 = vmatpush2.xpose.msra.mxu0 0.0
      %1254 = vmatprep.subr.mxu0 0.0
      %1255 = vmatpush2.xpose.msra.mxu0 0.0
      %1256 = vmatprep.subr.mxu0 0.0
      %1257 = vmatpush2.xpose.msra.mxu0 0.0
      %1258 = vmatprep.subr.mxu0 0.0
      %1259 = vmatpush2.xpose.msra.mxu0 0.0
      %1260 = vmatprep.subr.mxu0 0.0
      %1261 = vmatpush2.xpose.msra.mxu0 0.0
      %1262 = vmatprep.subr.mxu0 0.0
      %1263 = vmatpush2.xpose.msra.mxu0 0.0
      %1264 = vmatprep.subr.mxu0 0.0
      %1265 = vmatpush2.xpose.msra.mxu0 0.0
      %1266 = vmatprep.subr.mxu0 0.0
      %1267 = vmatpush2.xpose.msra.mxu0 0.0
      %1268 = vmatprep.subr.mxu0 0.0
      %1269 = vmatpush2.xpose.msra.mxu0 0.0
      %1270 = vmatprep.subr.mxu0 0.0
      %1271 = vmatpush2.xpose.msra.mxu0 0.0
      %1272 = vmatprep.mubr.f32.mxu0 0.0
      %1273 = vmatmul.mubr.f32.gmra.mxu0 %v1197
      %v1274 = vpop.f32.mrf.mxu0
      %v1275 = vadd.f32 0.0, %v1274
      %v1276 = vpop.f32.mrf.mxu0
      %1277 = vmatprep.mubr.f32.mxu0 0.0
      %1278 = vmatmul.mubr.f32.gmra.mxu0 %v1200
      %v1279 = vpop.f32.mrf.mxu0
      %v1280 = vadd.f32 0.0, %v1279
      %v1281 = vpop.f32.mrf.mxu0
      %1282 = vdwg.mxu0
      %v1283 = vmul.f32 %v1188, 0.25
      %v1284 = vmul.f32 %v1193, 0.25
      %v1285 = vmul.f32 %v1275, 0.25
      %v1286 = vmul.f32 %v1280, 0.25
      %vm1287 = vcmask 97280
      %v1288 = vsel %vm1287, %v1283, -inf
      %1289 = vmax.xlane.f32.xlu0 %v1288
      %v1290 = vpop.xlane.xlu0 %1289
      %vm1291 = vcmask 93184
      %v1292 = vsel %vm1291, %v1284, -inf
      %1293 = vmax.xlane.f32.xlu0 %v1292
      %v1294 = vpop.xlane.xlu0 %1293
      %v1295 = vsel %vm1287, %v1285, -inf
      %1296 = vmax.xlane.f32.xlu0 %v1295
      %v1297 = vpop.xlane.xlu0 %1296
      %v1298 = vsel %vm1291, %v1286, -inf
      %1299 = vmax.xlane.f32.xlu0 %v1298
      %v1300 = vpop.xlane.xlu0 %1299
      %v1301 = vsub.f32 %v1283, %v1290
      %v1302 = vsub.f32 %v1284, %v1294
      %v1303 = vsub.f32 %v1285, %v1297
      %v1304 = vsub.f32 %v1286, %v1300
      %v1305 = vmul.f32 %v1301, 1.442695
      %v1306 = vpow.pop %v1305
      %v1307 = vmul.f32 %v1302, 1.442695
      %v1308 = vpow.pop %v1307
      %v1309 = vmul.f32 %v1303, 1.442695
      %v1310 = vpow.pop %v1309
      %v1311 = vmul.f32 %v1304, 1.442695
      %v1312 = vpow.pop %v1311
      %v1313 = vsel %vm1287, %v1306, 0.0
      %1314 = vadd.xlane.f32.xlu0 %v1313
      %v1315 = vpop.xlane.xlu0 %1314
      %v1316 = vsel %vm1291, %v1308, 0.0
      %1317 = vadd.xlane.f32.xlu0 %v1316
      %v1318 = vpop.xlane.xlu0 %1317
      %v1319 = vsel %vm1287, %v1310, 0.0
      %1320 = vadd.xlane.f32.xlu0 %v1319
      %v1321 = vpop.xlane.xlu0 %1320
      %v1322 = vsel %vm1291, %v1312, 0.0
      %1323 = vadd.xlane.f32.xlu0 %v1322
      %v1324 = vpop.xlane.xlu0 %1323
      %v1325 = vrcp.pop %v1315
      %v1326 = vmul.f32 %v1306, %v1325
      %v1327 = vrcp.pop %v1318
      %v1328 = vmul.f32 %v1308, %v1327
      %v1329 = vrcp.pop %v1321
      %v1330 = vmul.f32 %v1310, %v1329
      %v1331 = vrcp.pop %v1324
      %v1332 = vmul.f32 %v1312, %v1331
      %v1334 = vsel %vm1287, %v1326, 0
      %v1337 = vsel %vm1287, %v1328, 0
      %vm1339 = vcmask 1043456
      %v1341 = vsel %vm1339, %v1030, 0
      %1343 = vmatprep.subr.mxu0 0.0
      %1344 = vmatpush1.msra.mxu0 0.0
      %1345 = vmatprep.subr.mxu0 0.0
      %1346 = vmatpush1.msra.mxu0 0.0
      %1347 = vmatprep.subr.mxu0 0.0
      %1348 = vmatpush1.msra.mxu0 0.0
      %1349 = vmatprep.subr.mxu0 0.0
      %1350 = vmatpush1.msra.mxu0 0.0
      %1351 = vmatprep.subr.mxu0 0.0
      %1352 = vmatpush1.msra.mxu0 0.0
      %1353 = vmatprep.subr.mxu0 0.0
      %1354 = vmatpush1.msra.mxu0 0.0
      %1355 = vmatprep.subr.mxu0 0.0
      %1356 = vmatpush1.msra.mxu0 0.0
      %1357 = vmatprep.subr.mxu0 0.0
      %1358 = vmatpush1.msra.mxu0 0.0
      %1359 = vmatprep.subr.mxu0 0.0
      %1360 = vmatpush1.msra.mxu0 0.0
      %1361 = vmatprep.subr.mxu0 0.0
      %1362 = vmatpush1.msra.mxu0 0.0
      %1363 = vmatprep.subr.mxu0 0.0
      %1364 = vmatpush1.msra.mxu0 0.0
      %1365 = vmatprep.subr.mxu0 0.0
      %1366 = vmatpush1.msra.mxu0 0.0
      %1367 = vmatprep.subr.mxu0 0.0
      %1368 = vmatpush1.msra.mxu0 0.0
      %1369 = vmatprep.subr.mxu0 0.0
      %1370 = vmatpush1.msra.mxu0 0.0
      %1371 = vmatprep.subr.mxu0 0.0
      %1372 = vmatpush1.msra.mxu0 %v1341
      %1373 = vmatprep.subr.mxu0 0.0
      %1374 = vmatpush1.msra.mxu0 %v1025
      %1375 = vmatprep.subr.mxu0 0.0
      %1376 = vmatpush2.msra.mxu0 0.0
      %1377 = vmatprep.subr.mxu0 0.0
      %1378 = vmatpush2.msra.mxu0 0.0
      %1379 = vmatprep.subr.mxu0 0.0
      %1380 = vmatpush2.msra.mxu0 0.0
      %1381 = vmatprep.subr.mxu0 0.0
      %1382 = vmatpush2.msra.mxu0 0.0
      %1383 = vmatprep.subr.mxu0 0.0
      %1384 = vmatpush2.msra.mxu0 0.0
      %1385 = vmatprep.subr.mxu0 0.0
      %1386 = vmatpush2.msra.mxu0 0.0
      %1387 = vmatprep.subr.mxu0 0.0
      %1388 = vmatpush2.msra.mxu0 0.0
      %1389 = vmatprep.subr.mxu0 0.0
      %1390 = vmatpush2.msra.mxu0 0.0
      %1391 = vmatprep.subr.mxu0 0.0
      %1392 = vmatpush2.msra.mxu0 0.0
      %1393 = vmatprep.subr.mxu0 0.0
      %1394 = vmatpush2.msra.mxu0 0.0
      %1395 = vmatprep.subr.mxu0 0.0
      %1396 = vmatpush2.msra.mxu0 0.0
      %1397 = vmatprep.subr.mxu0 0.0
      %1398 = vmatpush2.msra.mxu0 0.0
      %1399 = vmatprep.subr.mxu0 0.0
      %1400 = vmatpush2.msra.mxu0 0.0
      %1401 = vmatprep.subr.mxu0 0.0
      %1402 = vmatpush2.msra.mxu0 0.0
      %1403 = vmatprep.subr.mxu0 0.0
      %1404 = vmatpush2.msra.mxu0 0.0
      %1405 = vmatprep.subr.mxu0 0.0
      %1406 = vmatpush2.msra.mxu0 0.0
      %1407 = vmatprep.mubr.f32.mxu0 0.0
      %1408 = vmatmul.mubr.f32.gmra.mxu0 %v1334
      %v1409 = vpop.f32.mrf.mxu0
      %v1410 = vadd.f32 0.0, %v1409
      %v1411 = vpop.f32.mrf.mxu0
      %1412 = vmatprep.mubr.f32.mxu0 0.0
      %1413 = vmatmul.mubr.f32.gmra.mxu0 %v1337
      %v1414 = vpop.f32.mrf.mxu0
      %v1415 = vadd.f32 0.0, %v1414
      %v1416 = vpop.f32.mrf.mxu0
      %1417 = vdwg.mxu0
      %v1419 = vsel %vm1287, %v1330, 0
      %v1422 = vsel %vm1287, %v1332, 0
      %v1425 = vsel %vm1339, %v1105, 0
      %1427 = vmatprep.subr.mxu0 0.0
      %1428 = vmatpush1.msra.mxu0 0.0
      %1429 = vmatprep.subr.mxu0 0.0
      %1430 = vmatpush1.msra.mxu0 0.0
      %1431 = vmatprep.subr.mxu0 0.0
      %1432 = vmatpush1.msra.mxu0 0.0
      %1433 = vmatprep.subr.mxu0 0.0
      %1434 = vmatpush1.msra.mxu0 0.0
      %1435 = vmatprep.subr.mxu0 0.0
      %1436 = vmatpush1.msra.mxu0 0.0
      %1437 = vmatprep.subr.mxu0 0.0
      %1438 = vmatpush1.msra.mxu0 0.0
      %1439 = vmatprep.subr.mxu0 0.0
      %1440 = vmatpush1.msra.mxu0 0.0
      %1441 = vmatprep.subr.mxu0 0.0
      %1442 = vmatpush1.msra.mxu0 0.0
      %1443 = vmatprep.subr.mxu0 0.0
      %1444 = vmatpush1.msra.mxu0 0.0
      %1445 = vmatprep.subr.mxu0 0.0
      %1446 = vmatpush1.msra.mxu0 0.0
      %1447 = vmatprep.subr.mxu0 0.0
      %1448 = vmatpush1.msra.mxu0 0.0
      %1449 = vmatprep.subr.mxu0 0.0
      %1450 = vmatpush1.msra.mxu0 0.0
      %1451 = vmatprep.subr.mxu0 0.0
      %1452 = vmatpush1.msra.mxu0 0.0
      %1453 = vmatprep.subr.mxu0 0.0
      %1454 = vmatpush1.msra.mxu0 0.0
      %1455 = vmatprep.subr.mxu0 0.0
      %1456 = vmatpush1.msra.mxu0 %v1425
      %1457 = vmatprep.subr.mxu0 0.0
      %1458 = vmatpush1.msra.mxu0 %v1100
      %1459 = vmatprep.subr.mxu0 0.0
      %1460 = vmatpush2.msra.mxu0 0.0
      %1461 = vmatprep.subr.mxu0 0.0
      %1462 = vmatpush2.msra.mxu0 0.0
      %1463 = vmatprep.subr.mxu0 0.0
      %1464 = vmatpush2.msra.mxu0 0.0
      %1465 = vmatprep.subr.mxu0 0.0
      %1466 = vmatpush2.msra.mxu0 0.0
      %1467 = vmatprep.subr.mxu0 0.0
      %1468 = vmatpush2.msra.mxu0 0.0
      %1469 = vmatprep.subr.mxu0 0.0
      %1470 = vmatpush2.msra.mxu0 0.0
      %1471 = vmatprep.subr.mxu0 0.0
      %1472 = vmatpush2.msra.mxu0 0.0
      %1473 = vmatprep.subr.mxu0 0.0
      %1474 = vmatpush2.msra.mxu0 0.0
      %1475 = vmatprep.subr.mxu0 0.0
      %1476 = vmatpush2.msra.mxu0 0.0
      %1477 = vmatprep.subr.mxu0 0.0
      %1478 = vmatpush2.msra.mxu0 0.0
      %1479 = vmatprep.subr.mxu0 0.0
      %1480 = vmatpush2.msra.mxu0 0.0
      %1481 = vmatprep.subr.mxu0 0.0
      %1482 = vmatpush2.msra.mxu0 0.0
      %1483 = vmatprep.subr.mxu0 0.0
      %1484 = vmatpush2.msra.mxu0 0.0
      %1485 = vmatprep.subr.mxu0 0.0
      %1486 = vmatpush2.msra.mxu0 0.0
      %1487 = vmatprep.subr.mxu0 0.0
      %1488 = vmatpush2.msra.mxu0 0.0
      %1489 = vmatprep.subr.mxu0 0.0
      %1490 = vmatpush2.msra.mxu0 0.0
      %1491 = vmatprep.mubr.f32.mxu0 0.0
      %1492 = vmatmul.mubr.f32.gmra.mxu0 %v1419
      %v1493 = vpop.f32.mrf.mxu0
      %v1494 = vadd.f32 0.0, %v1493
      %v1495 = vpop.f32.mrf.mxu0
      %1496 = vmatprep.mubr.f32.mxu0 0.0
      %1497 = vmatmul.mubr.f32.gmra.mxu0 %v1422
      %v1498 = vpop.f32.mrf.mxu0
      %v1499 = vadd.f32 0.0, %v1498
      %v1500 = vpop.f32.mrf.mxu0
      %1501 = vdwg.mxu0
      %v1503 = vsel %vm1108, %v1410, 0
      %v1506 = vsel %vm1108, %v1415, 0
      %1508 = vmatprep.subr.mxu0 0.0
      %1509 = vmatpush1.msra.mxu0 0.0
      %1510 = vmatprep.subr.mxu0 0.0
      %1511 = vmatpush1.msra.mxu0 0.0
      %1512 = vmatprep.subr.mxu0 0.0
      %1513 = vmatpush1.msra.mxu0 0.0
      %1514 = vmatprep.subr.mxu0 0.0
      %1515 = vmatpush1.msra.mxu0 0.0
      %1516 = vmatprep.subr.mxu0 0.0
      %1517 = vmatpush1.msra.mxu0 0.0
      %1518 = vmatprep.subr.mxu0 0.0
      %1519 = vmatpush1.msra.mxu0 0.0
      %1520 = vmatprep.subr.mxu0 0.0
      %1521 = vmatpush1.msra.mxu0 0.0
      %1522 = vmatprep.subr.mxu0 0.0
      %1523 = vmatpush1.msra.mxu0 0.0
      %1524 = vmatprep.subr.mxu0 0.0
      %1525 = vmatpush1.msra.mxu0 0.0
      %1526 = vmatprep.subr.mxu0 0.0
      %1527 = vmatpush1.msra.mxu0 0.0
      %1528 = vmatprep.subr.mxu0 0.0
      %1529 = vmatpush1.msra.mxu0 0.0
      %1530 = vmatprep.subr.mxu0 0.0
      %1531 = vmatpush1.msra.mxu0 0.0
      %1532 = vmatprep.subr.mxu0 0.0
      %1533 = vmatpush1.msra.mxu0 0.0
      %1534 = vmatprep.subr.mxu0 0.0
      %1535 = vmatpush1.msra.mxu0 0.0
      %1536 = vmatprep.subr.mxu0 0.0
      %1537 = vmatpush1.msra.mxu0 %v563
      %1538 = vmatprep.subr.mxu0 0.0
      %1539 = vmatpush1.msra.mxu0 %v562
      %1540 = vmatprep.subr.mxu0 0.0
      %1541 = vmatpush2.msra.mxu0 0.0
      %1542 = vmatprep.subr.mxu0 0.0
      %1543 = vmatpush2.msra.mxu0 0.0
      %1544 = vmatprep.subr.mxu0 0.0
      %1545 = vmatpush2.msra.mxu0 0.0
      %1546 = vmatprep.subr.mxu0 0.0
      %1547 = vmatpush2.msra.mxu0 0.0
      %1548 = vmatprep.subr.mxu0 0.0
      %1549 = vmatpush2.msra.mxu0 0.0
      %1550 = vmatprep.subr.mxu0 0.0
      %1551 = vmatpush2.msra.mxu0 0.0
      %1552 = vmatprep.subr.mxu0 0.0
      %1553 = vmatpush2.msra.mxu0 0.0
      %1554 = vmatprep.subr.mxu0 0.0
      %1555 = vmatpush2.msra.mxu0 0.0
      %1556 = vmatprep.subr.mxu0 0.0
      %1557 = vmatpush2.msra.mxu0 0.0
      %1558 = vmatprep.subr.mxu0 0.0
      %1559 = vmatpush2.msra.mxu0 0.0
      %1560 = vmatprep.subr.mxu0 0.0
      %1561 = vmatpush2.msra.mxu0 0.0
      %1562 = vmatprep.subr.mxu0 0.0
      %1563 = vmatpush2.msra.mxu0 0.0
      %1564 = vmatprep.subr.mxu0 0.0
      %1565 = vmatpush2.msra.mxu0 0.0
      %1566 = vmatprep.subr.mxu0 0.0
      %1567 = vmatpush2.msra.mxu0 0.0
      %1568 = vmatprep.subr.mxu0 0.0
      %1569 = vmatpush2.msra.mxu0 0.0
      %1570 = vmatprep.subr.mxu0 0.0
      %1571 = vmatpush2.msra.mxu0 0.0
      %1572 = vmatprep.mubr.f32.mxu0 0.0
      %1573 = vmatmul.mubr.f32.gmra.mxu0 %v1503
      %v1574 = vpop.f32.mrf.mxu0
      %v1575 = vadd.f32 0.0, %v1574
      %v1576 = vpop.f32.mrf.mxu0
      %1577 = vmatprep.mubr.f32.mxu0 0.0
      %1578 = vmatmul.mubr.f32.gmra.mxu0 %v1506
      %v1579 = vpop.f32.mrf.mxu0
      %v1580 = vadd.f32 0.0, %v1579
      %v1581 = vpop.f32.mrf.mxu0
      %1582 = vdwg.mxu0
      %v1584 = vsel %vm1108, %v1494, 0
      %v1587 = vsel %vm1108, %v1499, 0
      %1589 = vmatprep.subr.mxu0 0.0
      %1590 = vmatpush1.msra.mxu0 0.0
      %1591 = vmatprep.subr.mxu0 0.0
      %1592 = vmatpush1.msra.mxu0 0.0
      %1593 = vmatprep.subr.mxu0 0.0
      %1594 = vmatpush1.msra.mxu0 0.0
      %1595 = vmatprep.subr.mxu0 0.0
      %1596 = vmatpush1.msra.mxu0 0.0
      %1597 = vmatprep.subr.mxu0 0.0
      %1598 = vmatpush1.msra.mxu0 0.0
      %1599 = vmatprep.subr.mxu0 0.0
      %1600 = vmatpush1.msra.mxu0 0.0
      %1601 = vmatprep.subr.mxu0 0.0
      %1602 = vmatpush1.msra.mxu0 0.0
      %1603 = vmatprep.subr.mxu0 0.0
      %1604 = vmatpush1.msra.mxu0 0.0
      %1605 = vmatprep.subr.mxu0 0.0
      %1606 = vmatpush1.msra.mxu0 0.0
      %1607 = vmatprep.subr.mxu0 0.0
      %1608 = vmatpush1.msra.mxu0 0.0
      %1609 = vmatprep.subr.mxu0 0.0
      %1610 = vmatpush1.msra.mxu0 0.0
      %1611 = vmatprep.subr.mxu0 0.0
      %1612 = vmatpush1.msra.mxu0 0.0
      %1613 = vmatprep.subr.mxu0 0.0
      %1614 = vmatpush1.msra.mxu0 0.0
      %1615 = vmatprep.subr.mxu0 0.0
      %1616 = vmatpush1.msra.mxu0 0.0
      %1617 = vmatprep.subr.mxu0 0.0
      %1618 = vmatpush1.msra.mxu0 %v565
      %1619 = vmatprep.subr.mxu0 0.0
      %1620 = vmatpush1.msra.mxu0 %v564
      %1621 = vmatprep.subr.mxu0 0.0
      %1622 = vmatpush2.msra.mxu0 0.0
      %1623 = vmatprep.subr.mxu0 0.0
      %1624 = vmatpush2.msra.mxu0 0.0
      %1625 = vmatprep.subr.mxu0 0.0
      %1626 = vmatpush2.msra.mxu0 0.0
      %1627 = vmatprep.subr.mxu0 0.0
      %1628 = vmatpush2.msra.mxu0 0.0
      %1629 = vmatprep.subr.mxu0 0.0
      %1630 = vmatpush2.msra.mxu0 0.0
      %1631 = vmatprep.subr.mxu0 0.0
      %1632 = vmatpush2.msra.mxu0 0.0
      %1633 = vmatprep.subr.mxu0 0.0
      %1634 = vmatpush2.msra.mxu0 0.0
      %1635 = vmatprep.subr.mxu0 0.0
      %1636 = vmatpush2.msra.mxu0 0.0
      %1637 = vmatprep.subr.mxu0 0.0
      %1638 = vmatpush2.msra.mxu0 0.0
      %1639 = vmatprep.subr.mxu0 0.0
      %1640 = vmatpush2.msra.mxu0 0.0
      %1641 = vmatprep.subr.mxu0 0.0
      %1642 = vmatpush2.msra.mxu0 0.0
      %1643 = vmatprep.subr.mxu0 0.0
      %1644 = vmatpush2.msra.mxu0 0.0
      %1645 = vmatprep.subr.mxu0 0.0
      %1646 = vmatpush2.msra.mxu0 0.0
      %1647 = vmatprep.subr.mxu0 0.0
      %1648 = vmatpush2.msra.mxu0 0.0
      %1649 = vmatprep.subr.mxu0 0.0
      %1650 = vmatpush2.msra.mxu0 0.0
      %1651 = vmatprep.subr.mxu0 0.0
      %1652 = vmatpush2.msra.mxu0 0.0
      %1653 = vmatprep.mubr.f32.mxu0 0.0
      %1654 = vmatmul.mubr.f32.gmra.mxu0 %v1584
      %v1655 = vpop.f32.mrf.mxu0
      %v1656 = vadd.f32 0.0, %v1655
      %v1657 = vpop.f32.mrf.mxu0
      %1658 = vmatprep.mubr.f32.mxu0 0.0
      %1659 = vmatmul.mubr.f32.gmra.mxu0 %v1587
      %v1660 = vpop.f32.mrf.mxu0
      %v1661 = vadd.f32 0.0, %v1660
      %v1662 = vpop.f32.mrf.mxu0
      %1663 = vdwg.mxu0
      %v1665 = vlaneseq
      %v1666 = vshrl.u32 %v1665, 7
      %v1667 = vsub.s32 0, %v1666
      %v1668 = vrot.slane %v566, %v1667
      %v1670 = vadd.f32 %v1668, %v1575
      %v1671 = vadd.f32 %v1668, %v1580
      %v1672 = vadd.f32 %v1670, %v1656
      %v1673 = vadd.f32 %v1671, %v1661
      %v1674 = vadd.f32 %v522, %v1672
      %v1675 = vadd.f32 %v523, %v1673
      %v1676 = vsel %vm607, %v1674, 0.0
      %1677 = vadd.xlane.f32.xlu0 %v1676
      %v1678 = vpop.xlane.xlu0 %1677
      %v1679 = vsel %vm611, %v1675, 0.0
      %1680 = vadd.xlane.f32.xlu0 %v1679
      %v1681 = vpop.xlane.xlu0 %1680
      %v1682 = vmul.f32 %v1678, %v615
      %v1683 = vmul.f32 %v1681, %v615
      %v1684 = vsub.f32 %v1674, %v1682
      %v1685 = vsub.f32 %v1675, %v1683
      %v1686 = vmul.f32 %v1684, %v1684
      %v1687 = vmul.f32 %v1685, %v1685
      %v1688 = vsel %vm607, %v1686, 0.0
      %1689 = vadd.xlane.f32.xlu0 %v1688
      %v1690 = vpop.xlane.xlu0 %1689
      %v1691 = vsel %vm611, %v1687, 0.0
      %1692 = vadd.xlane.f32.xlu0 %v1691
      %v1693 = vpop.xlane.xlu0 %1692
      %v1694 = vmul.f32 %v1690, %v615
      %v1695 = vmul.f32 %v1693, %v615
      %v1696 = vadd.f32 %v1694, 1e-05
      %v1697 = vadd.f32 %v1695, 1e-05
      %v1698 = vrsqrt.pop %v1696
      %v1699 = vrsqrt.pop %v1697
      %v1700 = vmul.f32 %v1684, %v1698
      %v1701 = vmul.f32 %v1685, %v1699
      %v1703 = vlaneseq
      %v1704 = vshrl.u32 %v1703, 7
      %v1705 = vsub.s32 0, %v1704
      %v1706 = vrot.slane %v567, %v1705
      %v1708 = vmul.f32 %v1700, %v1706
      %v1709 = vmul.f32 %v1701, %v1706
      %v1711 = vlaneseq
      %v1712 = vshrl.u32 %v1711, 7
      %v1713 = vsub.s32 0, %v1712
      %v1714 = vrot.slane %v568, %v1713
      %v1716 = vadd.f32 %v1708, %v1714
      %v1717 = vadd.f32 %v1709, %v1714
      %v1719 = vlaneseq
      %v1720 = vshrl.u32 %v1719, 7
      %v1721 = vsub.s32 0, %v1720
      %v1722 = vrot.slane %v581, %v1721
      %v1723 = vlaneseq
      %v1724 = vshrl.u32 %v1723, 7
      %v1725 = vsub.s32 1, %v1724
      %v1726 = vrot.slane %v581, %v1725
      %v1730 = vsel %vm607, %v1716, 0
      %v1733 = vsel %vm607, %v1717, 0
      %1735 = vmatprep.subr.mxu0 0.0
      %1736 = vmatpush1.msra.mxu0 0.0
      %1737 = vmatprep.subr.mxu0 0.0
      %1738 = vmatpush1.msra.mxu0 0.0
      %1739 = vmatprep.subr.mxu0 0.0
      %1740 = vmatpush1.msra.mxu0 0.0
      %1741 = vmatprep.subr.mxu0 0.0
      %1742 = vmatpush1.msra.mxu0 0.0
      %1743 = vmatprep.subr.mxu0 0.0
      %1744 = vmatpush1.msra.mxu0 0.0
      %1745 = vmatprep.subr.mxu0 0.0
      %1746 = vmatpush1.msra.mxu0 0.0
      %1747 = vmatprep.subr.mxu0 0.0
      %1748 = vmatpush1.msra.mxu0 0.0
      %1749 = vmatprep.subr.mxu0 0.0
      %1750 = vmatpush1.msra.mxu0 0.0
      %1751 = vmatprep.subr.mxu0 0.0
      %1752 = vmatpush1.msra.mxu0 0.0
      %1753 = vmatprep.subr.mxu0 0.0
      %1754 = vmatpush1.msra.mxu0 0.0
      %1755 = vmatprep.subr.mxu0 %v580
      %1756 = vmatpush1.msra.mxu0 %v579
      %1757 = vmatprep.subr.mxu0 %v578
      %1758 = vmatpush1.msra.mxu0 %v577
      %1759 = vmatprep.subr.mxu0 %v576
      %1760 = vmatpush1.msra.mxu0 %v575
      %1761 = vmatprep.subr.mxu0 %v574
      %1762 = vmatpush1.msra.mxu0 %v573
      %1763 = vmatprep.subr.mxu0 %v572
      %1764 = vmatpush1.msra.mxu0 %v571
      %1765 = vmatprep.subr.mxu0 %v570
      %1766 = vmatpush1.msra.mxu0 %v569
      %1767 = vmatprep.subr.mxu0 0.0
      %1768 = vmatpush2.msra.mxu0 0.0
      %1769 = vmatprep.subr.mxu0 0.0
      %1770 = vmatpush2.msra.mxu0 0.0
      %1771 = vmatprep.subr.mxu0 0.0
      %1772 = vmatpush2.msra.mxu0 0.0
      %1773 = vmatprep.subr.mxu0 0.0
      %1774 = vmatpush2.msra.mxu0 0.0
      %1775 = vmatprep.subr.mxu0 0.0
      %1776 = vmatpush2.msra.mxu0 0.0
      %1777 = vmatprep.subr.mxu0 0.0
      %1778 = vmatpush2.msra.mxu0 0.0
      %1779 = vmatprep.subr.mxu0 0.0
      %1780 = vmatpush2.msra.mxu0 0.0
      %1781 = vmatprep.subr.mxu0 0.0
      %1782 = vmatpush2.msra.mxu0 0.0
      %1783 = vmatprep.subr.mxu0 0.0
      %1784 = vmatpush2.msra.mxu0 0.0
      %1785 = vmatprep.subr.mxu0 0.0
      %1786 = vmatpush2.msra.mxu0 0.0
      %1787 = vmatprep.subr.mxu0 0.0
      %1788 = vmatpush2.msra.mxu0 0.0
      %1789 = vmatprep.subr.mxu0 0.0
      %1790 = vmatpush2.msra.mxu0 0.0
      %1791 = vmatprep.subr.mxu0 0.0
      %1792 = vmatpush2.msra.mxu0 0.0
      %1793 = vmatprep.subr.mxu0 0.0
      %1794 = vmatpush2.msra.mxu0 0.0
      %1795 = vmatprep.subr.mxu0 0.0
      %1796 = vmatpush2.msra.mxu0 0.0
      %1797 = vmatprep.subr.mxu0 0.0
      %1798 = vmatpush2.msra.mxu0 0.0
      %1799 = vmatprep.mubr.f32.mxu0 0.0
      %1800 = vmatmul.mubr.f32.gmra.mxu0 %v1730
      %v1801 = vpop.f32.mrf.mxu0
      %v1802 = vadd.f32 %v1722, %v1801
      %v1803 = vpop.f32.mrf.mxu0
      %v1804 = vadd.f32 %v1726, %v1803
      %1805 = vmatprep.mubr.f32.mxu0 0.0
      %1806 = vmatmul.mubr.f32.gmra.mxu0 %v1733
      %v1807 = vpop.f32.mrf.mxu0
      %v1808 = vadd.f32 %v1722, %v1807
      %v1809 = vpop.f32.mrf.mxu0
      %v1810 = vadd.f32 %v1726, %v1809
      %1811 = vdwg.mxu0
      %v1812 = vmul.f32 %v1802, 0.5
      %v1813 = vmul.f32 %v1804, 0.5
      %v1814 = vmul.f32 %v1808, 0.5
      %v1815 = vmul.f32 %v1810, 0.5
      %v1816 = vmul.f32 %v1802, 0.70710677
      %v1817 = vmul.f32 %v1804, 0.70710677
      %v1818 = vmul.f32 %v1808, 0.70710677
      %v1819 = vmul.f32 %v1810, 0.70710677
      %v1820 = vand.u32 2147483647, %v1816
      %v1821 = vand.u32 2147483647, %v1817
      %v1822 = vand.u32 2147483647, %v1818
      %v1823 = vand.u32 2147483647, %v1819
      %v1824 = vmul.f32 %v1820, 0.3275911
      %v1825 = vmul.f32 %v1821, 0.3275911
      %v1826 = vmul.f32 %v1822, 0.3275911
      %v1827 = vmul.f32 %v1823, 0.3275911
      %v1828 = vadd.f32 %v1824, 1.0
      %v1829 = vadd.f32 %v1825, 1.0
      %v1830 = vadd.f32 %v1826, 1.0
      %v1831 = vadd.f32 %v1827, 1.0
      %v1832 = vrcp.pop %v1828
      %v1833 = vmul.f32 1.0, %v1832
      %v1834 = vrcp.pop %v1829
      %v1835 = vmul.f32 1.0, %v1834
      %v1836 = vrcp.pop %v1830
      %v1837 = vmul.f32 1.0, %v1836
      %v1838 = vrcp.pop %v1831
      %v1839 = vmul.f32 1.0, %v1838
      %v1840 = vmul.f32 %v1833, 1.0614054
      %v1841 = vmul.f32 %v1835, 1.0614054
      %v1842 = vmul.f32 %v1837, 1.0614054
      %v1843 = vmul.f32 %v1839, 1.0614054
      %v1844 = vadd.f32 %v1840, -1.4531521
      %v1845 = vadd.f32 %v1841, -1.4531521
      %v1846 = vadd.f32 %v1842, -1.4531521
      %v1847 = vadd.f32 %v1843, -1.4531521
      %v1848 = vmul.f32 %v1844, %v1833
      %v1849 = vmul.f32 %v1845, %v1835
      %v1850 = vmul.f32 %v1846, %v1837
      %v1851 = vmul.f32 %v1847, %v1839
      %v1852 = vadd.f32 %v1848, 1.4214138
      %v1853 = vadd.f32 %v1849, 1.4214138
      %v1854 = vadd.f32 %v1850, 1.4214138
      %v1855 = vadd.f32 %v1851, 1.4214138
      %v1856 = vmul.f32 %v1852, %v1833
      %v1857 = vmul.f32 %v1853, %v1835
      %v1858 = vmul.f32 %v1854, %v1837
      %v1859 = vmul.f32 %v1855, %v1839
      %v1860 = vadd.f32 %v1856, -0.28449672
      %v1861 = vadd.f32 %v1857, -0.28449672
      %v1862 = vadd.f32 %v1858, -0.28449672
      %v1863 = vadd.f32 %v1859, -0.28449672
      %v1864 = vmul.f32 %v1860, %v1833
      %v1865 = vmul.f32 %v1861, %v1835
      %v1866 = vmul.f32 %v1862, %v1837
      %v1867 = vmul.f32 %v1863, %v1839
      %v1868 = vadd.f32 %v1864, 0.2548296
      %v1869 = vadd.f32 %v1865, 0.2548296
      %v1870 = vadd.f32 %v1866, 0.2548296
      %v1871 = vadd.f32 %v1867, 0.2548296
      %v1872 = vmul.f32 %v1868, %v1833
      %v1873 = vmul.f32 %v1869, %v1835
      %v1874 = vmul.f32 %v1870, %v1837
      %v1875 = vmul.f32 %v1871, %v1839
      %v1876 = vsub.f32 0.0, %v1820
      %v1877 = vsub.f32 0.0, %v1821
      %v1878 = vsub.f32 0.0, %v1822
      %v1879 = vsub.f32 0.0, %v1823
      %v1880 = vmul.f32 %v1876, %v1820
      %v1881 = vmul.f32 %v1877, %v1821
      %v1882 = vmul.f32 %v1878, %v1822
      %v1883 = vmul.f32 %v1879, %v1823
      %v1884 = vmul.f32 %v1880, 1.442695
      %v1885 = vpow.pop %v1884
      %v1886 = vmul.f32 %v1881, 1.442695
      %v1887 = vpow.pop %v1886
      %v1888 = vmul.f32 %v1882, 1.442695
      %v1889 = vpow.pop %v1888
      %v1890 = vmul.f32 %v1883, 1.442695
      %v1891 = vpow.pop %v1890
      %v1892 = vmul.f32 %v1872, %v1885
      %v1893 = vmul.f32 %v1873, %v1887
      %v1894 = vmul.f32 %v1874, %v1889
      %v1895 = vmul.f32 %v1875, %v1891
      %v1896 = vsub.f32 1.0, %v1892
      %v1897 = vsub.f32 1.0, %v1893
      %v1898 = vsub.f32 1.0, %v1894
      %v1899 = vsub.f32 1.0, %v1895
      %vm1900 = vcmp.ge.f32.partialorder %v1816, 0.0
      %vm1901 = vcmp.ge.f32.partialorder %v1817, 0.0
      %vm1902 = vcmp.ge.f32.partialorder %v1818, 0.0
      %vm1903 = vcmp.ge.f32.partialorder %v1819, 0.0
      %v1904 = vsub.f32 0.0, %v1896
      %v1905 = vsub.f32 0.0, %v1897
      %v1906 = vsub.f32 0.0, %v1898
      %v1907 = vsub.f32 0.0, %v1899
      %v1908 = vsel %vm1900, %v1896, %v1904
      %v1909 = vsel %vm1901, %v1897, %v1905
      %v1910 = vsel %vm1902, %v1898, %v1906
      %v1911 = vsel %vm1903, %v1899, %v1907
      %v1912 = vadd.f32 %v1908, 1.0
      %v1913 = vadd.f32 %v1909, 1.0
      %v1914 = vadd.f32 %v1910, 1.0
      %v1915 = vadd.f32 %v1911, 1.0
      %v1916 = vmul.f32 %v1812, %v1912
      %v1917 = vmul.f32 %v1813, %v1913
      %v1918 = vmul.f32 %v1814, %v1914
      %v1919 = vmul.f32 %v1815, %v1915
      %vm1920 = vcmask 523264
      %v1922 = vsel %vm1920, %v1917, 0
      %v1925 = vsel %vm1920, %v1919, 0
      %1927 = vmatprep.subr.mxu0 0.0
      %1928 = vmatpush1.msra.mxu0 %v597
      %1929 = vmatprep.subr.mxu0 0.0
      %1930 = vmatpush1.msra.mxu0 %v596
      %1931 = vmatprep.subr.mxu0 0.0
      %1932 = vmatpush1.msra.mxu0 %v595
      %1933 = vmatprep.subr.mxu0 0.0
      %1934 = vmatpush1.msra.mxu0 %v594
      %1935 = vmatprep.subr.mxu0 0.0
      %1936 = vmatpush1.msra.mxu0 %v593
      %1937 = vmatprep.subr.mxu0 0.0
      %1938 = vmatpush1.msra.mxu0 %v592
      %1939 = vmatprep.subr.mxu0 0.0
      %1940 = vmatpush1.msra.mxu0 %v591
      %1941 = vmatprep.subr.mxu0 0.0
      %1942 = vmatpush1.msra.mxu0 %v590
      %1943 = vmatprep.subr.mxu0 0.0
      %1944 = vmatpush1.msra.mxu0 %v589
      %1945 = vmatprep.subr.mxu0 0.0
      %1946 = vmatpush1.msra.mxu0 %v588
      %1947 = vmatprep.subr.mxu0 0.0
      %1948 = vmatpush1.msra.mxu0 %v587
      %1949 = vmatprep.subr.mxu0 0.0
      %1950 = vmatpush1.msra.mxu0 %v586
      %1951 = vmatprep.subr.mxu0 0.0
      %1952 = vmatpush1.msra.mxu0 %v585
      %1953 = vmatprep.subr.mxu0 0.0
      %1954 = vmatpush1.msra.mxu0 %v584
      %1955 = vmatprep.subr.mxu0 0.0
      %1956 = vmatpush1.msra.mxu0 %v583
      %1957 = vmatprep.subr.mxu0 0.0
      %1958 = vmatpush1.msra.mxu0 %v582
      %1959 = vmatprep.subr.mxu0 0.0
      %1960 = vmatpush2.msra.mxu0 0.0
      %1961 = vmatprep.subr.mxu0 0.0
      %1962 = vmatpush2.msra.mxu0 0.0
      %1963 = vmatprep.subr.mxu0 0.0
      %1964 = vmatpush2.msra.mxu0 0.0
      %1965 = vmatprep.subr.mxu0 0.0
      %1966 = vmatpush2.msra.mxu0 0.0
      %1967 = vmatprep.subr.mxu0 0.0
      %1968 = vmatpush2.msra.mxu0 0.0
      %1969 = vmatprep.subr.mxu0 0.0
      %1970 = vmatpush2.msra.mxu0 0.0
      %1971 = vmatprep.subr.mxu0 0.0
      %1972 = vmatpush2.msra.mxu0 0.0
      %1973 = vmatprep.subr.mxu0 0.0
      %1974 = vmatpush2.msra.mxu0 0.0
      %1975 = vmatprep.subr.mxu0 0.0
      %1976 = vmatpush2.msra.mxu0 %v605
      %1977 = vmatprep.subr.mxu0 0.0
      %1978 = vmatpush2.msra.mxu0 %v604
      %1979 = vmatprep.subr.mxu0 0.0
      %1980 = vmatpush2.msra.mxu0 %v603
      %1981 = vmatprep.subr.mxu0 0.0
      %1982 = vmatpush2.msra.mxu0 %v602
      %1983 = vmatprep.subr.mxu0 0.0
      %1984 = vmatpush2.msra.mxu0 %v601
      %1985 = vmatprep.subr.mxu0 0.0
      %1986 = vmatpush2.msra.mxu0 %v600
      %1987 = vmatprep.subr.mxu0 0.0
      %1988 = vmatpush2.msra.mxu0 %v599
      %1989 = vmatprep.subr.mxu0 0.0
      %1990 = vmatpush2.msra.mxu0 %v598
      %1991 = vmatprep.mubr.f32.mxu0 %v1922
      %1992 = vmatmul.mubr.f32.gmra.mxu0 %v1916
      %v1993 = vpop.f32.mrf.mxu0
      %v1994 = vadd.f32 0.0, %v1993
      %v1995 = vpop.f32.mrf.mxu0
      %1996 = vmatprep.mubr.f32.mxu0 %v1925
      %1997 = vmatmul.mubr.f32.gmra.mxu0 %v1918
      %v1998 = vpop.f32.mrf.mxu0
      %v1999 = vadd.f32 0.0, %v1998
      %v2000 = vpop.f32.mrf.mxu0
      %2001 = vdwg.mxu0
      %v2002 = vadd.f32 %v1674, %v1994
      %v2003 = vadd.f32 %v1675, %v1999
      %v2005 = vlaneseq
      %v2006 = vshrl.u32 %v2005, 7
      %v2007 = vsub.s32 0, %v2006
      %v2008 = vrot.slane %v606, %v2007
      %v2010 = vadd.f32 %v2002, %v2008
      %v2011 = vadd.f32 %v2003, %v2008
      %v2012 = vld [vmem:[%s14] sm:$0x1]
      %v2013 = vld [vmem:[%s15] sm:$0x1]
      %v2014 = vsel %vm607, %v2010, 0.0
      %2015 = vadd.xlane.f32.xlu0 %v2014
      %v2016 = vpop.xlane.xlu0 %2015
      %v2017 = vsel %vm611, %v2011, 0.0
      %2018 = vadd.xlane.f32.xlu0 %v2017
      %v2019 = vpop.xlane.xlu0 %2018
      %v2020 = vmul.f32 %v2016, %v615
      %v2021 = vmul.f32 %v2019, %v615
      %v2022 = vsub.f32 %v2010, %v2020
      %v2023 = vsub.f32 %v2011, %v2021
      %v2024 = vmul.f32 %v2022, %v2022
      %v2025 = vmul.f32 %v2023, %v2023
      %v2026 = vsel %vm607, %v2024, 0.0
      %2027 = vadd.xlane.f32.xlu0 %v2026
      %v2028 = vpop.xlane.xlu0 %2027
      %v2029 = vsel %vm611, %v2025, 0.0
      %2030 = vadd.xlane.f32.xlu0 %v2029
      %v2031 = vpop.xlane.xlu0 %2030
      %v2032 = vmul.f32 %v2028, %v615
      %v2033 = vmul.f32 %v2031, %v615
      %v2034 = vadd.f32 %v2032, 1e-05
      %v2035 = vadd.f32 %v2033, 1e-05
      %v2036 = vrsqrt.pop %v2034
      %v2037 = vrsqrt.pop %v2035
      %v2038 = vmul.f32 %v2022, %v2036
      %v2039 = vmul.f32 %v2023, %v2037
      %v2041 = vlaneseq
      %v2042 = vshrl.u32 %v2041, 7
      %v2043 = vsub.s32 0, %v2042
      %v2044 = vrot.slane %v2012, %v2043
      %v2046 = vmul.f32 %v2038, %v2044
      %v2047 = vmul.f32 %v2039, %v2044
      %v2049 = vlaneseq
      %v2050 = vshrl.u32 %v2049, 7
      %v2051 = vsub.s32 0, %v2050
      %v2052 = vrot.slane %v2013, %v2051
      %v2054 = vadd.f32 %v2046, %v2052
      %v2055 = vadd.f32 %v2047, %v2052
      %2056 = vst.msk [vmem:[%s521] sm:$0xff] %vm607, %v2054
      %2057 = vst.msk [vmem:[%s521 + $0x8] sm:$0xf] %vm611, %v2055
      %p2058 = scmp.lt.s32.totalorder %s27, 1
      %s2059 = scalar_select %p2058, %s27, 1
      %s2060 = smul.addr %s2059, 2
      %s2061 = smul.addr %s2060, 8
      %s2062 = scalar_lea.vmem %s16, %s2061
      // Predicated region
      $region85: #{multispectral_mae_forward.6} parent=83 // pred_check
        %p2063 = pneg %p386
      $region86: #{multispectral_mae_forward.6} parent=83 // pred_check_branch
        %2065 = sbr.rel (%p2063) target = $region88
      $region87: #{multispectral_mae_forward.6} parent=83 // pred_region
        _
      $region88: #{multispectral_mae_forward.6} parent=83 // pred_fallthru
        _
    $region84: #{multispectral_mae_forward.6} parent=5 // pred_fallthru
      _
    %p2066 = scmp.le.s32.totalorder 2, %s22
    // Predicated region
    $region89: #{multispectral_mae_forward.6} parent=5 // pred_check
      %p2067 = pneg %p2066
    $region90: #{multispectral_mae_forward.6} parent=5 // pred_check_branch
      %2069 = sbr.rel (%p2067) target = $region92
    $region91: #{multispectral_mae_forward.6} parent=5 // pred_region
      %s2070 = ssub.s32 %s22, 2
      // Predicated region
      $region93: #{multispectral_mae_forward.6} parent=91 // pred_check
        %p2071 = pneg %p392
      $region94: #{multispectral_mae_forward.6} parent=91 // pred_check_branch
        %2073 = sbr.rel (%p2071) target = $region96
      $region95: #{multispectral_mae_forward.6} parent=91 // pred_region
        %p2074 = scmp.lt.s32.totalorder %s28, 1
        %s2075 = scalar_select %p2074, %s28, 1
        %s2076 = smul.addr %s2075, 2
        %s2077 = smul.addr %s2076, 8
        %s2078 = scalar_lea.vmem %s16, %s2077
      $region96: #{multispectral_mae_forward.6} parent=91 // pred_fallthru
        _
    $region92: #{multispectral_mae_forward.6} parent=5 // pred_fallthru
      _
  $region6: #{multispectral_mae_forward.6} parent=0 // loop_footer
    %s26 = sadd.s32 1, %s22
  $region7: #{multispectral_mae_forward.6} parent=0 // loop_footer_branch
    %21 = sbr.rel target = $region3
  $region8: #{multispectral_mae_forward.6} parent=0 // loop_exit
    _

</llo_original>
